<compile_context>
chip_gen: v7x
topology: tpu7x:2x2x1
jax: 0.10.0
libtpu: 0.0.40
codegen_flags: <defaults>
</compile_context>

<pallas_src>
import math

import jax
import jax.numpy as jnp
from jax.experimental import pallas as pl
from jax.experimental.pallas import tpu as pltpu


def _round_up(x, m):
    return ((x + m - 1) // m) * m


# ----------------------------------------------------------------------------
# Plain-JAX Conv3d (NCDHW, dilation=1).  Used ONLY at parameter-prep time (to
# build the dense per-segment operators) and for the validation reference.
# ----------------------------------------------------------------------------
def _conv3d_ref(x, w, b, stride, padding):
    B, Cin, D, H, W = x.shape
    Cout, _, kd, kh, kw = w.shape
    sd, sh, sw = stride
    pd, ph, pw = padding
    xp = jnp.pad(x, ((0, 0), (0, 0), (pd, pd), (ph, ph), (pw, pw)))
    Do = (D + 2 * pd - kd) // sd + 1
    Ho = (H + 2 * ph - kh) // sh + 1
    Wo = (W + 2 * pw - kw) // sw + 1
    cols = []
    for zd in range(kd):
        for zh in range(kh):
            for zw in range(kw):
                cols.append(
                    xp[:, :, zd:zd + sd * Do:sd, zh:zh + sh * Ho:sh, zw:zw + sw * Wo:sw])
    patches = jnp.stack(cols, axis=2)                           # (B, Cin, k, Do, Ho, Wo)
    patches = patches.reshape(B, Cin * kd * kh * kw, Do * Ho * Wo)
    wmat = w.reshape(Cout, Cin * kd * kh * kw)
    out = jnp.einsum("ck,bkm->bcm", wmat, patches) + b[None, :, None]
    return out.reshape(B, Cout, Do, Ho, Wo)


def _linearize(fn, in_shape):
    """fn is affine & batched: fn(x)[i] == flat(x[i]) @ A + c.  Returns (A, c, out_shape)."""
    n_in = math.prod(in_shape)
    out0 = fn(jnp.zeros((1,) + tuple(in_shape), jnp.float32))
    out_shape = out0.shape[1:]
    c = out0.reshape(-1)
    basis = jnp.eye(n_in, dtype=jnp.float32).reshape((n_in,) + tuple(in_shape))
    A = fn(basis).reshape(n_in, -1) - c[None, :]
    return A, c, out_shape


# ----------------------------------------------------------------------------
# Deterministic parameter init (Kaiming normal weights, zero biases)
# ----------------------------------------------------------------------------
def _kaiming(key, shape, fan_in):
    return (2.0 / fan_in) ** 0.5 * jax.random.normal(key, shape, dtype=jnp.float32)


def init_params(key, input_channels, n_classes, target_number, patch_size=5):
    ks = jax.random.split(key, 8)
    p = {}
    # TODO(synk): FeatureSelectionWrapper source was not provided; approximated as a
    # deterministic softmax band-selection matmul mapping input_channels -> target_number bands.
    p["fs_logits"] = 0.01 * jax.random.normal(
        ks[0], (target_number, input_channels), jnp.float32)

    def conv_p(k, cout, cin, kd, kh, kw):
        fan_in = cin * kd * kh * kw
        return (_kaiming(k, (cout, cin, kd, kh, kw), fan_in),
                jnp.zeros((cout,), jnp.float32))

    p["conv1"] = conv_p(ks[1], 20, 1, 3, 3, 3)
    p["pool1"] = conv_p(ks[2], 20, 20, 3, 1, 1)
    p["conv2"] = conv_p(ks[3], 35, 20, 3, 3, 3)
    p["pool2"] = conv_p(ks[4], 35, 35, 3, 1, 1)
    p["conv3"] = conv_p(ks[5], 35, 35, 3, 1, 1)
    p["conv4"] = conv_p(ks[6], 35, 35, 2, 1, 1)

    # features_size exactly as HamidaEtAl._get_final_flattened_size()
    pad1 = (1, 1, 1) if patch_size == 3 else (0, 0, 0)
    h = jnp.zeros((1, 1, target_number, patch_size, patch_size), jnp.float32)
    h = _conv3d_ref(h, *p["conv1"], (1, 1, 1), pad1)
    h = _conv3d_ref(h, *p["pool1"], (2, 1, 1), (1, 0, 0))
    h = _conv3d_ref(h, *p["conv2"], (1, 1, 1), (1, 0, 0))
    h = _conv3d_ref(h, *p["pool2"], (2, 1, 1), (1, 0, 0))
    h = _conv3d_ref(h, *p["conv3"], (1, 1, 1), (1, 0, 0))
    h = _conv3d_ref(h, *p["conv4"], (2, 1, 1), (1, 0, 0))
    features_size = int(math.prod(h.shape[1:]))            # = 35*2*1*1 = 70 for patch 5

    p["features_size"] = features_size
    p["fc_w"] = _kaiming(ks[7], (n_classes, features_size), features_size)
    p["fc_b"] = jnp.zeros((n_classes,), jnp.float32)
    return p


# ----------------------------------------------------------------------------
# One-time prep:
#   * build the (400 -> 256-padded) feature-selection prologue matrix P (f32),
#   * fold conv1 / (pool1+conv2) / (pool2+conv3) / conv4 / fc into dense operators,
#   * pre-pad everything ONCE to lane-dense multiple-of-128 bf16 mats + f32 bias rows.
# ----------------------------------------------------------------------------
def prepare_model(params, input_channels, n_classes, patch_size=5):
    sel = jax.nn.softmax(params["fs_logits"], axis=-1)          # (T, Cin)
    T = sel.shape[0]
    pad1 = (1, 1, 1) if patch_size == 3 else (0, 0, 0)
    sp = patch_size * patch_size

    def seg1(x):   # conv1 only (FS is now a wrapper-side prologue)  (ReLU in-kernel)
        return _conv3d_ref(x, *params["conv1"], (1, 1, 1), pad1)

    def seg2(x):   # pool1 + conv2
        x = _conv3d_ref(x, *params["pool1"], (2, 1, 1), (1, 0, 0))
        return _conv3d_ref(x, *params["conv2"], (1, 1, 1), (1, 0, 0))

    def seg3(x):   # pool2 + conv3
        x = _conv3d_ref(x, *params["pool2"], (2, 1, 1), (1, 0, 0))
        return _conv3d_ref(x, *params["conv3"], (1, 1, 1), (1, 0, 0))

    def seg4(x):   # conv4
        return _conv3d_ref(x, *params["conv4"], (2, 1, 1), (1, 0, 0))

    mats, biases = [], []
    shp = (1, T, patch_size, patch_size)
    for seg in (seg1, seg2, seg3, seg4):
        A, c, shp = _linearize(seg, shp)
        mats.append(A)
        biases.append(c)
    # C-order flattening of (C, D, H, W) matches torch's x.view(-1, features_size).
    mats.append(params["fc_w"].T)                               # (features_size, n_classes)
    biases.append(params["fc_b"])

    dims = [T * sp] + [int(m.shape[1]) for m in mats]           # post-FS logical dims
    dpad = [_round_up(d, 128) for d in dims]
    Ws, bs = [], []
    for i, (A, c) in enumerate(zip(mats, biases)):
        Ap = jnp.pad(A, ((0, dpad[i] - A.shape[0]), (0, dpad[i + 1] - A.shape[1])))
        Ws.append(Ap.astype(jnp.bfloat16))                       # MXU-native inputs
        bs.append(jnp.pad(c, (0, dpad[i + 1] - c.shape[0]))
                  .reshape(1, -1).astype(jnp.float32))           # f32 epilogue

    # Feature-selection prologue: flat(1,Cin,p,p) -> flat(1,T,p,p), column-padded to dpad[0].
    # out[t*sp + s] = sum_c sel[t, c] * x[c*sp + s]   ==   x_flat @ kron(sel, I_sp).T
    P = jnp.kron(sel, jnp.eye(sp, dtype=jnp.float32)).T          # (Cin*sp, T*sp)
    P = jnp.pad(P, ((0, 0), (0, dpad[0] - P.shape[1])))          # (Cin*sp, dpad[0]) f32

    return {"Ws": Ws, "bs": bs, "P": P, "dpad": dpad, "n_classes": n_classes,
            "features_size": int(math.prod(shp)), "flat_in": input_channels * sp}


# ----------------------------------------------------------------------------
# The Pallas kernel: whole HamidaFS123 forward (post feature-selection) for one
# batch tile.  5 chained matmuls; bf16 MXU inputs, f32 accumulate / bias / ReLU,
# bf16 downcast fused into the ReLU epilogue.
# ----------------------------------------------------------------------------
def _hamida_fused_kernel(x_ref, w1, b1, w2, b2, w3, b3, w4, b4, w5, b5, o_ref):
    def mm(lhs, w_ref):
        return jnp.dot(lhs, w_ref[...], preferred_element_type=jnp.float32)

    h = jnp.maximum(mm(x_ref[...], w1) + b1[...], 0.0).astype(jnp.bfloat16)   # conv1, ReLU
    h = jnp.maximum(mm(h, w2) + b2[...], 0.0).astype(jnp.bfloat16)            # pool1+conv2, ReLU
    h = jnp.maximum(mm(h, w3) + b3[...], 0.0).astype(jnp.bfloat16)            # pool2+conv3, ReLU
    h = jnp.maximum(mm(h, w4) + b4[...], 0.0).astype(jnp.bfloat16)            # conv4, ReLU
    o_ref[...] = (mm(h, w5) + b5[...]).astype(o_ref.dtype)                    # fc


def make_forward(model):
    dpad = tuple(model["dpad"])
    d_in, d_out = dpad[0], dpad[-1]
    n_cls = model["n_classes"]
    flat_in = model["flat_in"]
    wb = []
    for W, b in zip(model["Ws"], model["bs"]):
        wb.extend((W, b))
    wb = tuple(wb)
    P = model["P"]

    @jax.jit
    def _run(x, P_mat, *wb_args):
        B = x.shape[0]
        # Batch tiling: feed full MXU rows for small B (v5e), amortize grid-step
        # overhead for big B (v6e/v7x), and keep >=2 grid steps so v7x's two
        # TensorCores both get work (batch axis is "parallel").
        if B <= 128:
            tile_b = 128
        elif B <= 512:
            tile_b = 256
        else:
            tile_b = 512
        Bp = _round_up(B, tile_b)
        if B > 128 and Bp // tile_b < 2:
            tile_b //= 2
            Bp = _round_up(B, tile_b)

        # Feature-selection prologue fused with bf16 cast + batch pad: one small XLA op
        # producing the lane-dense (Bp, 256) bf16 kernel input (no separate pad pass).
        x_fs = jnp.dot(x.reshape(B, flat_in), P_mat).astype(jnp.bfloat16)   # (B, d_in)
        x_fs = jnp.pad(x_fs, ((0, Bp - B), (0, 0)))                         # zero pad is exact

        in_specs = [pl.BlockSpec((tile_b, d_in), lambda i: (i, 0))]
        for a in wb_args:                                          # weights resident in VMEM
            in_specs.append(pl.BlockSpec(a.shape, lambda i: (0, 0)))

        flops = 2 * Bp * sum(dpad[i] * dpad[i + 1] for i in range(len(dpad) - 1))
        bytes_accessed = (x_fs.size * x_fs.dtype.itemsize
                          + sum(a.size * a.dtype.itemsize for a in wb_args)
                          + Bp * d_out * 4)

        out = pl.pallas_call(
            _hamida_fused_kernel,
            out_shape=jax.ShapeDtypeStruct((Bp, d_out), jnp.float32),
            grid=(Bp // tile_b,),
            in_specs=in_specs,
            out_specs=pl.BlockSpec((tile_b, d_out), lambda i: (i, 0)),
            compiler_params=pltpu.CompilerParams(
                dimension_semantics=("parallel",),
                vmem_limit_bytes=32 * 1024 * 1024),
            cost_estimate=pl.CostEstimate(flops=int(flops), transcendentals=0,
                                          bytes_accessed=int(bytes_accessed)),
        )(x_fs, *wb_args)
        return out[:B, :n_cls]          # single slice back to logical shape

    def forward(x):
        return _run(x, P, *wb)

    return forward


# ----------------------------------------------------------------------------
# Pure-JAX f32 reference (mirrors the PyTorch forward); used only for validation.
# ----------------------------------------------------------------------------
def reference_forward(params, x, patch_size=5):
    sel = jax.nn.softmax(params["fs_logits"], axis=-1)
    pad1 = (1, 1, 1) if patch_size == 3 else (0, 0, 0)
    h = jnp.einsum("tc,bochw->bothw", sel, x)
    h = jax.nn.relu(_conv3d_ref(h, *params["conv1"], (1, 1, 1), pad1))
    h = _conv3d_ref(h, *params["pool1"], (2, 1, 1), (1, 0, 0))
    h = jax.nn.relu(_conv3d_ref(h, *params["conv2"], (1, 1, 1), (1, 0, 0)))
    h = _conv3d_ref(h, *params["pool2"], (2, 1, 1), (1, 0, 0))
    h = jax.nn.relu(_conv3d_ref(h, *params["conv3"], (1, 1, 1), (1, 0, 0)))
    h = jax.nn.relu(_conv3d_ref(h, *params["conv4"], (2, 1, 1), (1, 0, 0)))
    h = h.reshape(x.shape[0], -1)
    return h @ params["fc_w"].T + params["fc_b"]


if __name__ == "__main__":
    INPUT_CHANNELS = 16
    N_CLASSES = 8
    PATCH_SIZE = 5
    TARGET_NUMBER = 10
    BATCH = 2

    key = jax.random.PRNGKey(0)
    k_param, k_x = jax.random.split(key)
    params = init_params(k_param, INPUT_CHANNELS, N_CLASSES, TARGET_NUMBER, PATCH_SIZE)
    model = prepare_model(params, INPUT_CHANNELS, N_CLASSES, PATCH_SIZE)   # one-time prep
    forward = make_forward(model)

    x = jax.random.normal(
        k_x, (BATCH, 1, INPUT_CHANNELS, PATCH_SIZE, PATCH_SIZE), jnp.float32)

    out = jax.block_until_ready(forward(x))
    assert out.shape == (BATCH, N_CLASSES), out.shape

    # Sanity check vs the f32 reference (kernel uses bf16 matmul inputs).
    ref = reference_forward(params, x, PATCH_SIZE)
    rel_err = float(jnp.max(jnp.abs(out - ref)) / (jnp.max(jnp.abs(ref)) + 1e-6))
    assert rel_err < 0.1, f"mismatch vs reference: rel_err={rel_err}"
    # Logit-argmax agreement (tighter gate recommended by the review).
    assert bool(jnp.all(jnp.argmax(out, -1) == jnp.argmax(ref, -1))), "argmax mismatch"
    print("KERNEL_OK")
</pallas_src>

<mosaic_0001>
module attributes {stable_mosaic.version = 11 : i64} {
  func.func @_hamida_fused_kernel(%arg0: i32, %arg1: memref<128x256xbf16, #tpu.memory_space<vmem>>, %arg2: memref<256x1536xbf16, #tpu.memory_space<vmem>>, %arg3: memref<1x1536xf32, #tpu.memory_space<vmem>>, %arg4: memref<1536x256xbf16, #tpu.memory_space<vmem>>, %arg5: memref<1x256xf32, #tpu.memory_space<vmem>>, %arg6: memref<256x128xbf16, #tpu.memory_space<vmem>>, %arg7: memref<1x128xf32, #tpu.memory_space<vmem>>, %arg8: memref<128x128xbf16, #tpu.memory_space<vmem>>, %arg9: memref<1x128xf32, #tpu.memory_space<vmem>>, %arg10: memref<128x128xbf16, #tpu.memory_space<vmem>>, %arg11: memref<1x128xf32, #tpu.memory_space<vmem>>, %arg12: memref<128x128xf32, #tpu.memory_space<vmem>>) attributes {dimension_semantics = [#tpu.dimension_semantics<parallel>], iteration_bounds = array<i64: 1>, scalar_prefetch = 0 : i64, scratch_operands = 0 : i64, tpu.core_type = #tpu.core_type<tc>, window_params = [{transform_indices = @transform_0, window_bounds = array<i64: 128, 256>}, {pipeline_mode = #tpu.pipeline_mode<synchronous>, transform_indices = @transform_1, window_bounds = array<i64: 256, 1536>}, {pipeline_mode = #tpu.pipeline_mode<synchronous>, transform_indices = @transform_2, window_bounds = array<i64: 1, 1536>}, {pipeline_mode = #tpu.pipeline_mode<synchronous>, transform_indices = @transform_3, window_bounds = array<i64: 1536, 256>}, {pipeline_mode = #tpu.pipeline_mode<synchronous>, transform_indices = @transform_4, window_bounds = array<i64: 1, 256>}, {pipeline_mode = #tpu.pipeline_mode<synchronous>, transform_indices = @transform_5, window_bounds = array<i64: 256, 128>}, {pipeline_mode = #tpu.pipeline_mode<synchronous>, transform_indices = @transform_6, window_bounds = array<i64: 1, 128>}, {pipeline_mode = #tpu.pipeline_mode<synchronous>, transform_indices = @transform_7, window_bounds = array<i64: 128, 128>}, {pipeline_mode = #tpu.pipeline_mode<synchronous>, transform_indices = @transform_8, window_bounds = array<i64: 1, 128>}, {pipeline_mode = #tpu.pipeline_mode<synchronous>, transform_indices = @transform_9, window_bounds = array<i64: 128, 128>}, {pipeline_mode = #tpu.pipeline_mode<synchronous>, transform_indices = @transform_10, window_bounds = array<i64: 1, 128>}, {transform_indices = @transform_11, window_bounds = array<i64: 128, 128>}]} {
    %c0 = arith.constant 0 : index
    %c0_0 = arith.constant 0 : index
    %0 = vector.load %arg1[%c0, %c0_0] : memref<128x256xbf16, #tpu.memory_space<vmem>>, vector<128x256xbf16>
    %c0_1 = arith.constant 0 : index
    %c0_2 = arith.constant 0 : index
    %1 = vector.load %arg2[%c0_1, %c0_2] : memref<256x1536xbf16, #tpu.memory_space<vmem>>, vector<256x1536xbf16>
    %cst = arith.constant dense<0.000000e+00> : vector<128x1536xf32>
    %2 = tpu.matmul %0, %1, %cst {dimension_numbers = #tpu.dot_dimension_numbers<[1], [0], [0], [1], [0, 0, 1, 1], [], []>} : vector<128x256xbf16>, vector<256x1536xbf16>, vector<128x1536xf32> -> vector<128x1536xf32>
    %c0_3 = arith.constant 0 : index
    %c0_4 = arith.constant 0 : index
    %3 = vector.load %arg3[%c0_3, %c0_4] : memref<1x1536xf32, #tpu.memory_space<vmem>>, vector<1x1536xf32>
    %4 = vector.broadcast %3 : vector<1x1536xf32> to vector<128x1536xf32>
    %5 = arith.addf %2, %4 : vector<128x1536xf32>
    %cst_5 = arith.constant 0.000000e+00 : f32
    %6 = vector.broadcast %cst_5 : f32 to vector<128x1536xf32>
    %7 = arith.maximumf %5, %6 : vector<128x1536xf32>
    %8 = arith.truncf %7 : vector<128x1536xf32> to vector<128x1536xbf16>
    %c0_6 = arith.constant 0 : index
    %c0_7 = arith.constant 0 : index
    %9 = vector.load %arg4[%c0_6, %c0_7] : memref<1536x256xbf16, #tpu.memory_space<vmem>>, vector<1536x256xbf16>
    %cst_8 = arith.constant dense<0.000000e+00> : vector<128x256xf32>
    %10 = tpu.matmul %8, %9, %cst_8 {dimension_numbers = #tpu.dot_dimension_numbers<[1], [0], [0], [1], [0, 0, 1, 1], [], []>} : vector<128x1536xbf16>, vector<1536x256xbf16>, vector<128x256xf32> -> vector<128x256xf32>
    %c0_9 = arith.constant 0 : index
    %c0_10 = arith.constant 0 : index
    %11 = vector.load %arg5[%c0_9, %c0_10] : memref<1x256xf32, #tpu.memory_space<vmem>>, vector<1x256xf32>
    %12 = vector.broadcast %11 : vector<1x256xf32> to vector<128x256xf32>
    %13 = arith.addf %10, %12 : vector<128x256xf32>
    %cst_11 = arith.constant 0.000000e+00 : f32
    %14 = vector.broadcast %cst_11 : f32 to vector<128x256xf32>
    %15 = arith.maximumf %13, %14 : vector<128x256xf32>
    %16 = arith.truncf %15 : vector<128x256xf32> to vector<128x256xbf16>
    %c0_12 = arith.constant 0 : index
    %c0_13 = arith.constant 0 : index
    %17 = vector.load %arg6[%c0_12, %c0_13] : memref<256x128xbf16, #tpu.memory_space<vmem>>, vector<256x128xbf16>
    %cst_14 = arith.constant dense<0.000000e+00> : vector<128x128xf32>
    %18 = tpu.matmul %16, %17, %cst_14 {dimension_numbers = #tpu.dot_dimension_numbers<[1], [0], [0], [1], [0, 0, 1, 1], [], []>} : vector<128x256xbf16>, vector<256x128xbf16>, vector<128x128xf32> -> vector<128x128xf32>
    %c0_15 = arith.constant 0 : index
    %c0_16 = arith.constant 0 : index
    %19 = vector.load %arg7[%c0_15, %c0_16] : memref<1x128xf32, #tpu.memory_space<vmem>>, vector<1x128xf32>
    %20 = vector.broadcast %19 : vector<1x128xf32> to vector<128x128xf32>
    %21 = arith.addf %18, %20 : vector<128x128xf32>
    %cst_17 = arith.constant 0.000000e+00 : f32
    %22 = vector.broadcast %cst_17 : f32 to vector<128x128xf32>
    %23 = arith.maximumf %21, %22 : vector<128x128xf32>
    %24 = arith.truncf %23 : vector<128x128xf32> to vector<128x128xbf16>
    %c0_18 = arith.constant 0 : index
    %c0_19 = arith.constant 0 : index
    %25 = vector.load %arg8[%c0_18, %c0_19] : memref<128x128xbf16, #tpu.memory_space<vmem>>, vector<128x128xbf16>
    %cst_20 = arith.constant dense<0.000000e+00> : vector<128x128xf32>
    %26 = tpu.matmul %24, %25, %cst_20 {dimension_numbers = #tpu.dot_dimension_numbers<[1], [0], [0], [1], [0, 0, 1, 1], [], []>} : vector<128x128xbf16>, vector<128x128xbf16>, vector<128x128xf32> -> vector<128x128xf32>
    %c0_21 = arith.constant 0 : index
    %c0_22 = arith.constant 0 : index
    %27 = vector.load %arg9[%c0_21, %c0_22] : memref<1x128xf32, #tpu.memory_space<vmem>>, vector<1x128xf32>
    %28 = vector.broadcast %27 : vector<1x128xf32> to vector<128x128xf32>
    %29 = arith.addf %26, %28 : vector<128x128xf32>
    %cst_23 = arith.constant 0.000000e+00 : f32
    %30 = vector.broadcast %cst_23 : f32 to vector<128x128xf32>
    %31 = arith.maximumf %29, %30 : vector<128x128xf32>
    %32 = arith.truncf %31 : vector<128x128xf32> to vector<128x128xbf16>
    %c0_24 = arith.constant 0 : index
    %c0_25 = arith.constant 0 : index
    %33 = vector.load %arg10[%c0_24, %c0_25] : memref<128x128xbf16, #tpu.memory_space<vmem>>, vector<128x128xbf16>
    %cst_26 = arith.constant dense<0.000000e+00> : vector<128x128xf32>
    %34 = tpu.matmul %32, %33, %cst_26 {dimension_numbers = #tpu.dot_dimension_numbers<[1], [0], [0], [1], [0, 0, 1, 1], [], []>} : vector<128x128xbf16>, vector<128x128xbf16>, vector<128x128xf32> -> vector<128x128xf32>
    %c0_27 = arith.constant 0 : index
    %c0_28 = arith.constant 0 : index
    %35 = vector.load %arg11[%c0_27, %c0_28] : memref<1x128xf32, #tpu.memory_space<vmem>>, vector<1x128xf32>
    %36 = vector.broadcast %35 : vector<1x128xf32> to vector<128x128xf32>
    %37 = arith.addf %34, %36 : vector<128x128xf32>
    %c0_29 = arith.constant 0 : index
    %c0_30 = arith.constant 0 : index
    %38 = vector.load %arg12[%c0_29, %c0_30] : memref<128x128xf32, #tpu.memory_space<vmem>>, vector<128x128xf32>
    tpu.vector_store %arg12[%c0_29, %c0_30], %37 {strides = array<i32>} : memref<128x128xf32, #tpu.memory_space<vmem>>, vector<128x128xf32>,
    return
  }
  func.func @transform_0(%arg0: i32) -> (i32, i32) {
    %c0_i32 = arith.constant 0 : i32
    %c0_i32_0 = arith.constant 0 : i32
    return %arg0, %c0_i32 : i32, i32
  }
  func.func @transform_1(%arg0: i32) -> (i32, i32) {
    %c0_i32 = arith.constant 0 : i32
    %c0_i32_0 = arith.constant 0 : i32
    %c0_i32_1 = arith.constant 0 : i32
    return %c0_i32, %c0_i32_0 : i32, i32
  }
  func.func @transform_2(%arg0: i32) -> (i32, i32) {
    %c0_i32 = arith.constant 0 : i32
    %c0_i32_0 = arith.constant 0 : i32
    %c0_i32_1 = arith.constant 0 : i32
    return %c0_i32, %c0_i32_0 : i32, i32
  }
  func.func @transform_3(%arg0: i32) -> (i32, i32) {
    %c0_i32 = arith.constant 0 : i32
    %c0_i32_0 = arith.constant 0 : i32
    %c0_i32_1 = arith.constant 0 : i32
    return %c0_i32, %c0_i32_0 : i32, i32
  }
  func.func @transform_4(%arg0: i32) -> (i32, i32) {
    %c0_i32 = arith.constant 0 : i32
    %c0_i32_0 = arith.constant 0 : i32
    %c0_i32_1 = arith.constant 0 : i32
    return %c0_i32, %c0_i32_0 : i32, i32
  }
  func.func @transform_5(%arg0: i32) -> (i32, i32) {
    %c0_i32 = arith.constant 0 : i32
    %c0_i32_0 = arith.constant 0 : i32
    %c0_i32_1 = arith.constant 0 : i32
    return %c0_i32, %c0_i32_0 : i32, i32
  }
  func.func @transform_6(%arg0: i32) -> (i32, i32) {
    %c0_i32 = arith.constant 0 : i32
    %c0_i32_0 = arith.constant 0 : i32
    %c0_i32_1 = arith.constant 0 : i32
    return %c0_i32, %c0_i32_0 : i32, i32
  }
  func.func @transform_7(%arg0: i32) -> (i32, i32) {
    %c0_i32 = arith.constant 0 : i32
    %c0_i32_0 = arith.constant 0 : i32
    %c0_i32_1 = arith.constant 0 : i32
    return %c0_i32, %c0_i32_0 : i32, i32
  }
  func.func @transform_8(%arg0: i32) -> (i32, i32) {
    %c0_i32 = arith.constant 0 : i32
    %c0_i32_0 = arith.constant 0 : i32
    %c0_i32_1 = arith.constant 0 : i32
    return %c0_i32, %c0_i32_0 : i32, i32
  }
  func.func @transform_9(%arg0: i32) -> (i32, i32) {
    %c0_i32 = arith.constant 0 : i32
    %c0_i32_0 = arith.constant 0 : i32
    %c0_i32_1 = arith.constant 0 : i32
    return %c0_i32, %c0_i32_0 : i32, i32
  }
  func.func @transform_10(%arg0: i32) -> (i32, i32) {
    %c0_i32 = arith.constant 0 : i32
    %c0_i32_0 = arith.constant 0 : i32
    %c0_i32_1 = arith.constant 0 : i32
    return %c0_i32, %c0_i32_0 : i32, i32
  }
  func.func @transform_11(%arg0: i32) -> (i32, i32) {
    %c0_i32 = arith.constant 0 : i32
    %c0_i32_0 = arith.constant 0 : i32
    return %arg0, %c0_i32 : i32, i32
  }
}

</mosaic_0001>

<llo_original>
// kernel: _run.1
$region0: #{_run.1}
  #allocation0 [shape = 'u32[]', space=smem, size = 0x4, offset = 0x4, fixed_abs, tag = 'smem constant byte address 0x4 - core index']
  #allocation1 [shape = 'u32[144,128]{1,0:T(1,128)}', space=vmem, size = 0x12000, scoped, tag = 'internal scratch']
  %s0 = inlined_call_operand.vmem [shape: bf16[128,256], index: 0, kind: input, shape index: {}]
  %s1 = inlined_call_operand.hbm [shape: bf16[256,1536], index: 1, kind: input, shape index: {}]
  %s2 = inlined_call_operand.vmem [shape: f32[1,1536], index: 2, kind: input, shape index: {}]
  %s3 = inlined_call_operand.hbm [shape: bf16[1536,256], index: 3, kind: input, shape index: {}]
  %s4 = inlined_call_operand.vmem [shape: f32[1,256], index: 4, kind: input, shape index: {}]
  %s5 = inlined_call_operand.vmem [shape: bf16[256,128], index: 5, kind: input, shape index: {}]
  %s6 = inlined_call_operand.vmem [shape: f32[1,128], index: 6, kind: input, shape index: {}]
  %s7 = inlined_call_operand.vmem [shape: bf16[128,128], index: 7, kind: input, shape index: {}]
  %s8 = inlined_call_operand.vmem [shape: f32[1,128], index: 8, kind: input, shape index: {}]
  %s9 = inlined_call_operand.vmem [shape: bf16[128,128], index: 9, kind: input, shape index: {}]
  %s10 = inlined_call_operand.vmem [shape: f32[1,128], index: 10, kind: input, shape index: {}]
  %s11 = inlined_call_operand.vmem [shape: f32[128,128], index: 11, kind: output, shape index: {}]
  %s12 = sld [smem:[#allocation0]]
  $region62: #{_run.1} parent=0
    _
  %s14 = ssub.s32 1, %s12
  %s15 = scalar_select 0, %s14, %s12
  $region1: #{_run.1} parent=0
    #allocation2 [shape = 'u8[786432]{0}', space=vmem, size = 0xc0000, scoped, tag = 'input window, operand 1, single buffered']
    #allocation3 [shape = 's32[1]{0}', space=sflag, size = 0x4, scoped, tag = 'scoped memory for _run.1']
    #allocation4 [shape = 'u8[786432]{0}', space=vmem, size = 0xc0000, scoped, tag = 'input window, operand 3, single buffered']
    #allocation5 [shape = 's32[1]{0}', space=sflag, size = 0x4, scoped, tag = 'scoped memory for _run.1']
    %16 = vsyncpa [#allocation3], 0
    %17 = vsyncpa [#allocation5], 0
    // Predicated region
    $region2: #{_run.1} parent=1 // pred_check
      _
    $region3: #{_run.1} parent=1 // pred_check_branch
      %19 = sbr.rel (0) target = $region5
    $region4: #{_run.1} parent=1 // pred_region
      _
    $region5: #{_run.1} parent=1 // pred_fallthru
      _
    // Predicated region
    $region6: #{_run.1} parent=1 // pred_check
      _
    $region7: #{_run.1} parent=1 // pred_check_branch
      %21 = sbr.rel (0) target = $region9
    $region8: #{_run.1} parent=1 // pred_region
      %s23 = ssub.s32 24576, 24576
      %24 = vsyncadd [#allocation3], %s23
      %s25 = sshll.u32 [#allocation2], 4
      %s26 = int_to_ptr.vmem [resolvable:$true] %s25
      %31 = dma.hbm_to_vmem [thread:$0]  %s1, 24576, %s26, [#allocation3], 768, 768, 48
    $region9: #{_run.1} parent=1 // pred_fallthru
      _
    // Predicated region
    $region10: #{_run.1} parent=1 // pred_check
      _
    $region11: #{_run.1} parent=1 // pred_check_branch
      %33 = sbr.rel (0) target = $region13
    $region12: #{_run.1} parent=1 // pred_region
      _
    $region13: #{_run.1} parent=1 // pred_fallthru
      _
    // Predicated region
    $region14: #{_run.1} parent=1 // pred_check
      _
    $region15: #{_run.1} parent=1 // pred_check_branch
      %35 = sbr.rel (0) target = $region17
    $region16: #{_run.1} parent=1 // pred_region
      %s37 = ssub.s32 24576, 24576
      %38 = vsyncadd [#allocation5], %s37
      %s39 = sshll.u32 [#allocation4], 4
      %s40 = int_to_ptr.vmem [resolvable:$true] %s39
      %45 = dma.hbm_to_vmem [thread:$0]  %s3, 24576, %s40, [#allocation5], 128, 128, 8
    $region17: #{_run.1} parent=1 // pred_fallthru
      _
    // Predicated region
    $region18: #{_run.1} parent=1 // pred_check
      _
    $region19: #{_run.1} parent=1 // pred_check_branch
      %47 = sbr.rel (0) target = $region21
    $region20: #{_run.1} parent=1 // pred_region
      _
    $region21: #{_run.1} parent=1 // pred_fallthru
      _
    // Predicated region
    $region22: #{_run.1} parent=1 // pred_check
      _
    $region23: #{_run.1} parent=1 // pred_check_branch
      %49 = sbr.rel (0) target = $region25
    $region24: #{_run.1} parent=1 // pred_region
      _
    $region25: #{_run.1} parent=1 // pred_fallthru
      _
    // Predicated region
    $region26: #{_run.1} parent=1 // pred_check
      _
    $region27: #{_run.1} parent=1 // pred_check_branch
      %51 = sbr.rel (0) target = $region29
    $region28: #{_run.1} parent=1 // pred_region
      _
    $region29: #{_run.1} parent=1 // pred_fallthru
      _
    // Predicated region
    $region30: #{_run.1} parent=1 // pred_check
      _
    $region31: #{_run.1} parent=1 // pred_check_branch
      %53 = sbr.rel (0) target = $region33
    $region32: #{_run.1} parent=1 // pred_region
      _
    $region33: #{_run.1} parent=1 // pred_fallthru
      _
    // Predicated region
    $region34: #{_run.1} parent=1 // pred_check
      _
    $region35: #{_run.1} parent=1 // pred_check_branch
      %55 = sbr.rel (0) target = $region37
    $region36: #{_run.1} parent=1 // pred_region
      _
    $region37: #{_run.1} parent=1 // pred_fallthru
      _
    // Predicated region
    $region38: #{_run.1} parent=1 // pred_check
      _
    $region39: #{_run.1} parent=1 // pred_check_branch
      %57 = sbr.rel (0) target = $region41
    $region40: #{_run.1} parent=1 // pred_region
      _
    $region41: #{_run.1} parent=1 // pred_fallthru
      _
    // Predicated region
    $region42: #{_run.1} parent=1 // pred_check
      _
    $region43: #{_run.1} parent=1 // pred_check_branch
      %59 = sbr.rel (0) target = $region45
    $region44: #{_run.1} parent=1 // pred_region
      _
    $region45: #{_run.1} parent=1 // pred_fallthru
      _
    // Predicated region
    $region46: #{_run.1} parent=1 // pred_check
      _
    $region47: #{_run.1} parent=1 // pred_check_branch
      %61 = sbr.rel (0) target = $region49
    $region48: #{_run.1} parent=1 // pred_region
      %62 = dma.done [#allocation3], 24576
    $region49: #{_run.1} parent=1 // pred_fallthru
      _
    // Predicated region
    $region50: #{_run.1} parent=1 // pred_check
      _
    $region51: #{_run.1} parent=1 // pred_check_branch
      %64 = sbr.rel (0) target = $region53
    $region52: #{_run.1} parent=1 // pred_region
      %65 = dma.done [#allocation5], 24576
    $region53: #{_run.1} parent=1 // pred_fallthru
      _
    %v67 = vld [vmem:[%s0] sm:$0xff]
    %v68 = vld [vmem:[%s0 + $0x8] sm:$0xff]
    %v69 = vld [vmem:[%s0 + $0x10] sm:$0xff]
    %v70 = vld [vmem:[%s0 + $0x18] sm:$0xff]
    %v71 = vld [vmem:[%s0 + $0x20] sm:$0xff]
    %v72 = vld [vmem:[%s0 + $0x28] sm:$0xff]
    %v73 = vld [vmem:[%s0 + $0x30] sm:$0xff]
    %v74 = vld [vmem:[%s0 + $0x38] sm:$0xff]
    %v75 = vld [vmem:[%s0 + $0x40] sm:$0xff]
    %v76 = vld [vmem:[%s0 + $0x48] sm:$0xff]
    %v77 = vld [vmem:[%s0 + $0x50] sm:$0xff]
    %v78 = vld [vmem:[%s0 + $0x58] sm:$0xff]
    %v79 = vld [vmem:[%s0 + $0x60] sm:$0xff]
    %v80 = vld [vmem:[%s0 + $0x68] sm:$0xff]
    %v81 = vld [vmem:[%s0 + $0x70] sm:$0xff]
    %v82 = vld [vmem:[%s0 + $0x78] sm:$0xff]
    %v83 = vld [vmem:[#allocation2] sm:$0xff]
    %v84 = vld [vmem:[#allocation2 + $0x8] sm:$0xff]
    %v85 = vld [vmem:[#allocation2 + $0x10] sm:$0xff]
    %v86 = vld [vmem:[#allocation2 + $0x18] sm:$0xff]
    %v87 = vld [vmem:[#allocation2 + $0x20] sm:$0xff]
    %v88 = vld [vmem:[#allocation2 + $0x28] sm:$0xff]
    %v89 = vld [vmem:[#allocation2 + $0x30] sm:$0xff]
    %v90 = vld [vmem:[#allocation2 + $0x38] sm:$0xff]
    %v91 = vld [vmem:[#allocation2 + $0x40] sm:$0xff]
    %v92 = vld [vmem:[#allocation2 + $0x48] sm:$0xff]
    %v93 = vld [vmem:[#allocation2 + $0x50] sm:$0xff]
    %v94 = vld [vmem:[#allocation2 + $0x58] sm:$0xff]
    %v95 = vld [vmem:[#allocation2 + $0x60] sm:$0xff]
    %v96 = vld [vmem:[#allocation2 + $0x68] sm:$0xff]
    %v97 = vld [vmem:[#allocation2 + $0x70] sm:$0xff]
    %v98 = vld [vmem:[#allocation2 + $0x78] sm:$0xff]
    %v99 = vld [vmem:[#allocation2 + $0x80] sm:$0xff]
    %v100 = vld [vmem:[#allocation2 + $0x88] sm:$0xff]
    %v101 = vld [vmem:[#allocation2 + $0x90] sm:$0xff]
    %v102 = vld [vmem:[#allocation2 + $0x98] sm:$0xff]
    %v103 = vld [vmem:[#allocation2 + $0xa0] sm:$0xff]
    %v104 = vld [vmem:[#allocation2 + $0xa8] sm:$0xff]
    %v105 = vld [vmem:[#allocation2 + $0xb0] sm:$0xff]
    %v106 = vld [vmem:[#allocation2 + $0xb8] sm:$0xff]
    %v107 = vld [vmem:[#allocation2 + $0xc0] sm:$0xff]
    %v108 = vld [vmem:[#allocation2 + $0xc8] sm:$0xff]
    %v109 = vld [vmem:[#allocation2 + $0xd0] sm:$0xff]
    %v110 = vld [vmem:[#allocation2 + $0xd8] sm:$0xff]
    %v111 = vld [vmem:[#allocation2 + $0xe0] sm:$0xff]
    %v112 = vld [vmem:[#allocation2 + $0xe8] sm:$0xff]
    %v113 = vld [vmem:[#allocation2 + $0xf0] sm:$0xff]
    %v114 = vld [vmem:[#allocation2 + $0xf8] sm:$0xff]
    %v115 = vld [vmem:[#allocation2 + $0x100] sm:$0xff]
    %v116 = vld [vmem:[#allocation2 + $0x108] sm:$0xff]
    %v117 = vld [vmem:[#allocation2 + $0x110] sm:$0xff]
    %v118 = vld [vmem:[#allocation2 + $0x118] sm:$0xff]
    %v119 = vld [vmem:[#allocation2 + $0x120] sm:$0xff]
    %v120 = vld [vmem:[#allocation2 + $0x128] sm:$0xff]
    %v121 = vld [vmem:[#allocation2 + $0x130] sm:$0xff]
    %v122 = vld [vmem:[#allocation2 + $0x138] sm:$0xff]
    %v123 = vld [vmem:[#allocation2 + $0x140] sm:$0xff]
    %v124 = vld [vmem:[#allocation2 + $0x148] sm:$0xff]
    %v125 = vld [vmem:[#allocation2 + $0x150] sm:$0xff]
    %v126 = vld [vmem:[#allocation2 + $0x158] sm:$0xff]
    %v127 = vld [vmem:[#allocation2 + $0x160] sm:$0xff]
    %v128 = vld [vmem:[#allocation2 + $0x168] sm:$0xff]
    %v129 = vld [vmem:[#allocation2 + $0x170] sm:$0xff]
    %v130 = vld [vmem:[#allocation2 + $0x178] sm:$0xff]
    %v131 = vld [vmem:[#allocation2 + $0x180] sm:$0xff]
    %v132 = vld [vmem:[#allocation2 + $0x188] sm:$0xff]
    %v133 = vld [vmem:[#allocation2 + $0x190] sm:$0xff]
    %v134 = vld [vmem:[#allocation2 + $0x198] sm:$0xff]
    %v135 = vld [vmem:[#allocation2 + $0x1a0] sm:$0xff]
    %v136 = vld [vmem:[#allocation2 + $0x1a8] sm:$0xff]
    %v137 = vld [vmem:[#allocation2 + $0x1b0] sm:$0xff]
    %v138 = vld [vmem:[#allocation2 + $0x1b8] sm:$0xff]
    %v139 = vld [vmem:[#allocation2 + $0x1c0] sm:$0xff]
    %v140 = vld [vmem:[#allocation2 + $0x1c8] sm:$0xff]
    %v141 = vld [vmem:[#allocation2 + $0x1d0] sm:$0xff]
    %v142 = vld [vmem:[#allocation2 + $0x1d8] sm:$0xff]
    %v143 = vld [vmem:[#allocation2 + $0x1e0] sm:$0xff]
    %v144 = vld [vmem:[#allocation2 + $0x1e8] sm:$0xff]
    %v145 = vld [vmem:[#allocation2 + $0x1f0] sm:$0xff]
    %v146 = vld [vmem:[#allocation2 + $0x1f8] sm:$0xff]
    %v147 = vld [vmem:[#allocation2 + $0x200] sm:$0xff]
    %v148 = vld [vmem:[#allocation2 + $0x208] sm:$0xff]
    %v149 = vld [vmem:[#allocation2 + $0x210] sm:$0xff]
    %v150 = vld [vmem:[#allocation2 + $0x218] sm:$0xff]
    %v151 = vld [vmem:[#allocation2 + $0x220] sm:$0xff]
    %v152 = vld [vmem:[#allocation2 + $0x228] sm:$0xff]
    %v153 = vld [vmem:[#allocation2 + $0x230] sm:$0xff]
    %v154 = vld [vmem:[#allocation2 + $0x238] sm:$0xff]
    %v155 = vld [vmem:[#allocation2 + $0x240] sm:$0xff]
    %v156 = vld [vmem:[#allocation2 + $0x248] sm:$0xff]
    %v157 = vld [vmem:[#allocation2 + $0x250] sm:$0xff]
    %v158 = vld [vmem:[#allocation2 + $0x258] sm:$0xff]
    %v159 = vld [vmem:[#allocation2 + $0x260] sm:$0xff]
    %v160 = vld [vmem:[#allocation2 + $0x268] sm:$0xff]
    %v161 = vld [vmem:[#allocation2 + $0x270] sm:$0xff]
    %v162 = vld [vmem:[#allocation2 + $0x278] sm:$0xff]
    %v163 = vld [vmem:[#allocation2 + $0x280] sm:$0xff]
    %v164 = vld [vmem:[#allocation2 + $0x288] sm:$0xff]
    %v165 = vld [vmem:[#allocation2 + $0x290] sm:$0xff]
    %v166 = vld [vmem:[#allocation2 + $0x298] sm:$0xff]
    %v167 = vld [vmem:[#allocation2 + $0x2a0] sm:$0xff]
    %v168 = vld [vmem:[#allocation2 + $0x2a8] sm:$0xff]
    %v169 = vld [vmem:[#allocation2 + $0x2b0] sm:$0xff]
    %v170 = vld [vmem:[#allocation2 + $0x2b8] sm:$0xff]
    %v171 = vld [vmem:[#allocation2 + $0x2c0] sm:$0xff]
    %v172 = vld [vmem:[#allocation2 + $0x2c8] sm:$0xff]
    %v173 = vld [vmem:[#allocation2 + $0x2d0] sm:$0xff]
    %v174 = vld [vmem:[#allocation2 + $0x2d8] sm:$0xff]
    %v175 = vld [vmem:[#allocation2 + $0x2e0] sm:$0xff]
    %v176 = vld [vmem:[#allocation2 + $0x2e8] sm:$0xff]
    %v177 = vld [vmem:[#allocation2 + $0x2f0] sm:$0xff]
    %v178 = vld [vmem:[#allocation2 + $0x2f8] sm:$0xff]
    %v179 = vld [vmem:[#allocation2 + $0x300] sm:$0xff]
    %v180 = vld [vmem:[#allocation2 + $0x308] sm:$0xff]
    %v181 = vld [vmem:[#allocation2 + $0x310] sm:$0xff]
    %v182 = vld [vmem:[#allocation2 + $0x318] sm:$0xff]
    %v183 = vld [vmem:[#allocation2 + $0x320] sm:$0xff]
    %v184 = vld [vmem:[#allocation2 + $0x328] sm:$0xff]
    %v185 = vld [vmem:[#allocation2 + $0x330] sm:$0xff]
    %v186 = vld [vmem:[#allocation2 + $0x338] sm:$0xff]
    %v187 = vld [vmem:[#allocation2 + $0x340] sm:$0xff]
    %v188 = vld [vmem:[#allocation2 + $0x348] sm:$0xff]
    %v189 = vld [vmem:[#allocation2 + $0x350] sm:$0xff]
    %v190 = vld [vmem:[#allocation2 + $0x358] sm:$0xff]
    %v191 = vld [vmem:[#allocation2 + $0x360] sm:$0xff]
    %v192 = vld [vmem:[#allocation2 + $0x368] sm:$0xff]
    %v193 = vld [vmem:[#allocation2 + $0x370] sm:$0xff]
    %v194 = vld [vmem:[#allocation2 + $0x378] sm:$0xff]
    %v195 = vld [vmem:[#allocation2 + $0x380] sm:$0xff]
    %v196 = vld [vmem:[#allocation2 + $0x388] sm:$0xff]
    %v197 = vld [vmem:[#allocation2 + $0x390] sm:$0xff]
    %v198 = vld [vmem:[#allocation2 + $0x398] sm:$0xff]
    %v199 = vld [vmem:[#allocation2 + $0x3a0] sm:$0xff]
    %v200 = vld [vmem:[#allocation2 + $0x3a8] sm:$0xff]
    %v201 = vld [vmem:[#allocation2 + $0x3b0] sm:$0xff]
    %v202 = vld [vmem:[#allocation2 + $0x3b8] sm:$0xff]
    %v203 = vld [vmem:[#allocation2 + $0x3c0] sm:$0xff]
    %v204 = vld [vmem:[#allocation2 + $0x3c8] sm:$0xff]
    %v205 = vld [vmem:[#allocation2 + $0x3d0] sm:$0xff]
    %v206 = vld [vmem:[#allocation2 + $0x3d8] sm:$0xff]
    %v207 = vld [vmem:[#allocation2 + $0x3e0] sm:$0xff]
    %v208 = vld [vmem:[#allocation2 + $0x3e8] sm:$0xff]
    %v209 = vld [vmem:[#allocation2 + $0x3f0] sm:$0xff]
    %v210 = vld [vmem:[#allocation2 + $0x3f8] sm:$0xff]
    %v211 = vld [vmem:[#allocation2 + $0x400] sm:$0xff]
    %v212 = vld [vmem:[#allocation2 + $0x408] sm:$0xff]
    %v213 = vld [vmem:[#allocation2 + $0x410] sm:$0xff]
    %v214 = vld [vmem:[#allocation2 + $0x418] sm:$0xff]
    %v215 = vld [vmem:[#allocation2 + $0x420] sm:$0xff]
    %v216 = vld [vmem:[#allocation2 + $0x428] sm:$0xff]
    %v217 = vld [vmem:[#allocation2 + $0x430] sm:$0xff]
    %v218 = vld [vmem:[#allocation2 + $0x438] sm:$0xff]
    %v219 = vld [vmem:[#allocation2 + $0x440] sm:$0xff]
    %v220 = vld [vmem:[#allocation2 + $0x448] sm:$0xff]
    %v221 = vld [vmem:[#allocation2 + $0x450] sm:$0xff]
    %v222 = vld [vmem:[#allocation2 + $0x458] sm:$0xff]
    %v223 = vld [vmem:[#allocation2 + $0x460] sm:$0xff]
    %v224 = vld [vmem:[#allocation2 + $0x468] sm:$0xff]
    %v225 = vld [vmem:[#allocation2 + $0x470] sm:$0xff]
    %v226 = vld [vmem:[#allocation2 + $0x478] sm:$0xff]
    %v227 = vld [vmem:[#allocation2 + $0x480] sm:$0xff]
    %v228 = vld [vmem:[#allocation2 + $0x488] sm:$0xff]
    %v229 = vld [vmem:[#allocation2 + $0x490] sm:$0xff]
    %v230 = vld [vmem:[#allocation2 + $0x498] sm:$0xff]
    %v231 = vld [vmem:[#allocation2 + $0x4a0] sm:$0xff]
    %v232 = vld [vmem:[#allocation2 + $0x4a8] sm:$0xff]
    %v233 = vld [vmem:[#allocation2 + $0x4b0] sm:$0xff]
    %v234 = vld [vmem:[#allocation2 + $0x4b8] sm:$0xff]
    %v235 = vld [vmem:[#allocation2 + $0x4c0] sm:$0xff]
    %v236 = vld [vmem:[#allocation2 + $0x4c8] sm:$0xff]
    %v237 = vld [vmem:[#allocation2 + $0x4d0] sm:$0xff]
    %v238 = vld [vmem:[#allocation2 + $0x4d8] sm:$0xff]
    %v239 = vld [vmem:[#allocation2 + $0x4e0] sm:$0xff]
    %v240 = vld [vmem:[#allocation2 + $0x4e8] sm:$0xff]
    %v241 = vld [vmem:[#allocation2 + $0x4f0] sm:$0xff]
    %v242 = vld [vmem:[#allocation2 + $0x4f8] sm:$0xff]
    %v243 = vld [vmem:[#allocation2 + $0x500] sm:$0xff]
    %v244 = vld [vmem:[#allocation2 + $0x508] sm:$0xff]
    %v245 = vld [vmem:[#allocation2 + $0x510] sm:$0xff]
    %v246 = vld [vmem:[#allocation2 + $0x518] sm:$0xff]
    %v247 = vld [vmem:[#allocation2 + $0x520] sm:$0xff]
    %v248 = vld [vmem:[#allocation2 + $0x528] sm:$0xff]
    %v249 = vld [vmem:[#allocation2 + $0x530] sm:$0xff]
    %v250 = vld [vmem:[#allocation2 + $0x538] sm:$0xff]
    %v251 = vld [vmem:[#allocation2 + $0x540] sm:$0xff]
    %v252 = vld [vmem:[#allocation2 + $0x548] sm:$0xff]
    %v253 = vld [vmem:[#allocation2 + $0x550] sm:$0xff]
    %v254 = vld [vmem:[#allocation2 + $0x558] sm:$0xff]
    %v255 = vld [vmem:[#allocation2 + $0x560] sm:$0xff]
    %v256 = vld [vmem:[#allocation2 + $0x568] sm:$0xff]
    %v257 = vld [vmem:[#allocation2 + $0x570] sm:$0xff]
    %v258 = vld [vmem:[#allocation2 + $0x578] sm:$0xff]
    %v259 = vld [vmem:[#allocation2 + $0x580] sm:$0xff]
    %v260 = vld [vmem:[#allocation2 + $0x588] sm:$0xff]
    %v261 = vld [vmem:[#allocation2 + $0x590] sm:$0xff]
    %v262 = vld [vmem:[#allocation2 + $0x598] sm:$0xff]
    %v263 = vld [vmem:[#allocation2 + $0x5a0] sm:$0xff]
    %v264 = vld [vmem:[#allocation2 + $0x5a8] sm:$0xff]
    %v265 = vld [vmem:[#allocation2 + $0x5b0] sm:$0xff]
    %v266 = vld [vmem:[#allocation2 + $0x5b8] sm:$0xff]
    %v267 = vld [vmem:[#allocation2 + $0x5c0] sm:$0xff]
    %v268 = vld [vmem:[#allocation2 + $0x5c8] sm:$0xff]
    %v269 = vld [vmem:[#allocation2 + $0x5d0] sm:$0xff]
    %v270 = vld [vmem:[#allocation2 + $0x5d8] sm:$0xff]
    %v271 = vld [vmem:[#allocation2 + $0x5e0] sm:$0xff]
    %v272 = vld [vmem:[#allocation2 + $0x5e8] sm:$0xff]
    %v273 = vld [vmem:[#allocation2 + $0x5f0] sm:$0xff]
    %v274 = vld [vmem:[#allocation2 + $0x5f8] sm:$0xff]
    %v275 = vld [vmem:[%s2] sm:$0xff]
    %v276 = vld [vmem:[%s2 + $0x8] sm:$0xf]
    %v279 = vlaneseq
    %v280 = vshrl.u32 %v279, 7
    %v281 = vsub.s32 0, %v280
    %v282 = vrot.slane %v275, %v281
    %v283 = vlaneseq
    %v284 = vshrl.u32 %v283, 7
    %v285 = vsub.s32 1, %v284
    %v286 = vrot.slane %v275, %v285
    %v287 = vlaneseq
    %v288 = vshrl.u32 %v287, 7
    %v289 = vsub.s32 2, %v288
    %v290 = vrot.slane %v275, %v289
    %v291 = vlaneseq
    %v292 = vshrl.u32 %v291, 7
    %v293 = vsub.s32 3, %v292
    %v294 = vrot.slane %v275, %v293
    %v295 = vlaneseq
    %v296 = vshrl.u32 %v295, 7
    %v297 = vsub.s32 4, %v296
    %v298 = vrot.slane %v275, %v297
    %v299 = vlaneseq
    %v300 = vshrl.u32 %v299, 7
    %v301 = vsub.s32 5, %v300
    %v302 = vrot.slane %v275, %v301
    %v303 = vlaneseq
    %v304 = vshrl.u32 %v303, 7
    %v305 = vsub.s32 6, %v304
    %v306 = vrot.slane %v275, %v305
    %v307 = vlaneseq
    %v308 = vshrl.u32 %v307, 7
    %v309 = vsub.s32 7, %v308
    %v310 = vrot.slane %v275, %v309
    %v311 = vlaneseq
    %v312 = vshrl.u32 %v311, 7
    %v313 = vsub.s32 0, %v312
    %v314 = vrot.slane %v276, %v313
    %v315 = vlaneseq
    %v316 = vshrl.u32 %v315, 7
    %v317 = vsub.s32 1, %v316
    %v318 = vrot.slane %v276, %v317
    %v319 = vlaneseq
    %v320 = vshrl.u32 %v319, 7
    %v321 = vsub.s32 2, %v320
    %v322 = vrot.slane %v276, %v321
    %v323 = vlaneseq
    %v324 = vshrl.u32 %v323, 7
    %v325 = vsub.s32 3, %v324
    %v326 = vrot.slane %v276, %v325
    %v355 = vunpack.c.l.b16 %v67
    %v356 = vunpack.c.h.b16 %v67
    %v357 = vunpack.c.l.b16 %v68
    %v358 = vunpack.c.h.b16 %v68
    %v359 = vunpack.c.l.b16 %v69
    %v360 = vunpack.c.h.b16 %v69
    %v361 = vunpack.c.l.b16 %v70
    %v362 = vunpack.c.h.b16 %v70
    %v363 = vunpack.c.l.b16 %v71
    %v364 = vunpack.c.h.b16 %v71
    %v365 = vunpack.c.l.b16 %v72
    %v366 = vunpack.c.h.b16 %v72
    %v367 = vunpack.c.l.b16 %v73
    %v368 = vunpack.c.h.b16 %v73
    %v369 = vunpack.c.l.b16 %v74
    %v370 = vunpack.c.h.b16 %v74
    %v371 = vunpack.c.l.b16 %v75
    %v372 = vunpack.c.h.b16 %v75
    %v373 = vunpack.c.l.b16 %v76
    %v374 = vunpack.c.h.b16 %v76
    %v375 = vunpack.c.l.b16 %v77
    %v376 = vunpack.c.h.b16 %v77
    %v377 = vunpack.c.l.b16 %v78
    %v378 = vunpack.c.h.b16 %v78
    %v379 = vunpack.c.l.b16 %v79
    %v380 = vunpack.c.h.b16 %v79
    %v381 = vunpack.c.l.b16 %v80
    %v382 = vunpack.c.h.b16 %v80
    %v383 = vunpack.c.l.b16 %v81
    %v384 = vunpack.c.h.b16 %v81
    %v385 = vunpack.c.l.b16 %v82
    %v386 = vunpack.c.h.b16 %v82
    %v387 = vpack.c.b16 %v357, %v355
    %v388 = vpack.c.b16 %v358, %v356
    %v389 = vpack.c.b16 %v361, %v359
    %v390 = vpack.c.b16 %v362, %v360
    %v391 = vpack.c.b16 %v365, %v363
    %v392 = vpack.c.b16 %v366, %v364
    %v393 = vpack.c.b16 %v369, %v367
    %v394 = vpack.c.b16 %v370, %v368
    %v395 = vpack.c.b16 %v373, %v371
    %v396 = vpack.c.b16 %v374, %v372
    %v397 = vpack.c.b16 %v377, %v375
    %v398 = vpack.c.b16 %v378, %v376
    %v399 = vpack.c.b16 %v381, %v379
    %v400 = vpack.c.b16 %v382, %v380
    %v401 = vpack.c.b16 %v385, %v383
    %v402 = vpack.c.b16 %v386, %v384
    %v611 = vunpack.c.l.b16 %v83
    %v612 = vunpack.c.h.b16 %v83
    %v613 = vunpack.c.l.b16 %v84
    %v614 = vunpack.c.h.b16 %v84
    %v615 = vunpack.c.l.b16 %v85
    %v616 = vunpack.c.h.b16 %v85
    %v617 = vunpack.c.l.b16 %v86
    %v618 = vunpack.c.h.b16 %v86
    %v619 = vunpack.c.l.b16 %v87
    %v620 = vunpack.c.h.b16 %v87
    %v621 = vunpack.c.l.b16 %v88
    %v622 = vunpack.c.h.b16 %v88
    %v623 = vunpack.c.l.b16 %v89
    %v624 = vunpack.c.h.b16 %v89
    %v625 = vunpack.c.l.b16 %v90
    %v626 = vunpack.c.h.b16 %v90
    %v627 = vunpack.c.l.b16 %v91
    %v628 = vunpack.c.h.b16 %v91
    %v629 = vunpack.c.l.b16 %v92
    %v630 = vunpack.c.h.b16 %v92
    %v631 = vunpack.c.l.b16 %v93
    %v632 = vunpack.c.h.b16 %v93
    %v633 = vunpack.c.l.b16 %v94
    %v634 = vunpack.c.h.b16 %v94
    %v635 = vunpack.c.l.b16 %v95
    %v636 = vunpack.c.h.b16 %v95
    %v637 = vunpack.c.l.b16 %v96
    %v638 = vunpack.c.h.b16 %v96
    %v639 = vunpack.c.l.b16 %v97
    %v640 = vunpack.c.h.b16 %v97
    %v641 = vunpack.c.l.b16 %v98
    %v642 = vunpack.c.h.b16 %v98
    %v643 = vunpack.c.l.b16 %v99
    %v644 = vunpack.c.h.b16 %v99
    %v645 = vunpack.c.l.b16 %v100
    %v646 = vunpack.c.h.b16 %v100
    %v647 = vunpack.c.l.b16 %v101
    %v648 = vunpack.c.h.b16 %v101
    %v649 = vunpack.c.l.b16 %v102
    %v650 = vunpack.c.h.b16 %v102
    %v651 = vunpack.c.l.b16 %v103
    %v652 = vunpack.c.h.b16 %v103
    %v653 = vunpack.c.l.b16 %v104
    %v654 = vunpack.c.h.b16 %v104
    %v655 = vunpack.c.l.b16 %v105
    %v656 = vunpack.c.h.b16 %v105
    %v657 = vunpack.c.l.b16 %v106
    %v658 = vunpack.c.h.b16 %v106
    %v659 = vunpack.c.l.b16 %v107
    %v660 = vunpack.c.h.b16 %v107
    %v661 = vunpack.c.l.b16 %v108
    %v662 = vunpack.c.h.b16 %v108
    %v663 = vunpack.c.l.b16 %v109
    %v664 = vunpack.c.h.b16 %v109
    %v665 = vunpack.c.l.b16 %v110
    %v666 = vunpack.c.h.b16 %v110
    %v667 = vunpack.c.l.b16 %v111
    %v668 = vunpack.c.h.b16 %v111
    %v669 = vunpack.c.l.b16 %v112
    %v670 = vunpack.c.h.b16 %v112
    %v671 = vunpack.c.l.b16 %v113
    %v672 = vunpack.c.h.b16 %v113
    %v673 = vunpack.c.l.b16 %v114
    %v674 = vunpack.c.h.b16 %v114
    %v675 = vunpack.c.l.b16 %v115
    %v676 = vunpack.c.h.b16 %v115
    %v677 = vunpack.c.l.b16 %v116
    %v678 = vunpack.c.h.b16 %v116
    %v679 = vunpack.c.l.b16 %v117
    %v680 = vunpack.c.h.b16 %v117
    %v681 = vunpack.c.l.b16 %v118
    %v682 = vunpack.c.h.b16 %v118
    %v683 = vunpack.c.l.b16 %v119
    %v684 = vunpack.c.h.b16 %v119
    %v685 = vunpack.c.l.b16 %v120
    %v686 = vunpack.c.h.b16 %v120
    %v687 = vunpack.c.l.b16 %v121
    %v688 = vunpack.c.h.b16 %v121
    %v689 = vunpack.c.l.b16 %v122
    %v690 = vunpack.c.h.b16 %v122
    %v691 = vunpack.c.l.b16 %v123
    %v692 = vunpack.c.h.b16 %v123
    %v693 = vunpack.c.l.b16 %v124
    %v694 = vunpack.c.h.b16 %v124
    %v695 = vunpack.c.l.b16 %v125
    %v696 = vunpack.c.h.b16 %v125
    %v697 = vunpack.c.l.b16 %v126
    %v698 = vunpack.c.h.b16 %v126
    %v699 = vunpack.c.l.b16 %v127
    %v700 = vunpack.c.h.b16 %v127
    %v701 = vunpack.c.l.b16 %v128
    %v702 = vunpack.c.h.b16 %v128
    %v703 = vunpack.c.l.b16 %v129
    %v704 = vunpack.c.h.b16 %v129
    %v705 = vunpack.c.l.b16 %v130
    %v706 = vunpack.c.h.b16 %v130
    %v707 = vunpack.c.l.b16 %v131
    %v708 = vunpack.c.h.b16 %v131
    %v709 = vunpack.c.l.b16 %v132
    %v710 = vunpack.c.h.b16 %v132
    %v711 = vunpack.c.l.b16 %v133
    %v712 = vunpack.c.h.b16 %v133
    %v713 = vunpack.c.l.b16 %v134
    %v714 = vunpack.c.h.b16 %v134
    %v715 = vunpack.c.l.b16 %v135
    %v716 = vunpack.c.h.b16 %v135
    %v717 = vunpack.c.l.b16 %v136
    %v718 = vunpack.c.h.b16 %v136
    %v719 = vunpack.c.l.b16 %v137
    %v720 = vunpack.c.h.b16 %v137
    %v721 = vunpack.c.l.b16 %v138
    %v722 = vunpack.c.h.b16 %v138
    %v723 = vunpack.c.l.b16 %v139
    %v724 = vunpack.c.h.b16 %v139
    %v725 = vunpack.c.l.b16 %v140
    %v726 = vunpack.c.h.b16 %v140
    %v727 = vunpack.c.l.b16 %v141
    %v728 = vunpack.c.h.b16 %v141
    %v729 = vunpack.c.l.b16 %v142
    %v730 = vunpack.c.h.b16 %v142
    %v731 = vunpack.c.l.b16 %v143
    %v732 = vunpack.c.h.b16 %v143
    %v733 = vunpack.c.l.b16 %v144
    %v734 = vunpack.c.h.b16 %v144
    %v735 = vunpack.c.l.b16 %v145
    %v736 = vunpack.c.h.b16 %v145
    %v737 = vunpack.c.l.b16 %v146
    %v738 = vunpack.c.h.b16 %v146
    %v739 = vunpack.c.l.b16 %v147
    %v740 = vunpack.c.h.b16 %v147
    %v741 = vunpack.c.l.b16 %v148
    %v742 = vunpack.c.h.b16 %v148
    %v743 = vunpack.c.l.b16 %v149
    %v744 = vunpack.c.h.b16 %v149
    %v745 = vunpack.c.l.b16 %v150
    %v746 = vunpack.c.h.b16 %v150
    %v747 = vunpack.c.l.b16 %v151
    %v748 = vunpack.c.h.b16 %v151
    %v749 = vunpack.c.l.b16 %v152
    %v750 = vunpack.c.h.b16 %v152
    %v751 = vunpack.c.l.b16 %v153
    %v752 = vunpack.c.h.b16 %v153
    %v753 = vunpack.c.l.b16 %v154
    %v754 = vunpack.c.h.b16 %v154
    %v755 = vunpack.c.l.b16 %v155
    %v756 = vunpack.c.h.b16 %v155
    %v757 = vunpack.c.l.b16 %v156
    %v758 = vunpack.c.h.b16 %v156
    %v759 = vunpack.c.l.b16 %v157
    %v760 = vunpack.c.h.b16 %v157
    %v761 = vunpack.c.l.b16 %v158
    %v762 = vunpack.c.h.b16 %v158
    %v763 = vunpack.c.l.b16 %v159
    %v764 = vunpack.c.h.b16 %v159
    %v765 = vunpack.c.l.b16 %v160
    %v766 = vunpack.c.h.b16 %v160
    %v767 = vunpack.c.l.b16 %v161
    %v768 = vunpack.c.h.b16 %v161
    %v769 = vunpack.c.l.b16 %v162
    %v770 = vunpack.c.h.b16 %v162
    %v771 = vunpack.c.l.b16 %v163
    %v772 = vunpack.c.h.b16 %v163
    %v773 = vunpack.c.l.b16 %v164
    %v774 = vunpack.c.h.b16 %v164
    %v775 = vunpack.c.l.b16 %v165
    %v776 = vunpack.c.h.b16 %v165
    %v777 = vunpack.c.l.b16 %v166
    %v778 = vunpack.c.h.b16 %v166
    %v779 = vunpack.c.l.b16 %v167
    %v780 = vunpack.c.h.b16 %v167
    %v781 = vunpack.c.l.b16 %v168
    %v782 = vunpack.c.h.b16 %v168
    %v783 = vunpack.c.l.b16 %v169
    %v784 = vunpack.c.h.b16 %v169
    %v785 = vunpack.c.l.b16 %v170
    %v786 = vunpack.c.h.b16 %v170
    %v787 = vunpack.c.l.b16 %v171
    %v788 = vunpack.c.h.b16 %v171
    %v789 = vunpack.c.l.b16 %v172
    %v790 = vunpack.c.h.b16 %v172
    %v791 = vunpack.c.l.b16 %v173
    %v792 = vunpack.c.h.b16 %v173
    %v793 = vunpack.c.l.b16 %v174
    %v794 = vunpack.c.h.b16 %v174
    %v795 = vunpack.c.l.b16 %v175
    %v796 = vunpack.c.h.b16 %v175
    %v797 = vunpack.c.l.b16 %v176
    %v798 = vunpack.c.h.b16 %v176
    %v799 = vunpack.c.l.b16 %v177
    %v800 = vunpack.c.h.b16 %v177
    %v801 = vunpack.c.l.b16 %v178
    %v802 = vunpack.c.h.b16 %v178
    %v803 = vunpack.c.l.b16 %v179
    %v804 = vunpack.c.h.b16 %v179
    %v805 = vunpack.c.l.b16 %v180
    %v806 = vunpack.c.h.b16 %v180
    %v807 = vunpack.c.l.b16 %v181
    %v808 = vunpack.c.h.b16 %v181
    %v809 = vunpack.c.l.b16 %v182
    %v810 = vunpack.c.h.b16 %v182
    %v811 = vunpack.c.l.b16 %v183
    %v812 = vunpack.c.h.b16 %v183
    %v813 = vunpack.c.l.b16 %v184
    %v814 = vunpack.c.h.b16 %v184
    %v815 = vunpack.c.l.b16 %v185
    %v816 = vunpack.c.h.b16 %v185
    %v817 = vunpack.c.l.b16 %v186
    %v818 = vunpack.c.h.b16 %v186
    %v819 = vunpack.c.l.b16 %v187
    %v820 = vunpack.c.h.b16 %v187
    %v821 = vunpack.c.l.b16 %v188
    %v822 = vunpack.c.h.b16 %v188
    %v823 = vunpack.c.l.b16 %v189
    %v824 = vunpack.c.h.b16 %v189
    %v825 = vunpack.c.l.b16 %v190
    %v826 = vunpack.c.h.b16 %v190
    %v827 = vunpack.c.l.b16 %v191
    %v828 = vunpack.c.h.b16 %v191
    %v829 = vunpack.c.l.b16 %v192
    %v830 = vunpack.c.h.b16 %v192
    %v831 = vunpack.c.l.b16 %v193
    %v832 = vunpack.c.h.b16 %v193
    %v833 = vunpack.c.l.b16 %v194
    %v834 = vunpack.c.h.b16 %v194
    %v835 = vunpack.c.l.b16 %v195
    %v836 = vunpack.c.h.b16 %v195
    %v837 = vunpack.c.l.b16 %v196
    %v838 = vunpack.c.h.b16 %v196
    %v839 = vunpack.c.l.b16 %v197
    %v840 = vunpack.c.h.b16 %v197
    %v841 = vunpack.c.l.b16 %v198
    %v842 = vunpack.c.h.b16 %v198
    %v843 = vunpack.c.l.b16 %v199
    %v844 = vunpack.c.h.b16 %v199
    %v845 = vunpack.c.l.b16 %v200
    %v846 = vunpack.c.h.b16 %v200
    %v847 = vunpack.c.l.b16 %v201
    %v848 = vunpack.c.h.b16 %v201
    %v849 = vunpack.c.l.b16 %v202
    %v850 = vunpack.c.h.b16 %v202
    %v851 = vunpack.c.l.b16 %v203
    %v852 = vunpack.c.h.b16 %v203
    %v853 = vunpack.c.l.b16 %v204
    %v854 = vunpack.c.h.b16 %v204
    %v855 = vunpack.c.l.b16 %v205
    %v856 = vunpack.c.h.b16 %v205
    %v857 = vunpack.c.l.b16 %v206
    %v858 = vunpack.c.h.b16 %v206
    %v859 = vunpack.c.l.b16 %v207
    %v860 = vunpack.c.h.b16 %v207
    %v861 = vunpack.c.l.b16 %v208
    %v862 = vunpack.c.h.b16 %v208
    %v863 = vunpack.c.l.b16 %v209
    %v864 = vunpack.c.h.b16 %v209
    %v865 = vunpack.c.l.b16 %v210
    %v866 = vunpack.c.h.b16 %v210
    %v867 = vunpack.c.l.b16 %v211
    %v868 = vunpack.c.h.b16 %v211
    %v869 = vunpack.c.l.b16 %v212
    %v870 = vunpack.c.h.b16 %v212
    %v871 = vunpack.c.l.b16 %v213
    %v872 = vunpack.c.h.b16 %v213
    %v873 = vunpack.c.l.b16 %v214
    %v874 = vunpack.c.h.b16 %v214
    %v875 = vunpack.c.l.b16 %v215
    %v876 = vunpack.c.h.b16 %v215
    %v877 = vunpack.c.l.b16 %v216
    %v878 = vunpack.c.h.b16 %v216
    %v879 = vunpack.c.l.b16 %v217
    %v880 = vunpack.c.h.b16 %v217
    %v881 = vunpack.c.l.b16 %v218
    %v882 = vunpack.c.h.b16 %v218
    %v883 = vunpack.c.l.b16 %v219
    %v884 = vunpack.c.h.b16 %v219
    %v885 = vunpack.c.l.b16 %v220
    %v886 = vunpack.c.h.b16 %v220
    %v887 = vunpack.c.l.b16 %v221
    %v888 = vunpack.c.h.b16 %v221
    %v889 = vunpack.c.l.b16 %v222
    %v890 = vunpack.c.h.b16 %v222
    %v891 = vunpack.c.l.b16 %v223
    %v892 = vunpack.c.h.b16 %v223
    %v893 = vunpack.c.l.b16 %v224
    %v894 = vunpack.c.h.b16 %v224
    %v895 = vunpack.c.l.b16 %v225
    %v896 = vunpack.c.h.b16 %v225
    %v897 = vunpack.c.l.b16 %v226
    %v898 = vunpack.c.h.b16 %v226
    %v899 = vunpack.c.l.b16 %v227
    %v900 = vunpack.c.h.b16 %v227
    %v901 = vunpack.c.l.b16 %v228
    %v902 = vunpack.c.h.b16 %v228
    %v903 = vunpack.c.l.b16 %v229
    %v904 = vunpack.c.h.b16 %v229
    %v905 = vunpack.c.l.b16 %v230
    %v906 = vunpack.c.h.b16 %v230
    %v907 = vunpack.c.l.b16 %v231
    %v908 = vunpack.c.h.b16 %v231
    %v909 = vunpack.c.l.b16 %v232
    %v910 = vunpack.c.h.b16 %v232
    %v911 = vunpack.c.l.b16 %v233
    %v912 = vunpack.c.h.b16 %v233
    %v913 = vunpack.c.l.b16 %v234
    %v914 = vunpack.c.h.b16 %v234
    %v915 = vunpack.c.l.b16 %v235
    %v916 = vunpack.c.h.b16 %v235
    %v917 = vunpack.c.l.b16 %v236
    %v918 = vunpack.c.h.b16 %v236
    %v919 = vunpack.c.l.b16 %v237
    %v920 = vunpack.c.h.b16 %v237
    %v921 = vunpack.c.l.b16 %v238
    %v922 = vunpack.c.h.b16 %v238
    %v923 = vunpack.c.l.b16 %v239
    %v924 = vunpack.c.h.b16 %v239
    %v925 = vunpack.c.l.b16 %v240
    %v926 = vunpack.c.h.b16 %v240
    %v927 = vunpack.c.l.b16 %v241
    %v928 = vunpack.c.h.b16 %v241
    %v929 = vunpack.c.l.b16 %v242
    %v930 = vunpack.c.h.b16 %v242
    %v931 = vunpack.c.l.b16 %v243
    %v932 = vunpack.c.h.b16 %v243
    %v933 = vunpack.c.l.b16 %v244
    %v934 = vunpack.c.h.b16 %v244
    %v935 = vunpack.c.l.b16 %v245
    %v936 = vunpack.c.h.b16 %v245
    %v937 = vunpack.c.l.b16 %v246
    %v938 = vunpack.c.h.b16 %v246
    %v939 = vunpack.c.l.b16 %v247
    %v940 = vunpack.c.h.b16 %v247
    %v941 = vunpack.c.l.b16 %v248
    %v942 = vunpack.c.h.b16 %v248
    %v943 = vunpack.c.l.b16 %v249
    %v944 = vunpack.c.h.b16 %v249
    %v945 = vunpack.c.l.b16 %v250
    %v946 = vunpack.c.h.b16 %v250
    %v947 = vunpack.c.l.b16 %v251
    %v948 = vunpack.c.h.b16 %v251
    %v949 = vunpack.c.l.b16 %v252
    %v950 = vunpack.c.h.b16 %v252
    %v951 = vunpack.c.l.b16 %v253
    %v952 = vunpack.c.h.b16 %v253
    %v953 = vunpack.c.l.b16 %v254
    %v954 = vunpack.c.h.b16 %v254
    %v955 = vunpack.c.l.b16 %v255
    %v956 = vunpack.c.h.b16 %v255
    %v957 = vunpack.c.l.b16 %v256
    %v958 = vunpack.c.h.b16 %v256
    %v959 = vunpack.c.l.b16 %v257
    %v960 = vunpack.c.h.b16 %v257
    %v961 = vunpack.c.l.b16 %v258
    %v962 = vunpack.c.h.b16 %v258
    %v963 = vunpack.c.l.b16 %v259
    %v964 = vunpack.c.h.b16 %v259
    %v965 = vunpack.c.l.b16 %v260
    %v966 = vunpack.c.h.b16 %v260
    %v967 = vunpack.c.l.b16 %v261
    %v968 = vunpack.c.h.b16 %v261
    %v969 = vunpack.c.l.b16 %v262
    %v970 = vunpack.c.h.b16 %v262
    %v971 = vunpack.c.l.b16 %v263
    %v972 = vunpack.c.h.b16 %v263
    %v973 = vunpack.c.l.b16 %v264
    %v974 = vunpack.c.h.b16 %v264
    %v975 = vunpack.c.l.b16 %v265
    %v976 = vunpack.c.h.b16 %v265
    %v977 = vunpack.c.l.b16 %v266
    %v978 = vunpack.c.h.b16 %v266
    %v979 = vunpack.c.l.b16 %v267
    %v980 = vunpack.c.h.b16 %v267
    %v981 = vunpack.c.l.b16 %v268
    %v982 = vunpack.c.h.b16 %v268
    %v983 = vunpack.c.l.b16 %v269
    %v984 = vunpack.c.h.b16 %v269
    %v985 = vunpack.c.l.b16 %v270
    %v986 = vunpack.c.h.b16 %v270
    %v987 = vunpack.c.l.b16 %v271
    %v988 = vunpack.c.h.b16 %v271
    %v989 = vunpack.c.l.b16 %v272
    %v990 = vunpack.c.h.b16 %v272
    %v991 = vunpack.c.l.b16 %v273
    %v992 = vunpack.c.h.b16 %v273
    %v993 = vunpack.c.l.b16 %v274
    %v994 = vunpack.c.h.b16 %v274
    %v995 = vpack.c.b16 %v623, %v611
    %v996 = vpack.c.b16 %v624, %v612
    %v997 = vpack.c.b16 %v625, %v613
    %v998 = vpack.c.b16 %v626, %v614
    %v999 = vpack.c.b16 %v627, %v615
    %v1000 = vpack.c.b16 %v628, %v616
    %v1001 = vpack.c.b16 %v629, %v617
    %v1002 = vpack.c.b16 %v630, %v618
    %v1003 = vpack.c.b16 %v631, %v619
    %v1004 = vpack.c.b16 %v632, %v620
    %v1005 = vpack.c.b16 %v633, %v621
    %v1006 = vpack.c.b16 %v634, %v622
    %v1007 = vpack.c.b16 %v647, %v635
    %v1008 = vpack.c.b16 %v648, %v636
    %v1009 = vpack.c.b16 %v649, %v637
    %v1010 = vpack.c.b16 %v650, %v638
    %v1011 = vpack.c.b16 %v651, %v639
    %v1012 = vpack.c.b16 %v652, %v640
    %v1013 = vpack.c.b16 %v653, %v641
    %v1014 = vpack.c.b16 %v654, %v642
    %v1015 = vpack.c.b16 %v655, %v643
    %v1016 = vpack.c.b16 %v656, %v644
    %v1017 = vpack.c.b16 %v657, %v645
    %v1018 = vpack.c.b16 %v658, %v646
    %v1019 = vpack.c.b16 %v671, %v659
    %v1020 = vpack.c.b16 %v672, %v660
    %v1021 = vpack.c.b16 %v673, %v661
    %v1022 = vpack.c.b16 %v674, %v662
    %v1023 = vpack.c.b16 %v675, %v663
    %v1024 = vpack.c.b16 %v676, %v664
    %v1025 = vpack.c.b16 %v677, %v665
    %v1026 = vpack.c.b16 %v678, %v666
    %v1027 = vpack.c.b16 %v679, %v667
    %v1028 = vpack.c.b16 %v680, %v668
    %v1029 = vpack.c.b16 %v681, %v669
    %v1030 = vpack.c.b16 %v682, %v670
    %v1031 = vpack.c.b16 %v695, %v683
    %v1032 = vpack.c.b16 %v696, %v684
    %v1033 = vpack.c.b16 %v697, %v685
    %v1034 = vpack.c.b16 %v698, %v686
    %v1035 = vpack.c.b16 %v699, %v687
    %v1036 = vpack.c.b16 %v700, %v688
    %v1037 = vpack.c.b16 %v701, %v689
    %v1038 = vpack.c.b16 %v702, %v690
    %v1039 = vpack.c.b16 %v703, %v691
    %v1040 = vpack.c.b16 %v704, %v692
    %v1041 = vpack.c.b16 %v705, %v693
    %v1042 = vpack.c.b16 %v706, %v694
    %v1043 = vpack.c.b16 %v719, %v707
    %v1044 = vpack.c.b16 %v720, %v708
    %v1045 = vpack.c.b16 %v721, %v709
    %v1046 = vpack.c.b16 %v722, %v710
    %v1047 = vpack.c.b16 %v723, %v711
    %v1048 = vpack.c.b16 %v724, %v712
    %v1049 = vpack.c.b16 %v725, %v713
    %v1050 = vpack.c.b16 %v726, %v714
    %v1051 = vpack.c.b16 %v727, %v715
    %v1052 = vpack.c.b16 %v728, %v716
    %v1053 = vpack.c.b16 %v729, %v717
    %v1054 = vpack.c.b16 %v730, %v718
    %v1055 = vpack.c.b16 %v743, %v731
    %v1056 = vpack.c.b16 %v744, %v732
    %v1057 = vpack.c.b16 %v745, %v733
    %v1058 = vpack.c.b16 %v746, %v734
    %v1059 = vpack.c.b16 %v747, %v735
    %v1060 = vpack.c.b16 %v748, %v736
    %v1061 = vpack.c.b16 %v749, %v737
    %v1062 = vpack.c.b16 %v750, %v738
    %v1063 = vpack.c.b16 %v751, %v739
    %v1064 = vpack.c.b16 %v752, %v740
    %v1065 = vpack.c.b16 %v753, %v741
    %v1066 = vpack.c.b16 %v754, %v742
    %v1067 = vpack.c.b16 %v767, %v755
    %v1068 = vpack.c.b16 %v768, %v756
    %v1069 = vpack.c.b16 %v769, %v757
    %v1070 = vpack.c.b16 %v770, %v758
    %v1071 = vpack.c.b16 %v771, %v759
    %v1072 = vpack.c.b16 %v772, %v760
    %v1073 = vpack.c.b16 %v773, %v761
    %v1074 = vpack.c.b16 %v774, %v762
    %v1075 = vpack.c.b16 %v775, %v763
    %v1076 = vpack.c.b16 %v776, %v764
    %v1077 = vpack.c.b16 %v777, %v765
    %v1078 = vpack.c.b16 %v778, %v766
    %v1079 = vpack.c.b16 %v791, %v779
    %v1080 = vpack.c.b16 %v792, %v780
    %v1081 = vpack.c.b16 %v793, %v781
    %v1082 = vpack.c.b16 %v794, %v782
    %v1083 = vpack.c.b16 %v795, %v783
    %v1084 = vpack.c.b16 %v796, %v784
    %v1085 = vpack.c.b16 %v797, %v785
    %v1086 = vpack.c.b16 %v798, %v786
    %v1087 = vpack.c.b16 %v799, %v787
    %v1088 = vpack.c.b16 %v800, %v788
    %v1089 = vpack.c.b16 %v801, %v789
    %v1090 = vpack.c.b16 %v802, %v790
    %v1091 = vpack.c.b16 %v815, %v803
    %v1092 = vpack.c.b16 %v816, %v804
    %v1093 = vpack.c.b16 %v817, %v805
    %v1094 = vpack.c.b16 %v818, %v806
    %v1095 = vpack.c.b16 %v819, %v807
    %v1096 = vpack.c.b16 %v820, %v808
    %v1097 = vpack.c.b16 %v821, %v809
    %v1098 = vpack.c.b16 %v822, %v810
    %v1099 = vpack.c.b16 %v823, %v811
    %v1100 = vpack.c.b16 %v824, %v812
    %v1101 = vpack.c.b16 %v825, %v813
    %v1102 = vpack.c.b16 %v826, %v814
    %v1103 = vpack.c.b16 %v839, %v827
    %v1104 = vpack.c.b16 %v840, %v828
    %v1105 = vpack.c.b16 %v841, %v829
    %v1106 = vpack.c.b16 %v842, %v830
    %v1107 = vpack.c.b16 %v843, %v831
    %v1108 = vpack.c.b16 %v844, %v832
    %v1109 = vpack.c.b16 %v845, %v833
    %v1110 = vpack.c.b16 %v846, %v834
    %v1111 = vpack.c.b16 %v847, %v835
    %v1112 = vpack.c.b16 %v848, %v836
    %v1113 = vpack.c.b16 %v849, %v837
    %v1114 = vpack.c.b16 %v850, %v838
    %v1115 = vpack.c.b16 %v863, %v851
    %v1116 = vpack.c.b16 %v864, %v852
    %v1117 = vpack.c.b16 %v865, %v853
    %v1118 = vpack.c.b16 %v866, %v854
    %v1119 = vpack.c.b16 %v867, %v855
    %v1120 = vpack.c.b16 %v868, %v856
    %v1121 = vpack.c.b16 %v869, %v857
    %v1122 = vpack.c.b16 %v870, %v858
    %v1123 = vpack.c.b16 %v871, %v859
    %v1124 = vpack.c.b16 %v872, %v860
    %v1125 = vpack.c.b16 %v873, %v861
    %v1126 = vpack.c.b16 %v874, %v862
    %v1127 = vpack.c.b16 %v887, %v875
    %v1128 = vpack.c.b16 %v888, %v876
    %v1129 = vpack.c.b16 %v889, %v877
    %v1130 = vpack.c.b16 %v890, %v878
    %v1131 = vpack.c.b16 %v891, %v879
    %v1132 = vpack.c.b16 %v892, %v880
    %v1133 = vpack.c.b16 %v893, %v881
    %v1134 = vpack.c.b16 %v894, %v882
    %v1135 = vpack.c.b16 %v895, %v883
    %v1136 = vpack.c.b16 %v896, %v884
    %v1137 = vpack.c.b16 %v897, %v885
    %v1138 = vpack.c.b16 %v898, %v886
    %v1139 = vpack.c.b16 %v911, %v899
    %v1140 = vpack.c.b16 %v912, %v900
    %v1141 = vpack.c.b16 %v913, %v901
    %v1142 = vpack.c.b16 %v914, %v902
    %v1143 = vpack.c.b16 %v915, %v903
    %v1144 = vpack.c.b16 %v916, %v904
    %v1145 = vpack.c.b16 %v917, %v905
    %v1146 = vpack.c.b16 %v918, %v906
    %v1147 = vpack.c.b16 %v919, %v907
    %v1148 = vpack.c.b16 %v920, %v908
    %v1149 = vpack.c.b16 %v921, %v909
    %v1150 = vpack.c.b16 %v922, %v910
    %v1151 = vpack.c.b16 %v935, %v923
    %v1152 = vpack.c.b16 %v936, %v924
    %v1153 = vpack.c.b16 %v937, %v925
    %v1154 = vpack.c.b16 %v938, %v926
    %v1155 = vpack.c.b16 %v939, %v927
    %v1156 = vpack.c.b16 %v940, %v928
    %v1157 = vpack.c.b16 %v941, %v929
    %v1158 = vpack.c.b16 %v942, %v930
    %v1159 = vpack.c.b16 %v943, %v931
    %v1160 = vpack.c.b16 %v944, %v932
    %v1161 = vpack.c.b16 %v945, %v933
    %v1162 = vpack.c.b16 %v946, %v934
    %v1163 = vpack.c.b16 %v959, %v947
    %v1164 = vpack.c.b16 %v960, %v948
    %v1165 = vpack.c.b16 %v961, %v949
    %v1166 = vpack.c.b16 %v962, %v950
    %v1167 = vpack.c.b16 %v963, %v951
    %v1168 = vpack.c.b16 %v964, %v952
    %v1169 = vpack.c.b16 %v965, %v953
    %v1170 = vpack.c.b16 %v966, %v954
    %v1171 = vpack.c.b16 %v967, %v955
    %v1172 = vpack.c.b16 %v968, %v956
    %v1173 = vpack.c.b16 %v969, %v957
    %v1174 = vpack.c.b16 %v970, %v958
    %v1175 = vpack.c.b16 %v983, %v971
    %v1176 = vpack.c.b16 %v984, %v972
    %v1177 = vpack.c.b16 %v985, %v973
    %v1178 = vpack.c.b16 %v986, %v974
    %v1179 = vpack.c.b16 %v987, %v975
    %v1180 = vpack.c.b16 %v988, %v976
    %v1181 = vpack.c.b16 %v989, %v977
    %v1182 = vpack.c.b16 %v990, %v978
    %v1183 = vpack.c.b16 %v991, %v979
    %v1184 = vpack.c.b16 %v992, %v980
    %v1185 = vpack.c.b16 %v993, %v981
    %v1186 = vpack.c.b16 %v994, %v982
    %1379 = vmatprep.subr.bf16.mxu0 %v996
    %1380 = vmatpush1.bf16.msra.mxu0 %v995
    %1381 = vmatprep.subr.bf16.mxu0 %v1008
    %1382 = vmatpush1.bf16.msra.mxu0 %v1007
    %1383 = vmatprep.subr.bf16.mxu0 %v1020
    %1384 = vmatpush1.bf16.msra.mxu0 %v1019
    %1385 = vmatprep.subr.bf16.mxu0 %v1032
    %1386 = vmatpush1.bf16.msra.mxu0 %v1031
    %1387 = vmatprep.subr.bf16.mxu0 %v1044
    %1388 = vmatpush1.bf16.msra.mxu0 %v1043
    %1389 = vmatprep.subr.bf16.mxu0 %v1056
    %1390 = vmatpush1.bf16.msra.mxu0 %v1055
    %1391 = vmatprep.subr.bf16.mxu0 %v1068
    %1392 = vmatpush1.bf16.msra.mxu0 %v1067
    %1393 = vmatprep.subr.bf16.mxu0 %v1080
    %1394 = vmatpush1.bf16.msra.mxu0 %v1079
    %1395 = vmatprep.subr.bf16.mxu0 %v1092
    %1396 = vmatpush1.bf16.msra.mxu0 %v1091
    %1397 = vmatprep.subr.bf16.mxu0 %v1104
    %1398 = vmatpush1.bf16.msra.mxu0 %v1103
    %1399 = vmatprep.subr.bf16.mxu0 %v1116
    %1400 = vmatpush1.bf16.msra.mxu0 %v1115
    %1401 = vmatprep.subr.bf16.mxu0 %v1128
    %1402 = vmatpush1.bf16.msra.mxu0 %v1127
    %1403 = vmatprep.subr.bf16.mxu0 %v1140
    %1404 = vmatpush1.bf16.msra.mxu0 %v1139
    %1405 = vmatprep.subr.bf16.mxu0 %v1152
    %1406 = vmatpush1.bf16.msra.mxu0 %v1151
    %1407 = vmatprep.subr.bf16.mxu0 %v1164
    %1408 = vmatpush1.bf16.msra.mxu0 %v1163
    %1409 = vmatprep.subr.bf16.mxu0 %v1176
    %1410 = vmatpush1.bf16.msra.mxu0 %v1175
    %1411 = vmatprep.mubr.bf16.mxu0 %v388
    %1412 = vmatmul.mubr.bf16.gmra.mrb[0].mxu0 %v387
    %v1413 = vpop.f32.mrb[0].mxu0
    %v1414 = vadd.f32 %v282, %v1413
    %v1415 = vpop.f32.mrb[0].mxu0
    %v1416 = vadd.f32 %v286, %v1415
    %v1417 = vpop.f32.mrb[0].mxu0
    %v1418 = vadd.f32 %v282, %v1417
    %v1419 = vpop.f32.mrb[0].mxu0
    %v1420 = vadd.f32 %v286, %v1419
    %1421 = vmatprep.mubr.bf16.mxu0 %v390
    %1422 = vmatmul.mubr.bf16.gmra.mrb[0].mxu0 %v389
    %v1423 = vpop.f32.mrb[0].mxu0
    %v1424 = vadd.f32 %v282, %v1423
    %v1425 = vpop.f32.mrb[0].mxu0
    %v1426 = vadd.f32 %v286, %v1425
    %v1427 = vpop.f32.mrb[0].mxu0
    %v1428 = vadd.f32 %v282, %v1427
    %v1429 = vpop.f32.mrb[0].mxu0
    %v1430 = vadd.f32 %v286, %v1429
    %1431 = vmatprep.mubr.bf16.mxu0 %v392
    %1432 = vmatmul.mubr.bf16.gmra.mrb[0].mxu0 %v391
    %v1433 = vpop.f32.mrb[0].mxu0
    %v1434 = vadd.f32 %v282, %v1433
    %v1435 = vpop.f32.mrb[0].mxu0
    %v1436 = vadd.f32 %v286, %v1435
    %v1437 = vpop.f32.mrb[0].mxu0
    %v1438 = vadd.f32 %v282, %v1437
    %v1439 = vpop.f32.mrb[0].mxu0
    %v1440 = vadd.f32 %v286, %v1439
    %1441 = vmatprep.mubr.bf16.mxu0 %v394
    %1442 = vmatmul.mubr.bf16.gmra.mrb[0].mxu0 %v393
    %v1443 = vpop.f32.mrb[0].mxu0
    %v1444 = vadd.f32 %v282, %v1443
    %v1445 = vpop.f32.mrb[0].mxu0
    %v1446 = vadd.f32 %v286, %v1445
    %v1447 = vpop.f32.mrb[0].mxu0
    %v1448 = vadd.f32 %v282, %v1447
    %v1449 = vpop.f32.mrb[0].mxu0
    %v1450 = vadd.f32 %v286, %v1449
    %1451 = vmatprep.mubr.bf16.mxu0 %v396
    %1452 = vmatmul.mubr.bf16.gmra.mrb[0].mxu0 %v395
    %v1453 = vpop.f32.mrb[0].mxu0
    %v1454 = vadd.f32 %v282, %v1453
    %v1455 = vpop.f32.mrb[0].mxu0
    %v1456 = vadd.f32 %v286, %v1455
    %v1457 = vpop.f32.mrb[0].mxu0
    %v1458 = vadd.f32 %v282, %v1457
    %v1459 = vpop.f32.mrb[0].mxu0
    %v1460 = vadd.f32 %v286, %v1459
    %1461 = vmatprep.mubr.bf16.mxu0 %v398
    %1462 = vmatmul.mubr.bf16.gmra.mrb[0].mxu0 %v397
    %v1463 = vpop.f32.mrb[0].mxu0
    %v1464 = vadd.f32 %v282, %v1463
    %v1465 = vpop.f32.mrb[0].mxu0
    %v1466 = vadd.f32 %v286, %v1465
    %v1467 = vpop.f32.mrb[0].mxu0
    %v1468 = vadd.f32 %v282, %v1467
    %v1469 = vpop.f32.mrb[0].mxu0
    %v1470 = vadd.f32 %v286, %v1469
    %1471 = vmatprep.mubr.bf16.mxu0 %v400
    %1472 = vmatmul.mubr.bf16.gmra.mrb[0].mxu0 %v399
    %v1473 = vpop.f32.mrb[0].mxu0
    %v1474 = vadd.f32 %v282, %v1473
    %v1475 = vpop.f32.mrb[0].mxu0
    %v1476 = vadd.f32 %v286, %v1475
    %v1477 = vpop.f32.mrb[0].mxu0
    %v1478 = vadd.f32 %v282, %v1477
    %v1479 = vpop.f32.mrb[0].mxu0
    %v1480 = vadd.f32 %v286, %v1479
    %1481 = vmatprep.mubr.bf16.mxu0 %v402
    %1482 = vmatmul.mubr.bf16.gmra.mrb[0].mxu0 %v401
    %v1483 = vpop.f32.mrb[0].mxu0
    %v1484 = vadd.f32 %v282, %v1483
    %v1485 = vpop.f32.mrb[0].mxu0
    %v1486 = vadd.f32 %v286, %v1485
    %v1487 = vpop.f32.mrb[0].mxu0
    %v1488 = vadd.f32 %v282, %v1487
    %v1489 = vpop.f32.mrb[0].mxu0
    %v1490 = vadd.f32 %v286, %v1489
    %1491 = vdwg.mxu0
    %1492 = vmatprep.subr.bf16.mxu0 %v998
    %1493 = vmatpush1.bf16.msra.mxu0 %v997
    %1494 = vmatprep.subr.bf16.mxu0 %v1010
    %1495 = vmatpush1.bf16.msra.mxu0 %v1009
    %1496 = vmatprep.subr.bf16.mxu0 %v1022
    %1497 = vmatpush1.bf16.msra.mxu0 %v1021
    %1498 = vmatprep.subr.bf16.mxu0 %v1034
    %1499 = vmatpush1.bf16.msra.mxu0 %v1033
    %1500 = vmatprep.subr.bf16.mxu0 %v1046
    %1501 = vmatpush1.bf16.msra.mxu0 %v1045
    %1502 = vmatprep.subr.bf16.mxu0 %v1058
    %1503 = vmatpush1.bf16.msra.mxu0 %v1057
    %1504 = vmatprep.subr.bf16.mxu0 %v1070
    %1505 = vmatpush1.bf16.msra.mxu0 %v1069
    %1506 = vmatprep.subr.bf16.mxu0 %v1082
    %1507 = vmatpush1.bf16.msra.mxu0 %v1081
    %1508 = vmatprep.subr.bf16.mxu0 %v1094
    %1509 = vmatpush1.bf16.msra.mxu0 %v1093
    %1510 = vmatprep.subr.bf16.mxu0 %v1106
    %1511 = vmatpush1.bf16.msra.mxu0 %v1105
    %1512 = vmatprep.subr.bf16.mxu0 %v1118
    %1513 = vmatpush1.bf16.msra.mxu0 %v1117
    %1514 = vmatprep.subr.bf16.mxu0 %v1130
    %1515 = vmatpush1.bf16.msra.mxu0 %v1129
    %1516 = vmatprep.subr.bf16.mxu0 %v1142
    %1517 = vmatpush1.bf16.msra.mxu0 %v1141
    %1518 = vmatprep.subr.bf16.mxu0 %v1154
    %1519 = vmatpush1.bf16.msra.mxu0 %v1153
    %1520 = vmatprep.subr.bf16.mxu0 %v1166
    %1521 = vmatpush1.bf16.msra.mxu0 %v1165
    %1522 = vmatprep.subr.bf16.mxu0 %v1178
    %1523 = vmatpush1.bf16.msra.mxu0 %v1177
    %1524 = vmatprep.mubr.bf16.mxu0 %v388
    %1525 = vmatmul.mubr.bf16.gmra.mrb[0].mxu0 %v387
    %v1526 = vpop.f32.mrb[0].mxu0
    %v1527 = vadd.f32 %v290, %v1526
    %v1528 = vpop.f32.mrb[0].mxu0
    %v1529 = vadd.f32 %v294, %v1528
    %v1530 = vpop.f32.mrb[0].mxu0
    %v1531 = vadd.f32 %v290, %v1530
    %v1532 = vpop.f32.mrb[0].mxu0
    %v1533 = vadd.f32 %v294, %v1532
    %1534 = vmatprep.mubr.bf16.mxu0 %v390
    %1535 = vmatmul.mubr.bf16.gmra.mrb[0].mxu0 %v389
    %v1536 = vpop.f32.mrb[0].mxu0
    %v1537 = vadd.f32 %v290, %v1536
    %v1538 = vpop.f32.mrb[0].mxu0
    %v1539 = vadd.f32 %v294, %v1538
    %v1540 = vpop.f32.mrb[0].mxu0
    %v1541 = vadd.f32 %v290, %v1540
    %v1542 = vpop.f32.mrb[0].mxu0
    %v1543 = vadd.f32 %v294, %v1542
    %1544 = vmatprep.mubr.bf16.mxu0 %v392
    %1545 = vmatmul.mubr.bf16.gmra.mrb[0].mxu0 %v391
    %v1546 = vpop.f32.mrb[0].mxu0
    %v1547 = vadd.f32 %v290, %v1546
    %v1548 = vpop.f32.mrb[0].mxu0
    %v1549 = vadd.f32 %v294, %v1548
    %v1550 = vpop.f32.mrb[0].mxu0
    %v1551 = vadd.f32 %v290, %v1550
    %v1552 = vpop.f32.mrb[0].mxu0
    %v1553 = vadd.f32 %v294, %v1552
    %1554 = vmatprep.mubr.bf16.mxu0 %v394
    %1555 = vmatmul.mubr.bf16.gmra.mrb[0].mxu0 %v393
    %v1556 = vpop.f32.mrb[0].mxu0
    %v1557 = vadd.f32 %v290, %v1556
    %v1558 = vpop.f32.mrb[0].mxu0
    %v1559 = vadd.f32 %v294, %v1558
    %v1560 = vpop.f32.mrb[0].mxu0
    %v1561 = vadd.f32 %v290, %v1560
    %v1562 = vpop.f32.mrb[0].mxu0
    %v1563 = vadd.f32 %v294, %v1562
    %1564 = vmatprep.mubr.bf16.mxu0 %v396
    %1565 = vmatmul.mubr.bf16.gmra.mrb[0].mxu0 %v395
    %v1566 = vpop.f32.mrb[0].mxu0
    %v1567 = vadd.f32 %v290, %v1566
    %v1568 = vpop.f32.mrb[0].mxu0
    %v1569 = vadd.f32 %v294, %v1568
    %v1570 = vpop.f32.mrb[0].mxu0
    %v1571 = vadd.f32 %v290, %v1570
    %v1572 = vpop.f32.mrb[0].mxu0
    %v1573 = vadd.f32 %v294, %v1572
    %1574 = vmatprep.mubr.bf16.mxu0 %v398
    %1575 = vmatmul.mubr.bf16.gmra.mrb[0].mxu0 %v397
    %v1576 = vpop.f32.mrb[0].mxu0
    %v1577 = vadd.f32 %v290, %v1576
    %v1578 = vpop.f32.mrb[0].mxu0
    %v1579 = vadd.f32 %v294, %v1578
    %v1580 = vpop.f32.mrb[0].mxu0
    %v1581 = vadd.f32 %v290, %v1580
    %v1582 = vpop.f32.mrb[0].mxu0
    %v1583 = vadd.f32 %v294, %v1582
    %1584 = vmatprep.mubr.bf16.mxu0 %v400
    %1585 = vmatmul.mubr.bf16.gmra.mrb[0].mxu0 %v399
    %v1586 = vpop.f32.mrb[0].mxu0
    %v1587 = vadd.f32 %v290, %v1586
    %v1588 = vpop.f32.mrb[0].mxu0
    %v1589 = vadd.f32 %v294, %v1588
    %v1590 = vpop.f32.mrb[0].mxu0
    %v1591 = vadd.f32 %v290, %v1590
    %v1592 = vpop.f32.mrb[0].mxu0
    %v1593 = vadd.f32 %v294, %v1592
    %1594 = vmatprep.mubr.bf16.mxu0 %v402
    %1595 = vmatmul.mubr.bf16.gmra.mrb[0].mxu0 %v401
    %v1596 = vpop.f32.mrb[0].mxu0
    %v1597 = vadd.f32 %v290, %v1596
    %v1598 = vpop.f32.mrb[0].mxu0
    %v1599 = vadd.f32 %v294, %v1598
    %v1600 = vpop.f32.mrb[0].mxu0
    %v1601 = vadd.f32 %v290, %v1600
    %v1602 = vpop.f32.mrb[0].mxu0
    %v1603 = vadd.f32 %v294, %v1602
    %1604 = vdwg.mxu0
    %1605 = vmatprep.subr.bf16.mxu0 %v1000
    %1606 = vmatpush1.bf16.msra.mxu0 %v999
    %1607 = vmatprep.subr.bf16.mxu0 %v1012
    %1608 = vmatpush1.bf16.msra.mxu0 %v1011
    %1609 = vmatprep.subr.bf16.mxu0 %v1024
    %1610 = vmatpush1.bf16.msra.mxu0 %v1023
    %1611 = vmatprep.subr.bf16.mxu0 %v1036
    %1612 = vmatpush1.bf16.msra.mxu0 %v1035
    %1613 = vmatprep.subr.bf16.mxu0 %v1048
    %1614 = vmatpush1.bf16.msra.mxu0 %v1047
    %1615 = vmatprep.subr.bf16.mxu0 %v1060
    %1616 = vmatpush1.bf16.msra.mxu0 %v1059
    %1617 = vmatprep.subr.bf16.mxu0 %v1072
    %1618 = vmatpush1.bf16.msra.mxu0 %v1071
    %1619 = vmatprep.subr.bf16.mxu0 %v1084
    %1620 = vmatpush1.bf16.msra.mxu0 %v1083
    %1621 = vmatprep.subr.bf16.mxu0 %v1096
    %1622 = vmatpush1.bf16.msra.mxu0 %v1095
    %1623 = vmatprep.subr.bf16.mxu0 %v1108
    %1624 = vmatpush1.bf16.msra.mxu0 %v1107
    %1625 = vmatprep.subr.bf16.mxu0 %v1120
    %1626 = vmatpush1.bf16.msra.mxu0 %v1119
    %1627 = vmatprep.subr.bf16.mxu0 %v1132
    %1628 = vmatpush1.bf16.msra.mxu0 %v1131
    %1629 = vmatprep.subr.bf16.mxu0 %v1144
    %1630 = vmatpush1.bf16.msra.mxu0 %v1143
    %1631 = vmatprep.subr.bf16.mxu0 %v1156
    %1632 = vmatpush1.bf16.msra.mxu0 %v1155
    %1633 = vmatprep.subr.bf16.mxu0 %v1168
    %1634 = vmatpush1.bf16.msra.mxu0 %v1167
    %1635 = vmatprep.subr.bf16.mxu0 %v1180
    %1636 = vmatpush1.bf16.msra.mxu0 %v1179
    %1637 = vmatprep.mubr.bf16.mxu0 %v388
    %1638 = vmatmul.mubr.bf16.gmra.mrb[0].mxu0 %v387
    %v1639 = vpop.f32.mrb[0].mxu0
    %v1640 = vadd.f32 %v298, %v1639
    %v1641 = vpop.f32.mrb[0].mxu0
    %v1642 = vadd.f32 %v302, %v1641
    %v1643 = vpop.f32.mrb[0].mxu0
    %v1644 = vadd.f32 %v298, %v1643
    %v1645 = vpop.f32.mrb[0].mxu0
    %v1646 = vadd.f32 %v302, %v1645
    %1647 = vmatprep.mubr.bf16.mxu0 %v390
    %1648 = vmatmul.mubr.bf16.gmra.mrb[0].mxu0 %v389
    %v1649 = vpop.f32.mrb[0].mxu0
    %v1650 = vadd.f32 %v298, %v1649
    %v1651 = vpop.f32.mrb[0].mxu0
    %v1652 = vadd.f32 %v302, %v1651
    %v1653 = vpop.f32.mrb[0].mxu0
    %v1654 = vadd.f32 %v298, %v1653
    %v1655 = vpop.f32.mrb[0].mxu0
    %v1656 = vadd.f32 %v302, %v1655
    %1657 = vmatprep.mubr.bf16.mxu0 %v392
    %1658 = vmatmul.mubr.bf16.gmra.mrb[0].mxu0 %v391
    %v1659 = vpop.f32.mrb[0].mxu0
    %v1660 = vadd.f32 %v298, %v1659
    %v1661 = vpop.f32.mrb[0].mxu0
    %v1662 = vadd.f32 %v302, %v1661
    %v1663 = vpop.f32.mrb[0].mxu0
    %v1664 = vadd.f32 %v298, %v1663
    %v1665 = vpop.f32.mrb[0].mxu0
    %v1666 = vadd.f32 %v302, %v1665
    %1667 = vmatprep.mubr.bf16.mxu0 %v394
    %1668 = vmatmul.mubr.bf16.gmra.mrb[0].mxu0 %v393
    %v1669 = vpop.f32.mrb[0].mxu0
    %v1670 = vadd.f32 %v298, %v1669
    %v1671 = vpop.f32.mrb[0].mxu0
    %v1672 = vadd.f32 %v302, %v1671
    %v1673 = vpop.f32.mrb[0].mxu0
    %v1674 = vadd.f32 %v298, %v1673
    %v1675 = vpop.f32.mrb[0].mxu0
    %v1676 = vadd.f32 %v302, %v1675
    %1677 = vmatprep.mubr.bf16.mxu0 %v396
    %1678 = vmatmul.mubr.bf16.gmra.mrb[0].mxu0 %v395
    %v1679 = vpop.f32.mrb[0].mxu0
    %v1680 = vadd.f32 %v298, %v1679
    %v1681 = vpop.f32.mrb[0].mxu0
    %v1682 = vadd.f32 %v302, %v1681
    %v1683 = vpop.f32.mrb[0].mxu0
    %v1684 = vadd.f32 %v298, %v1683
    %v1685 = vpop.f32.mrb[0].mxu0
    %v1686 = vadd.f32 %v302, %v1685
    %1687 = vmatprep.mubr.bf16.mxu0 %v398
    %1688 = vmatmul.mubr.bf16.gmra.mrb[0].mxu0 %v397
    %v1689 = vpop.f32.mrb[0].mxu0
    %v1690 = vadd.f32 %v298, %v1689
    %v1691 = vpop.f32.mrb[0].mxu0
    %v1692 = vadd.f32 %v302, %v1691
    %v1693 = vpop.f32.mrb[0].mxu0
    %v1694 = vadd.f32 %v298, %v1693
    %v1695 = vpop.f32.mrb[0].mxu0
    %v1696 = vadd.f32 %v302, %v1695
    %1697 = vmatprep.mubr.bf16.mxu0 %v400
    %1698 = vmatmul.mubr.bf16.gmra.mrb[0].mxu0 %v399
    %v1699 = vpop.f32.mrb[0].mxu0
    %v1700 = vadd.f32 %v298, %v1699
    %v1701 = vpop.f32.mrb[0].mxu0
    %v1702 = vadd.f32 %v302, %v1701
    %v1703 = vpop.f32.mrb[0].mxu0
    %v1704 = vadd.f32 %v298, %v1703
    %v1705 = vpop.f32.mrb[0].mxu0
    %v1706 = vadd.f32 %v302, %v1705
    %1707 = vmatprep.mubr.bf16.mxu0 %v402
    %1708 = vmatmul.mubr.bf16.gmra.mrb[0].mxu0 %v401
    %v1709 = vpop.f32.mrb[0].mxu0
    %v1710 = vadd.f32 %v298, %v1709
    %v1711 = vpop.f32.mrb[0].mxu0
    %v1712 = vadd.f32 %v302, %v1711
    %v1713 = vpop.f32.mrb[0].mxu0
    %v1714 = vadd.f32 %v298, %v1713
    %v1715 = vpop.f32.mrb[0].mxu0
    %v1716 = vadd.f32 %v302, %v1715
    %1717 = vdwg.mxu0
    %1718 = vmatprep.subr.bf16.mxu0 %v1002
    %1719 = vmatpush1.bf16.msra.mxu0 %v1001
    %1720 = vmatprep.subr.bf16.mxu0 %v1014
    %1721 = vmatpush1.bf16.msra.mxu0 %v1013
    %1722 = vmatprep.subr.bf16.mxu0 %v1026
    %1723 = vmatpush1.bf16.msra.mxu0 %v1025
    %1724 = vmatprep.subr.bf16.mxu0 %v1038
    %1725 = vmatpush1.bf16.msra.mxu0 %v1037
    %1726 = vmatprep.subr.bf16.mxu0 %v1050
    %1727 = vmatpush1.bf16.msra.mxu0 %v1049
    %1728 = vmatprep.subr.bf16.mxu0 %v1062
    %1729 = vmatpush1.bf16.msra.mxu0 %v1061
    %1730 = vmatprep.subr.bf16.mxu0 %v1074
    %1731 = vmatpush1.bf16.msra.mxu0 %v1073
    %1732 = vmatprep.subr.bf16.mxu0 %v1086
    %1733 = vmatpush1.bf16.msra.mxu0 %v1085
    %1734 = vmatprep.subr.bf16.mxu0 %v1098
    %1735 = vmatpush1.bf16.msra.mxu0 %v1097
    %1736 = vmatprep.subr.bf16.mxu0 %v1110
    %1737 = vmatpush1.bf16.msra.mxu0 %v1109
    %1738 = vmatprep.subr.bf16.mxu0 %v1122
    %1739 = vmatpush1.bf16.msra.mxu0 %v1121
    %1740 = vmatprep.subr.bf16.mxu0 %v1134
    %1741 = vmatpush1.bf16.msra.mxu0 %v1133
    %1742 = vmatprep.subr.bf16.mxu0 %v1146
    %1743 = vmatpush1.bf16.msra.mxu0 %v1145
    %1744 = vmatprep.subr.bf16.mxu0 %v1158
    %1745 = vmatpush1.bf16.msra.mxu0 %v1157
    %1746 = vmatprep.subr.bf16.mxu0 %v1170
    %1747 = vmatpush1.bf16.msra.mxu0 %v1169
    %1748 = vmatprep.subr.bf16.mxu0 %v1182
    %1749 = vmatpush1.bf16.msra.mxu0 %v1181
    %1750 = vmatprep.mubr.bf16.mxu0 %v388
    %1751 = vmatmul.mubr.bf16.gmra.mrb[0].mxu0 %v387
    %v1752 = vpop.f32.mrb[0].mxu0
    %v1753 = vadd.f32 %v306, %v1752
    %v1754 = vpop.f32.mrb[0].mxu0
    %v1755 = vadd.f32 %v310, %v1754
    %v1756 = vpop.f32.mrb[0].mxu0
    %v1757 = vadd.f32 %v306, %v1756
    %v1758 = vpop.f32.mrb[0].mxu0
    %v1759 = vadd.f32 %v310, %v1758
    %1760 = vmatprep.mubr.bf16.mxu0 %v390
    %1761 = vmatmul.mubr.bf16.gmra.mrb[0].mxu0 %v389
    %v1762 = vpop.f32.mrb[0].mxu0
    %v1763 = vadd.f32 %v306, %v1762
    %v1764 = vpop.f32.mrb[0].mxu0
    %v1765 = vadd.f32 %v310, %v1764
    %v1766 = vpop.f32.mrb[0].mxu0
    %v1767 = vadd.f32 %v306, %v1766
    %v1768 = vpop.f32.mrb[0].mxu0
    %v1769 = vadd.f32 %v310, %v1768
    %1770 = vmatprep.mubr.bf16.mxu0 %v392
    %1771 = vmatmul.mubr.bf16.gmra.mrb[0].mxu0 %v391
    %v1772 = vpop.f32.mrb[0].mxu0
    %v1773 = vadd.f32 %v306, %v1772
    %v1774 = vpop.f32.mrb[0].mxu0
    %v1775 = vadd.f32 %v310, %v1774
    %v1776 = vpop.f32.mrb[0].mxu0
    %v1777 = vadd.f32 %v306, %v1776
    %v1778 = vpop.f32.mrb[0].mxu0
    %v1779 = vadd.f32 %v310, %v1778
    %1780 = vmatprep.mubr.bf16.mxu0 %v394
    %1781 = vmatmul.mubr.bf16.gmra.mrb[0].mxu0 %v393
    %v1782 = vpop.f32.mrb[0].mxu0
    %v1783 = vadd.f32 %v306, %v1782
    %v1784 = vpop.f32.mrb[0].mxu0
    %v1785 = vadd.f32 %v310, %v1784
    %v1786 = vpop.f32.mrb[0].mxu0
    %v1787 = vadd.f32 %v306, %v1786
    %v1788 = vpop.f32.mrb[0].mxu0
    %v1789 = vadd.f32 %v310, %v1788
    %1790 = vmatprep.mubr.bf16.mxu0 %v396
    %1791 = vmatmul.mubr.bf16.gmra.mrb[0].mxu0 %v395
    %v1792 = vpop.f32.mrb[0].mxu0
    %v1793 = vadd.f32 %v306, %v1792
    %v1794 = vpop.f32.mrb[0].mxu0
    %v1795 = vadd.f32 %v310, %v1794
    %v1796 = vpop.f32.mrb[0].mxu0
    %v1797 = vadd.f32 %v306, %v1796
    %v1798 = vpop.f32.mrb[0].mxu0
    %v1799 = vadd.f32 %v310, %v1798
    %1800 = vmatprep.mubr.bf16.mxu0 %v398
    %1801 = vmatmul.mubr.bf16.gmra.mrb[0].mxu0 %v397
    %v1802 = vpop.f32.mrb[0].mxu0
    %v1803 = vadd.f32 %v306, %v1802
    %v1804 = vpop.f32.mrb[0].mxu0
    %v1805 = vadd.f32 %v310, %v1804
    %v1806 = vpop.f32.mrb[0].mxu0
    %v1807 = vadd.f32 %v306, %v1806
    %v1808 = vpop.f32.mrb[0].mxu0
    %v1809 = vadd.f32 %v310, %v1808
    %1810 = vmatprep.mubr.bf16.mxu0 %v400
    %1811 = vmatmul.mubr.bf16.gmra.mrb[0].mxu0 %v399
    %v1812 = vpop.f32.mrb[0].mxu0
    %v1813 = vadd.f32 %v306, %v1812
    %v1814 = vpop.f32.mrb[0].mxu0
    %v1815 = vadd.f32 %v310, %v1814
    %v1816 = vpop.f32.mrb[0].mxu0
    %v1817 = vadd.f32 %v306, %v1816
    %v1818 = vpop.f32.mrb[0].mxu0
    %v1819 = vadd.f32 %v310, %v1818
    %1820 = vmatprep.mubr.bf16.mxu0 %v402
    %1821 = vmatmul.mubr.bf16.gmra.mrb[0].mxu0 %v401
    %v1822 = vpop.f32.mrb[0].mxu0
    %v1823 = vadd.f32 %v306, %v1822
    %v1824 = vpop.f32.mrb[0].mxu0
    %v1825 = vadd.f32 %v310, %v1824
    %v1826 = vpop.f32.mrb[0].mxu0
    %v1827 = vadd.f32 %v306, %v1826
    %v1828 = vpop.f32.mrb[0].mxu0
    %v1829 = vadd.f32 %v310, %v1828
    %1830 = vdwg.mxu0
    %1831 = vmatprep.subr.bf16.mxu0 %v1004
    %1832 = vmatpush1.bf16.msra.mxu0 %v1003
    %1833 = vmatprep.subr.bf16.mxu0 %v1016
    %1834 = vmatpush1.bf16.msra.mxu0 %v1015
    %1835 = vmatprep.subr.bf16.mxu0 %v1028
    %1836 = vmatpush1.bf16.msra.mxu0 %v1027
    %1837 = vmatprep.subr.bf16.mxu0 %v1040
    %1838 = vmatpush1.bf16.msra.mxu0 %v1039
    %1839 = vmatprep.subr.bf16.mxu0 %v1052
    %1840 = vmatpush1.bf16.msra.mxu0 %v1051
    %1841 = vmatprep.subr.bf16.mxu0 %v1064
    %1842 = vmatpush1.bf16.msra.mxu0 %v1063
    %1843 = vmatprep.subr.bf16.mxu0 %v1076
    %1844 = vmatpush1.bf16.msra.mxu0 %v1075
    %1845 = vmatprep.subr.bf16.mxu0 %v1088
    %1846 = vmatpush1.bf16.msra.mxu0 %v1087
    %1847 = vmatprep.subr.bf16.mxu0 %v1100
    %1848 = vmatpush1.bf16.msra.mxu0 %v1099
    %1849 = vmatprep.subr.bf16.mxu0 %v1112
    %1850 = vmatpush1.bf16.msra.mxu0 %v1111
    %1851 = vmatprep.subr.bf16.mxu0 %v1124
    %1852 = vmatpush1.bf16.msra.mxu0 %v1123
    %1853 = vmatprep.subr.bf16.mxu0 %v1136
    %1854 = vmatpush1.bf16.msra.mxu0 %v1135
    %1855 = vmatprep.subr.bf16.mxu0 %v1148
    %1856 = vmatpush1.bf16.msra.mxu0 %v1147
    %1857 = vmatprep.subr.bf16.mxu0 %v1160
    %1858 = vmatpush1.bf16.msra.mxu0 %v1159
    %1859 = vmatprep.subr.bf16.mxu0 %v1172
    %1860 = vmatpush1.bf16.msra.mxu0 %v1171
    %1861 = vmatprep.subr.bf16.mxu0 %v1184
    %1862 = vmatpush1.bf16.msra.mxu0 %v1183
    %1863 = vmatprep.mubr.bf16.mxu0 %v388
    %1864 = vmatmul.mubr.bf16.gmra.mrb[0].mxu0 %v387
    %v1865 = vpop.f32.mrb[0].mxu0
    %v1866 = vadd.f32 %v314, %v1865
    %v1867 = vpop.f32.mrb[0].mxu0
    %v1868 = vadd.f32 %v318, %v1867
    %v1869 = vpop.f32.mrb[0].mxu0
    %v1870 = vadd.f32 %v314, %v1869
    %v1871 = vpop.f32.mrb[0].mxu0
    %v1872 = vadd.f32 %v318, %v1871
    %1873 = vmatprep.mubr.bf16.mxu0 %v390
    %1874 = vmatmul.mubr.bf16.gmra.mrb[0].mxu0 %v389
    %v1875 = vpop.f32.mrb[0].mxu0
    %v1876 = vadd.f32 %v314, %v1875
    %v1877 = vpop.f32.mrb[0].mxu0
    %v1878 = vadd.f32 %v318, %v1877
    %v1879 = vpop.f32.mrb[0].mxu0
    %v1880 = vadd.f32 %v314, %v1879
    %v1881 = vpop.f32.mrb[0].mxu0
    %v1882 = vadd.f32 %v318, %v1881
    %1883 = vmatprep.mubr.bf16.mxu0 %v392
    %1884 = vmatmul.mubr.bf16.gmra.mrb[0].mxu0 %v391
    %v1885 = vpop.f32.mrb[0].mxu0
    %v1886 = vadd.f32 %v314, %v1885
    %v1887 = vpop.f32.mrb[0].mxu0
    %v1888 = vadd.f32 %v318, %v1887
    %v1889 = vpop.f32.mrb[0].mxu0
    %v1890 = vadd.f32 %v314, %v1889
    %v1891 = vpop.f32.mrb[0].mxu0
    %v1892 = vadd.f32 %v318, %v1891
    %1893 = vmatprep.mubr.bf16.mxu0 %v394
    %1894 = vmatmul.mubr.bf16.gmra.mrb[0].mxu0 %v393
    %v1895 = vpop.f32.mrb[0].mxu0
    %v1896 = vadd.f32 %v314, %v1895
    %v1897 = vpop.f32.mrb[0].mxu0
    %v1898 = vadd.f32 %v318, %v1897
    %v1899 = vpop.f32.mrb[0].mxu0
    %v1900 = vadd.f32 %v314, %v1899
    %v1901 = vpop.f32.mrb[0].mxu0
    %v1902 = vadd.f32 %v318, %v1901
    %1903 = vmatprep.mubr.bf16.mxu0 %v396
    %1904 = vmatmul.mubr.bf16.gmra.mrb[0].mxu0 %v395
    %v1905 = vpop.f32.mrb[0].mxu0
    %v1906 = vadd.f32 %v314, %v1905
    %v1907 = vpop.f32.mrb[0].mxu0
    %v1908 = vadd.f32 %v318, %v1907
    %v1909 = vpop.f32.mrb[0].mxu0
    %v1910 = vadd.f32 %v314, %v1909
    %v1911 = vpop.f32.mrb[0].mxu0
    %v1912 = vadd.f32 %v318, %v1911
    %1913 = vmatprep.mubr.bf16.mxu0 %v398
    %1914 = vmatmul.mubr.bf16.gmra.mrb[0].mxu0 %v397
    %v1915 = vpop.f32.mrb[0].mxu0
    %v1916 = vadd.f32 %v314, %v1915
    %v1917 = vpop.f32.mrb[0].mxu0
    %v1918 = vadd.f32 %v318, %v1917
    %v1919 = vpop.f32.mrb[0].mxu0
    %v1920 = vadd.f32 %v314, %v1919
    %v1921 = vpop.f32.mrb[0].mxu0
    %v1922 = vadd.f32 %v318, %v1921
    %1923 = vmatprep.mubr.bf16.mxu0 %v400
    %1924 = vmatmul.mubr.bf16.gmra.mrb[0].mxu0 %v399
    %v1925 = vpop.f32.mrb[0].mxu0
    %v1926 = vadd.f32 %v314, %v1925
    %v1927 = vpop.f32.mrb[0].mxu0
    %v1928 = vadd.f32 %v318, %v1927
    %v1929 = vpop.f32.mrb[0].mxu0
    %v1930 = vadd.f32 %v314, %v1929
    %v1931 = vpop.f32.mrb[0].mxu0
    %v1932 = vadd.f32 %v318, %v1931
    %1933 = vmatprep.mubr.bf16.mxu0 %v402
    %1934 = vmatmul.mubr.bf16.gmra.mrb[0].mxu0 %v401
    %v1935 = vpop.f32.mrb[0].mxu0
    %v1936 = vadd.f32 %v314, %v1935
    %v1937 = vpop.f32.mrb[0].mxu0
    %v1938 = vadd.f32 %v318, %v1937
    %v1939 = vpop.f32.mrb[0].mxu0
    %v1940 = vadd.f32 %v314, %v1939
    %v1941 = vpop.f32.mrb[0].mxu0
    %v1942 = vadd.f32 %v318, %v1941
    %1943 = vdwg.mxu0
    %1944 = vmatprep.subr.bf16.mxu0 %v1006
    %1945 = vmatpush1.bf16.msra.mxu0 %v1005
    %1946 = vmatprep.subr.bf16.mxu0 %v1018
    %1947 = vmatpush1.bf16.msra.mxu0 %v1017
    %1948 = vmatprep.subr.bf16.mxu0 %v1030
    %1949 = vmatpush1.bf16.msra.mxu0 %v1029
    %1950 = vmatprep.subr.bf16.mxu0 %v1042
    %1951 = vmatpush1.bf16.msra.mxu0 %v1041
    %1952 = vmatprep.subr.bf16.mxu0 %v1054
    %1953 = vmatpush1.bf16.msra.mxu0 %v1053
    %1954 = vmatprep.subr.bf16.mxu0 %v1066
    %1955 = vmatpush1.bf16.msra.mxu0 %v1065
    %1956 = vmatprep.subr.bf16.mxu0 %v1078
    %1957 = vmatpush1.bf16.msra.mxu0 %v1077
    %1958 = vmatprep.subr.bf16.mxu0 %v1090
    %1959 = vmatpush1.bf16.msra.mxu0 %v1089
    %1960 = vmatprep.subr.bf16.mxu0 %v1102
    %1961 = vmatpush1.bf16.msra.mxu0 %v1101
    %1962 = vmatprep.subr.bf16.mxu0 %v1114
    %1963 = vmatpush1.bf16.msra.mxu0 %v1113
    %1964 = vmatprep.subr.bf16.mxu0 %v1126
    %1965 = vmatpush1.bf16.msra.mxu0 %v1125
    %1966 = vmatprep.subr.bf16.mxu0 %v1138
    %1967 = vmatpush1.bf16.msra.mxu0 %v1137
    %1968 = vmatprep.subr.bf16.mxu0 %v1150
    %1969 = vmatpush1.bf16.msra.mxu0 %v1149
    %1970 = vmatprep.subr.bf16.mxu0 %v1162
    %1971 = vmatpush1.bf16.msra.mxu0 %v1161
    %1972 = vmatprep.subr.bf16.mxu0 %v1174
    %1973 = vmatpush1.bf16.msra.mxu0 %v1173
    %1974 = vmatprep.subr.bf16.mxu0 %v1186
    %1975 = vmatpush1.bf16.msra.mxu0 %v1185
    %1976 = vmatprep.mubr.bf16.mxu0 %v388
    %1977 = vmatmul.mubr.bf16.gmra.mrb[0].mxu0 %v387
    %v1978 = vpop.f32.mrb[0].mxu0
    %v1979 = vadd.f32 %v322, %v1978
    %v1980 = vpop.f32.mrb[0].mxu0
    %v1981 = vadd.f32 %v326, %v1980
    %v1982 = vpop.f32.mrb[0].mxu0
    %v1983 = vadd.f32 %v322, %v1982
    %v1984 = vpop.f32.mrb[0].mxu0
    %v1985 = vadd.f32 %v326, %v1984
    %1986 = vmatprep.mubr.bf16.mxu0 %v390
    %1987 = vmatmul.mubr.bf16.gmra.mrb[0].mxu0 %v389
    %v1988 = vpop.f32.mrb[0].mxu0
    %v1989 = vadd.f32 %v322, %v1988
    %v1990 = vpop.f32.mrb[0].mxu0
    %v1991 = vadd.f32 %v326, %v1990
    %v1992 = vpop.f32.mrb[0].mxu0
    %v1993 = vadd.f32 %v322, %v1992
    %v1994 = vpop.f32.mrb[0].mxu0
    %v1995 = vadd.f32 %v326, %v1994
    %1996 = vmatprep.mubr.bf16.mxu0 %v392
    %1997 = vmatmul.mubr.bf16.gmra.mrb[0].mxu0 %v391
    %v1998 = vpop.f32.mrb[0].mxu0
    %v1999 = vadd.f32 %v322, %v1998
    %v2000 = vpop.f32.mrb[0].mxu0
    %v2001 = vadd.f32 %v326, %v2000
    %v2002 = vpop.f32.mrb[0].mxu0
    %v2003 = vadd.f32 %v322, %v2002
    %v2004 = vpop.f32.mrb[0].mxu0
    %v2005 = vadd.f32 %v326, %v2004
    %2006 = vmatprep.mubr.bf16.mxu0 %v394
    %2007 = vmatmul.mubr.bf16.gmra.mrb[0].mxu0 %v393
    %v2008 = vpop.f32.mrb[0].mxu0
    %v2009 = vadd.f32 %v322, %v2008
    %v2010 = vpop.f32.mrb[0].mxu0
    %v2011 = vadd.f32 %v326, %v2010
    %v2012 = vpop.f32.mrb[0].mxu0
    %v2013 = vadd.f32 %v322, %v2012
    %v2014 = vpop.f32.mrb[0].mxu0
    %v2015 = vadd.f32 %v326, %v2014
    %2016 = vmatprep.mubr.bf16.mxu0 %v396
    %2017 = vmatmul.mubr.bf16.gmra.mrb[0].mxu0 %v395
    %v2018 = vpop.f32.mrb[0].mxu0
    %v2019 = vadd.f32 %v322, %v2018
    %v2020 = vpop.f32.mrb[0].mxu0
    %v2021 = vadd.f32 %v326, %v2020
    %v2022 = vpop.f32.mrb[0].mxu0
    %v2023 = vadd.f32 %v322, %v2022
    %v2024 = vpop.f32.mrb[0].mxu0
    %v2025 = vadd.f32 %v326, %v2024
    %2026 = vmatprep.mubr.bf16.mxu0 %v398
    %2027 = vmatmul.mubr.bf16.gmra.mrb[0].mxu0 %v397
    %v2028 = vpop.f32.mrb[0].mxu0
    %v2029 = vadd.f32 %v322, %v2028
    %v2030 = vpop.f32.mrb[0].mxu0
    %v2031 = vadd.f32 %v326, %v2030
    %v2032 = vpop.f32.mrb[0].mxu0
    %v2033 = vadd.f32 %v322, %v2032
    %v2034 = vpop.f32.mrb[0].mxu0
    %v2035 = vadd.f32 %v326, %v2034
    %2036 = vmatprep.mubr.bf16.mxu0 %v400
    %2037 = vmatmul.mubr.bf16.gmra.mrb[0].mxu0 %v399
    %v2038 = vpop.f32.mrb[0].mxu0
    %v2039 = vadd.f32 %v322, %v2038
    %v2040 = vpop.f32.mrb[0].mxu0
    %v2041 = vadd.f32 %v326, %v2040
    %v2042 = vpop.f32.mrb[0].mxu0
    %v2043 = vadd.f32 %v322, %v2042
    %v2044 = vpop.f32.mrb[0].mxu0
    %v2045 = vadd.f32 %v326, %v2044
    %2046 = vmatprep.mubr.bf16.mxu0 %v402
    %2047 = vmatmul.mubr.bf16.gmra.mrb[0].mxu0 %v401
    %v2048 = vpop.f32.mrb[0].mxu0
    %v2049 = vadd.f32 %v322, %v2048
    %v2050 = vpop.f32.mrb[0].mxu0
    %v2051 = vadd.f32 %v326, %v2050
    %v2052 = vpop.f32.mrb[0].mxu0
    %v2053 = vadd.f32 %v322, %v2052
    %v2054 = vpop.f32.mrb[0].mxu0
    %v2055 = vadd.f32 %v326, %v2054
    %2056 = vdwg.mxu0
    %v2057 = vmax.f32 %v1414, 0.0
    %v2058 = vmax.f32 %v1416, 0.0
    %v2059 = vmax.f32 %v1527, 0.0
    %v2060 = vmax.f32 %v1529, 0.0
    %v2061 = vmax.f32 %v1640, 0.0
    %v2062 = vmax.f32 %v1642, 0.0
    %v2063 = vmax.f32 %v1753, 0.0
    %v2064 = vmax.f32 %v1755, 0.0
    %v2065 = vmax.f32 %v1866, 0.0
    %v2066 = vmax.f32 %v1868, 0.0
    %v2067 = vmax.f32 %v1979, 0.0
    %v2068 = vmax.f32 %v1981, 0.0
    %v2069 = vmax.f32 %v1418, 0.0
    %v2070 = vmax.f32 %v1420, 0.0
    %v2071 = vmax.f32 %v1531, 0.0
    %v2072 = vmax.f32 %v1533, 0.0
    %v2073 = vmax.f32 %v1644, 0.0
    %v2074 = vmax.f32 %v1646, 0.0
    %v2075 = vmax.f32 %v1757, 0.0
    %v2076 = vmax.f32 %v1759, 0.0
    %v2077 = vmax.f32 %v1870, 0.0
    %v2078 = vmax.f32 %v1872, 0.0
    %v2079 = vmax.f32 %v1983, 0.0
    %v2080 = vmax.f32 %v1985, 0.0
    %v2081 = vmax.f32 %v1424, 0.0
    %v2082 = vmax.f32 %v1426, 0.0
    %v2083 = vmax.f32 %v1537, 0.0
    %v2084 = vmax.f32 %v1539, 0.0
    %v2085 = vmax.f32 %v1650, 0.0
    %v2086 = vmax.f32 %v1652, 0.0
    %v2087 = vmax.f32 %v1763, 0.0
    %v2088 = vmax.f32 %v1765, 0.0
    %v2089 = vmax.f32 %v1876, 0.0
    %v2090 = vmax.f32 %v1878, 0.0
    %v2091 = vmax.f32 %v1989, 0.0
    %v2092 = vmax.f32 %v1991, 0.0
    %v2093 = vmax.f32 %v1428, 0.0
    %v2094 = vmax.f32 %v1430, 0.0
    %v2095 = vmax.f32 %v1541, 0.0
    %v2096 = vmax.f32 %v1543, 0.0
    %v2097 = vmax.f32 %v1654, 0.0
    %v2098 = vmax.f32 %v1656, 0.0
    %v2099 = vmax.f32 %v1767, 0.0
    %v2100 = vmax.f32 %v1769, 0.0
    %v2101 = vmax.f32 %v1880, 0.0
    %v2102 = vmax.f32 %v1882, 0.0
    %v2103 = vmax.f32 %v1993, 0.0
    %v2104 = vmax.f32 %v1995, 0.0
    %v2105 = vmax.f32 %v1434, 0.0
    %v2106 = vmax.f32 %v1436, 0.0
    %v2107 = vmax.f32 %v1547, 0.0
    %v2108 = vmax.f32 %v1549, 0.0
    %v2109 = vmax.f32 %v1660, 0.0
    %v2110 = vmax.f32 %v1662, 0.0
    %v2111 = vmax.f32 %v1773, 0.0
    %v2112 = vmax.f32 %v1775, 0.0
    %v2113 = vmax.f32 %v1886, 0.0
    %v2114 = vmax.f32 %v1888, 0.0
    %v2115 = vmax.f32 %v1999, 0.0
    %v2116 = vmax.f32 %v2001, 0.0
    %v2117 = vmax.f32 %v1438, 0.0
    %v2118 = vmax.f32 %v1440, 0.0
    %v2119 = vmax.f32 %v1551, 0.0
    %v2120 = vmax.f32 %v1553, 0.0
    %v2121 = vmax.f32 %v1664, 0.0
    %v2122 = vmax.f32 %v1666, 0.0
    %v2123 = vmax.f32 %v1777, 0.0
    %v2124 = vmax.f32 %v1779, 0.0
    %v2125 = vmax.f32 %v1890, 0.0
    %v2126 = vmax.f32 %v1892, 0.0
    %v2127 = vmax.f32 %v2003, 0.0
    %v2128 = vmax.f32 %v2005, 0.0
    %v2129 = vmax.f32 %v1444, 0.0
    %v2130 = vmax.f32 %v1446, 0.0
    %v2131 = vmax.f32 %v1557, 0.0
    %v2132 = vmax.f32 %v1559, 0.0
    %v2133 = vmax.f32 %v1670, 0.0
    %v2134 = vmax.f32 %v1672, 0.0
    %v2135 = vmax.f32 %v1783, 0.0
    %v2136 = vmax.f32 %v1785, 0.0
    %v2137 = vmax.f32 %v1896, 0.0
    %v2138 = vmax.f32 %v1898, 0.0
    %v2139 = vmax.f32 %v2009, 0.0
    %v2140 = vmax.f32 %v2011, 0.0
    %v2141 = vmax.f32 %v1448, 0.0
    %v2142 = vmax.f32 %v1450, 0.0
    %v2143 = vmax.f32 %v1561, 0.0
    %v2144 = vmax.f32 %v1563, 0.0
    %v2145 = vmax.f32 %v1674, 0.0
    %v2146 = vmax.f32 %v1676, 0.0
    %v2147 = vmax.f32 %v1787, 0.0
    %v2148 = vmax.f32 %v1789, 0.0
    %v2149 = vmax.f32 %v1900, 0.0
    %v2150 = vmax.f32 %v1902, 0.0
    %v2151 = vmax.f32 %v2013, 0.0
    %v2152 = vmax.f32 %v2015, 0.0
    %v2153 = vmax.f32 %v1454, 0.0
    %v2154 = vmax.f32 %v1456, 0.0
    %v2155 = vmax.f32 %v1567, 0.0
    %v2156 = vmax.f32 %v1569, 0.0
    %v2157 = vmax.f32 %v1680, 0.0
    %v2158 = vmax.f32 %v1682, 0.0
    %v2159 = vmax.f32 %v1793, 0.0
    %v2160 = vmax.f32 %v1795, 0.0
    %v2161 = vmax.f32 %v1906, 0.0
    %v2162 = vmax.f32 %v1908, 0.0
    %v2163 = vmax.f32 %v2019, 0.0
    %v2164 = vmax.f32 %v2021, 0.0
    %v2165 = vmax.f32 %v1458, 0.0
    %v2166 = vmax.f32 %v1460, 0.0
    %v2167 = vmax.f32 %v1571, 0.0
    %v2168 = vmax.f32 %v1573, 0.0
    %v2169 = vmax.f32 %v1684, 0.0
    %v2170 = vmax.f32 %v1686, 0.0
    %v2171 = vmax.f32 %v1797, 0.0
    %v2172 = vmax.f32 %v1799, 0.0
    %v2173 = vmax.f32 %v1910, 0.0
    %v2174 = vmax.f32 %v1912, 0.0
    %v2175 = vmax.f32 %v2023, 0.0
    %v2176 = vmax.f32 %v2025, 0.0
    %v2177 = vmax.f32 %v1464, 0.0
    %v2178 = vmax.f32 %v1466, 0.0
    %v2179 = vmax.f32 %v1577, 0.0
    %v2180 = vmax.f32 %v1579, 0.0
    %v2181 = vmax.f32 %v1690, 0.0
    %v2182 = vmax.f32 %v1692, 0.0
    %v2183 = vmax.f32 %v1803, 0.0
    %v2184 = vmax.f32 %v1805, 0.0
    %v2185 = vmax.f32 %v1916, 0.0
    %v2186 = vmax.f32 %v1918, 0.0
    %v2187 = vmax.f32 %v2029, 0.0
    %v2188 = vmax.f32 %v2031, 0.0
    %v2189 = vmax.f32 %v1468, 0.0
    %v2190 = vmax.f32 %v1470, 0.0
    %v2191 = vmax.f32 %v1581, 0.0
    %v2192 = vmax.f32 %v1583, 0.0
    %v2193 = vmax.f32 %v1694, 0.0
    %v2194 = vmax.f32 %v1696, 0.0
    %v2195 = vmax.f32 %v1807, 0.0
    %v2196 = vmax.f32 %v1809, 0.0
    %v2197 = vmax.f32 %v1920, 0.0
    %v2198 = vmax.f32 %v1922, 0.0
    %v2199 = vmax.f32 %v2033, 0.0
    %v2200 = vmax.f32 %v2035, 0.0
    %v2201 = vmax.f32 %v1474, 0.0
    %v2202 = vmax.f32 %v1476, 0.0
    %v2203 = vmax.f32 %v1587, 0.0
    %v2204 = vmax.f32 %v1589, 0.0
    %v2205 = vmax.f32 %v1700, 0.0
    %v2206 = vmax.f32 %v1702, 0.0
    %v2207 = vmax.f32 %v1813, 0.0
    %v2208 = vmax.f32 %v1815, 0.0
    %v2209 = vmax.f32 %v1926, 0.0
    %v2210 = vmax.f32 %v1928, 0.0
    %v2211 = vmax.f32 %v2039, 0.0
    %v2212 = vmax.f32 %v2041, 0.0
    %v2213 = vmax.f32 %v1478, 0.0
    %v2214 = vmax.f32 %v1480, 0.0
    %v2215 = vmax.f32 %v1591, 0.0
    %v2216 = vmax.f32 %v1593, 0.0
    %v2217 = vmax.f32 %v1704, 0.0
    %v2218 = vmax.f32 %v1706, 0.0
    %v2219 = vmax.f32 %v1817, 0.0
    %v2220 = vmax.f32 %v1819, 0.0
    %v2221 = vmax.f32 %v1930, 0.0
    %v2222 = vmax.f32 %v1932, 0.0
    %v2223 = vmax.f32 %v2043, 0.0
    %v2224 = vmax.f32 %v2045, 0.0
    %v2225 = vmax.f32 %v1484, 0.0
    %v2226 = vmax.f32 %v1486, 0.0
    %v2227 = vmax.f32 %v1597, 0.0
    %v2228 = vmax.f32 %v1599, 0.0
    %v2229 = vmax.f32 %v1710, 0.0
    %v2230 = vmax.f32 %v1712, 0.0
    %v2231 = vmax.f32 %v1823, 0.0
    %v2232 = vmax.f32 %v1825, 0.0
    %v2233 = vmax.f32 %v1936, 0.0
    %v2234 = vmax.f32 %v1938, 0.0
    %v2235 = vmax.f32 %v2049, 0.0
    %v2236 = vmax.f32 %v2051, 0.0
    %v2237 = vmax.f32 %v1488, 0.0
    %v2238 = vmax.f32 %v1490, 0.0
    %v2239 = vmax.f32 %v1601, 0.0
    %v2240 = vmax.f32 %v1603, 0.0
    %v2241 = vmax.f32 %v1714, 0.0
    %v2242 = vmax.f32 %v1716, 0.0
    %v2243 = vmax.f32 %v1827, 0.0
    %v2244 = vmax.f32 %v1829, 0.0
    %v2245 = vmax.f32 %v1940, 0.0
    %v2246 = vmax.f32 %v1942, 0.0
    %v2247 = vmax.f32 %v2053, 0.0
    %v2248 = vmax.f32 %v2055, 0.0
    %v2249 = vpack.c.bf16 %v2069, %v2057
    %v2250 = vpack.c.bf16 %v2070, %v2058
    %v2251 = vpack.c.bf16 %v2071, %v2059
    %v2252 = vpack.c.bf16 %v2072, %v2060
    %v2253 = vpack.c.bf16 %v2073, %v2061
    %v2254 = vpack.c.bf16 %v2074, %v2062
    %v2255 = vpack.c.bf16 %v2075, %v2063
    %v2256 = vpack.c.bf16 %v2076, %v2064
    %v2257 = vpack.c.bf16 %v2077, %v2065
    %v2258 = vpack.c.bf16 %v2078, %v2066
    %v2259 = vpack.c.bf16 %v2079, %v2067
    %v2260 = vpack.c.bf16 %v2080, %v2068
    %v2261 = vpack.c.bf16 %v2093, %v2081
    %v2262 = vpack.c.bf16 %v2094, %v2082
    %v2263 = vpack.c.bf16 %v2095, %v2083
    %v2264 = vpack.c.bf16 %v2096, %v2084
    %v2265 = vpack.c.bf16 %v2097, %v2085
    %v2266 = vpack.c.bf16 %v2098, %v2086
    %v2267 = vpack.c.bf16 %v2099, %v2087
    %v2268 = vpack.c.bf16 %v2100, %v2088
    %v2269 = vpack.c.bf16 %v2101, %v2089
    %v2270 = vpack.c.bf16 %v2102, %v2090
    %v2271 = vpack.c.bf16 %v2103, %v2091
    %v2272 = vpack.c.bf16 %v2104, %v2092
    %v2273 = vpack.c.bf16 %v2117, %v2105
    %v2274 = vpack.c.bf16 %v2118, %v2106
    %v2275 = vpack.c.bf16 %v2119, %v2107
    %v2276 = vpack.c.bf16 %v2120, %v2108
    %v2277 = vpack.c.bf16 %v2121, %v2109
    %v2278 = vpack.c.bf16 %v2122, %v2110
    %v2279 = vpack.c.bf16 %v2123, %v2111
    %v2280 = vpack.c.bf16 %v2124, %v2112
    %v2281 = vpack.c.bf16 %v2125, %v2113
    %v2282 = vpack.c.bf16 %v2126, %v2114
    %v2283 = vpack.c.bf16 %v2127, %v2115
    %v2284 = vpack.c.bf16 %v2128, %v2116
    %v2285 = vpack.c.bf16 %v2141, %v2129
    %v2286 = vpack.c.bf16 %v2142, %v2130
    %v2287 = vpack.c.bf16 %v2143, %v2131
    %v2288 = vpack.c.bf16 %v2144, %v2132
    %v2289 = vpack.c.bf16 %v2145, %v2133
    %v2290 = vpack.c.bf16 %v2146, %v2134
    %v2291 = vpack.c.bf16 %v2147, %v2135
    %v2292 = vpack.c.bf16 %v2148, %v2136
    %v2293 = vpack.c.bf16 %v2149, %v2137
    %v2294 = vpack.c.bf16 %v2150, %v2138
    %v2295 = vpack.c.bf16 %v2151, %v2139
    %v2296 = vpack.c.bf16 %v2152, %v2140
    %v2297 = vpack.c.bf16 %v2165, %v2153
    %v2298 = vpack.c.bf16 %v2166, %v2154
    %v2299 = vpack.c.bf16 %v2167, %v2155
    %v2300 = vpack.c.bf16 %v2168, %v2156
    %v2301 = vpack.c.bf16 %v2169, %v2157
    %v2302 = vpack.c.bf16 %v2170, %v2158
    %v2303 = vpack.c.bf16 %v2171, %v2159
    %v2304 = vpack.c.bf16 %v2172, %v2160
    %v2305 = vpack.c.bf16 %v2173, %v2161
    %v2306 = vpack.c.bf16 %v2174, %v2162
    %v2307 = vpack.c.bf16 %v2175, %v2163
    %v2308 = vpack.c.bf16 %v2176, %v2164
    %v2309 = vpack.c.bf16 %v2189, %v2177
    %v2310 = vpack.c.bf16 %v2190, %v2178
    %v2311 = vpack.c.bf16 %v2191, %v2179
    %v2312 = vpack.c.bf16 %v2192, %v2180
    %v2313 = vpack.c.bf16 %v2193, %v2181
    %v2314 = vpack.c.bf16 %v2194, %v2182
    %v2315 = vpack.c.bf16 %v2195, %v2183
    %v2316 = vpack.c.bf16 %v2196, %v2184
    %v2317 = vpack.c.bf16 %v2197, %v2185
    %v2318 = vpack.c.bf16 %v2198, %v2186
    %v2319 = vpack.c.bf16 %v2199, %v2187
    %v2320 = vpack.c.bf16 %v2200, %v2188
    %v2321 = vpack.c.bf16 %v2213, %v2201
    %v2322 = vpack.c.bf16 %v2214, %v2202
    %v2323 = vpack.c.bf16 %v2215, %v2203
    %v2324 = vpack.c.bf16 %v2216, %v2204
    %v2325 = vpack.c.bf16 %v2217, %v2205
    %v2326 = vpack.c.bf16 %v2218, %v2206
    %v2327 = vpack.c.bf16 %v2219, %v2207
    %v2328 = vpack.c.bf16 %v2220, %v2208
    %v2329 = vpack.c.bf16 %v2221, %v2209
    %v2330 = vpack.c.bf16 %v2222, %v2210
    %v2331 = vpack.c.bf16 %v2223, %v2211
    %v2332 = vpack.c.bf16 %v2224, %v2212
    %v2333 = vpack.c.bf16 %v2237, %v2225
    %v2334 = vpack.c.bf16 %v2238, %v2226
    %v2335 = vpack.c.bf16 %v2239, %v2227
    %v2336 = vpack.c.bf16 %v2240, %v2228
    %v2337 = vpack.c.bf16 %v2241, %v2229
    %v2338 = vpack.c.bf16 %v2242, %v2230
    %v2339 = vpack.c.bf16 %v2243, %v2231
    %v2340 = vpack.c.bf16 %v2244, %v2232
    %v2341 = vpack.c.bf16 %v2245, %v2233
    %v2342 = vpack.c.bf16 %v2246, %v2234
    %v2343 = vpack.c.bf16 %v2247, %v2235
    %v2344 = vpack.c.bf16 %v2248, %v2236
    %v2345 = vld [vmem:[#allocation4] sm:$0xff]
    %v2346 = vld [vmem:[#allocation4 + $0x8] sm:$0xff]
    %v2347 = vld [vmem:[#allocation4 + $0x10] sm:$0xff]
    %v2348 = vld [vmem:[#allocation4 + $0x18] sm:$0xff]
    %v2349 = vld [vmem:[#allocation4 + $0x20] sm:$0xff]
    %v2350 = vld [vmem:[#allocation4 + $0x28] sm:$0xff]
    %v2351 = vld [vmem:[#allocation4 + $0x30] sm:$0xff]
    %v2352 = vld [vmem:[#allocation4 + $0x38] sm:$0xff]
    %v2353 = vld [vmem:[#allocation4 + $0x40] sm:$0xff]
    %v2354 = vld [vmem:[#allocation4 + $0x48] sm:$0xff]
    %v2355 = vld [vmem:[#allocation4 + $0x50] sm:$0xff]
    %v2356 = vld [vmem:[#allocation4 + $0x58] sm:$0xff]
    %v2357 = vld [vmem:[#allocation4 + $0x60] sm:$0xff]
    %v2358 = vld [vmem:[#allocation4 + $0x68] sm:$0xff]
    %v2359 = vld [vmem:[#allocation4 + $0x70] sm:$0xff]
    %v2360 = vld [vmem:[#allocation4 + $0x78] sm:$0xff]
    %v2361 = vld [vmem:[#allocation4 + $0x80] sm:$0xff]
    %v2362 = vld [vmem:[#allocation4 + $0x88] sm:$0xff]
    %v2363 = vld [vmem:[#allocation4 + $0x90] sm:$0xff]
    %v2364 = vld [vmem:[#allocation4 + $0x98] sm:$0xff]
    %v2365 = vld [vmem:[#allocation4 + $0xa0] sm:$0xff]
    %v2366 = vld [vmem:[#allocation4 + $0xa8] sm:$0xff]
    %v2367 = vld [vmem:[#allocation4 + $0xb0] sm:$0xff]
    %v2368 = vld [vmem:[#allocation4 + $0xb8] sm:$0xff]
    %v2369 = vld [vmem:[#allocation4 + $0xc0] sm:$0xff]
    %v2370 = vld [vmem:[#allocation4 + $0xc8] sm:$0xff]
    %v2371 = vld [vmem:[#allocation4 + $0xd0] sm:$0xff]
    %v2372 = vld [vmem:[#allocation4 + $0xd8] sm:$0xff]
    %v2373 = vld [vmem:[#allocation4 + $0xe0] sm:$0xff]
    %v2374 = vld [vmem:[#allocation4 + $0xe8] sm:$0xff]
    %v2375 = vld [vmem:[#allocation4 + $0xf0] sm:$0xff]
    %v2376 = vld [vmem:[#allocation4 + $0xf8] sm:$0xff]
    %v2377 = vld [vmem:[#allocation4 + $0x100] sm:$0xff]
    %v2378 = vld [vmem:[#allocation4 + $0x108] sm:$0xff]
    %v2379 = vld [vmem:[#allocation4 + $0x110] sm:$0xff]
    %v2380 = vld [vmem:[#allocation4 + $0x118] sm:$0xff]
    %v2381 = vld [vmem:[#allocation4 + $0x120] sm:$0xff]
    %v2382 = vld [vmem:[#allocation4 + $0x128] sm:$0xff]
    %v2383 = vld [vmem:[#allocation4 + $0x130] sm:$0xff]
    %v2384 = vld [vmem:[#allocation4 + $0x138] sm:$0xff]
    %v2385 = vld [vmem:[#allocation4 + $0x140] sm:$0xff]
    %v2386 = vld [vmem:[#allocation4 + $0x148] sm:$0xff]
    %v2387 = vld [vmem:[#allocation4 + $0x150] sm:$0xff]
    %v2388 = vld [vmem:[#allocation4 + $0x158] sm:$0xff]
    %v2389 = vld [vmem:[#allocation4 + $0x160] sm:$0xff]
    %v2390 = vld [vmem:[#allocation4 + $0x168] sm:$0xff]
    %v2391 = vld [vmem:[#allocation4 + $0x170] sm:$0xff]
    %v2392 = vld [vmem:[#allocation4 + $0x178] sm:$0xff]
    %v2393 = vld [vmem:[#allocation4 + $0x180] sm:$0xff]
    %v2394 = vld [vmem:[#allocation4 + $0x188] sm:$0xff]
    %v2395 = vld [vmem:[#allocation4 + $0x190] sm:$0xff]
    %v2396 = vld [vmem:[#allocation4 + $0x198] sm:$0xff]
    %v2397 = vld [vmem:[#allocation4 + $0x1a0] sm:$0xff]
    %v2398 = vld [vmem:[#allocation4 + $0x1a8] sm:$0xff]
    %v2399 = vld [vmem:[#allocation4 + $0x1b0] sm:$0xff]
    %v2400 = vld [vmem:[#allocation4 + $0x1b8] sm:$0xff]
    %v2401 = vld [vmem:[#allocation4 + $0x1c0] sm:$0xff]
    %v2402 = vld [vmem:[#allocation4 + $0x1c8] sm:$0xff]
    %v2403 = vld [vmem:[#allocation4 + $0x1d0] sm:$0xff]
    %v2404 = vld [vmem:[#allocation4 + $0x1d8] sm:$0xff]
    %v2405 = vld [vmem:[#allocation4 + $0x1e0] sm:$0xff]
    %v2406 = vld [vmem:[#allocation4 + $0x1e8] sm:$0xff]
    %v2407 = vld [vmem:[#allocation4 + $0x1f0] sm:$0xff]
    %v2408 = vld [vmem:[#allocation4 + $0x1f8] sm:$0xff]
    %v2409 = vld [vmem:[#allocation4 + $0x200] sm:$0xff]
    %v2410 = vld [vmem:[#allocation4 + $0x208] sm:$0xff]
    %v2411 = vld [vmem:[#allocation4 + $0x210] sm:$0xff]
    %v2412 = vld [vmem:[#allocation4 + $0x218] sm:$0xff]
    %v2413 = vld [vmem:[#allocation4 + $0x220] sm:$0xff]
    %v2414 = vld [vmem:[#allocation4 + $0x228] sm:$0xff]
    %v2415 = vld [vmem:[#allocation4 + $0x230] sm:$0xff]
    %v2416 = vld [vmem:[#allocation4 + $0x238] sm:$0xff]
    %v2417 = vld [vmem:[#allocation4 + $0x240] sm:$0xff]
    %v2418 = vld [vmem:[#allocation4 + $0x248] sm:$0xff]
    %v2419 = vld [vmem:[#allocation4 + $0x250] sm:$0xff]
    %v2420 = vld [vmem:[#allocation4 + $0x258] sm:$0xff]
    %v2421 = vld [vmem:[#allocation4 + $0x260] sm:$0xff]
    %v2422 = vld [vmem:[#allocation4 + $0x268] sm:$0xff]
    %v2423 = vld [vmem:[#allocation4 + $0x270] sm:$0xff]
    %v2424 = vld [vmem:[#allocation4 + $0x278] sm:$0xff]
    %v2425 = vld [vmem:[#allocation4 + $0x280] sm:$0xff]
    %v2426 = vld [vmem:[#allocation4 + $0x288] sm:$0xff]
    %v2427 = vld [vmem:[#allocation4 + $0x290] sm:$0xff]
    %v2428 = vld [vmem:[#allocation4 + $0x298] sm:$0xff]
    %v2429 = vld [vmem:[#allocation4 + $0x2a0] sm:$0xff]
    %v2430 = vld [vmem:[#allocation4 + $0x2a8] sm:$0xff]
    %v2431 = vld [vmem:[#allocation4 + $0x2b0] sm:$0xff]
    %v2432 = vld [vmem:[#allocation4 + $0x2b8] sm:$0xff]
    %v2433 = vld [vmem:[#allocation4 + $0x2c0] sm:$0xff]
    %v2434 = vld [vmem:[#allocation4 + $0x2c8] sm:$0xff]
    %v2435 = vld [vmem:[#allocation4 + $0x2d0] sm:$0xff]
    %v2436 = vld [vmem:[#allocation4 + $0x2d8] sm:$0xff]
    %v2437 = vld [vmem:[#allocation4 + $0x2e0] sm:$0xff]
    %v2438 = vld [vmem:[#allocation4 + $0x2e8] sm:$0xff]
    %v2439 = vld [vmem:[#allocation4 + $0x2f0] sm:$0xff]
    %v2440 = vld [vmem:[#allocation4 + $0x2f8] sm:$0xff]
    %v2441 = vld [vmem:[#allocation4 + $0x300] sm:$0xff]
    %v2442 = vld [vmem:[#allocation4 + $0x308] sm:$0xff]
    %v2443 = vld [vmem:[#allocation4 + $0x310] sm:$0xff]
    %v2444 = vld [vmem:[#allocation4 + $0x318] sm:$0xff]
    %v2445 = vld [vmem:[#allocation4 + $0x320] sm:$0xff]
    %v2446 = vld [vmem:[#allocation4 + $0x328] sm:$0xff]
    %v2447 = vld [vmem:[#allocation4 + $0x330] sm:$0xff]
    %v2448 = vld [vmem:[#allocation4 + $0x338] sm:$0xff]
    %v2449 = vld [vmem:[#allocation4 + $0x340] sm:$0xff]
    %v2450 = vld [vmem:[#allocation4 + $0x348] sm:$0xff]
    %v2451 = vld [vmem:[#allocation4 + $0x350] sm:$0xff]
    %v2452 = vld [vmem:[#allocation4 + $0x358] sm:$0xff]
    %v2453 = vld [vmem:[#allocation4 + $0x360] sm:$0xff]
    %v2454 = vld [vmem:[#allocation4 + $0x368] sm:$0xff]
    %v2455 = vld [vmem:[#allocation4 + $0x370] sm:$0xff]
    %v2456 = vld [vmem:[#allocation4 + $0x378] sm:$0xff]
    %v2457 = vld [vmem:[#allocation4 + $0x380] sm:$0xff]
    %v2458 = vld [vmem:[#allocation4 + $0x388] sm:$0xff]
    %v2459 = vld [vmem:[#allocation4 + $0x390] sm:$0xff]
    %v2460 = vld [vmem:[#allocation4 + $0x398] sm:$0xff]
    %v2461 = vld [vmem:[#allocation4 + $0x3a0] sm:$0xff]
    %v2462 = vld [vmem:[#allocation4 + $0x3a8] sm:$0xff]
    %v2463 = vld [vmem:[#allocation4 + $0x3b0] sm:$0xff]
    %v2464 = vld [vmem:[#allocation4 + $0x3b8] sm:$0xff]
    %v2465 = vld [vmem:[#allocation4 + $0x3c0] sm:$0xff]
    %v2466 = vld [vmem:[#allocation4 + $0x3c8] sm:$0xff]
    %v2467 = vld [vmem:[#allocation4 + $0x3d0] sm:$0xff]
    %v2468 = vld [vmem:[#allocation4 + $0x3d8] sm:$0xff]
    %v2469 = vld [vmem:[#allocation4 + $0x3e0] sm:$0xff]
    %v2470 = vld [vmem:[#allocation4 + $0x3e8] sm:$0xff]
    %v2471 = vld [vmem:[#allocation4 + $0x3f0] sm:$0xff]
    %v2472 = vld [vmem:[#allocation4 + $0x3f8] sm:$0xff]
    %v2473 = vld [vmem:[#allocation4 + $0x400] sm:$0xff]
    %v2474 = vld [vmem:[#allocation4 + $0x408] sm:$0xff]
    %v2475 = vld [vmem:[#allocation4 + $0x410] sm:$0xff]
    %v2476 = vld [vmem:[#allocation4 + $0x418] sm:$0xff]
    %v2477 = vld [vmem:[#allocation4 + $0x420] sm:$0xff]
    %v2478 = vld [vmem:[#allocation4 + $0x428] sm:$0xff]
    %v2479 = vld [vmem:[#allocation4 + $0x430] sm:$0xff]
    %v2480 = vld [vmem:[#allocation4 + $0x438] sm:$0xff]
    %v2481 = vld [vmem:[#allocation4 + $0x440] sm:$0xff]
    %v2482 = vld [vmem:[#allocation4 + $0x448] sm:$0xff]
    %v2483 = vld [vmem:[#allocation4 + $0x450] sm:$0xff]
    %v2484 = vld [vmem:[#allocation4 + $0x458] sm:$0xff]
    %v2485 = vld [vmem:[#allocation4 + $0x460] sm:$0xff]
    %v2486 = vld [vmem:[#allocation4 + $0x468] sm:$0xff]
    %v2487 = vld [vmem:[#allocation4 + $0x470] sm:$0xff]
    %v2488 = vld [vmem:[#allocation4 + $0x478] sm:$0xff]
    %v2489 = vld [vmem:[#allocation4 + $0x480] sm:$0xff]
    %v2490 = vld [vmem:[#allocation4 + $0x488] sm:$0xff]
    %v2491 = vld [vmem:[#allocation4 + $0x490] sm:$0xff]
    %v2492 = vld [vmem:[#allocation4 + $0x498] sm:$0xff]
    %v2493 = vld [vmem:[#allocation4 + $0x4a0] sm:$0xff]
    %v2494 = vld [vmem:[#allocation4 + $0x4a8] sm:$0xff]
    %v2495 = vld [vmem:[#allocation4 + $0x4b0] sm:$0xff]
    %v2496 = vld [vmem:[#allocation4 + $0x4b8] sm:$0xff]
    %v2497 = vld [vmem:[#allocation4 + $0x4c0] sm:$0xff]
    %v2498 = vld [vmem:[#allocation4 + $0x4c8] sm:$0xff]
    %v2499 = vld [vmem:[#allocation4 + $0x4d0] sm:$0xff]
    %v2500 = vld [vmem:[#allocation4 + $0x4d8] sm:$0xff]
    %v2501 = vld [vmem:[#allocation4 + $0x4e0] sm:$0xff]
    %v2502 = vld [vmem:[#allocation4 + $0x4e8] sm:$0xff]
    %v2503 = vld [vmem:[#allocation4 + $0x4f0] sm:$0xff]
    %v2504 = vld [vmem:[#allocation4 + $0x4f8] sm:$0xff]
    %v2505 = vld [vmem:[#allocation4 + $0x500] sm:$0xff]
    %v2506 = vld [vmem:[#allocation4 + $0x508] sm:$0xff]
    %v2507 = vld [vmem:[#allocation4 + $0x510] sm:$0xff]
    %v2508 = vld [vmem:[#allocation4 + $0x518] sm:$0xff]
    %v2509 = vld [vmem:[#allocation4 + $0x520] sm:$0xff]
    %v2510 = vld [vmem:[#allocation4 + $0x528] sm:$0xff]
    %v2511 = vld [vmem:[#allocation4 + $0x530] sm:$0xff]
    %v2512 = vld [vmem:[#allocation4 + $0x538] sm:$0xff]
    %v2513 = vld [vmem:[#allocation4 + $0x540] sm:$0xff]
    %v2514 = vld [vmem:[#allocation4 + $0x548] sm:$0xff]
    %v2515 = vld [vmem:[#allocation4 + $0x550] sm:$0xff]
    %v2516 = vld [vmem:[#allocation4 + $0x558] sm:$0xff]
    %v2517 = vld [vmem:[#allocation4 + $0x560] sm:$0xff]
    %v2518 = vld [vmem:[#allocation4 + $0x568] sm:$0xff]
    %v2519 = vld [vmem:[#allocation4 + $0x570] sm:$0xff]
    %v2520 = vld [vmem:[#allocation4 + $0x578] sm:$0xff]
    %v2521 = vld [vmem:[#allocation4 + $0x580] sm:$0xff]
    %v2522 = vld [vmem:[#allocation4 + $0x588] sm:$0xff]
    %v2523 = vld [vmem:[#allocation4 + $0x590] sm:$0xff]
    %v2524 = vld [vmem:[#allocation4 + $0x598] sm:$0xff]
    %v2525 = vld [vmem:[#allocation4 + $0x5a0] sm:$0xff]
    %v2526 = vld [vmem:[#allocation4 + $0x5a8] sm:$0xff]
    %v2527 = vld [vmem:[#allocation4 + $0x5b0] sm:$0xff]
    %v2528 = vld [vmem:[#allocation4 + $0x5b8] sm:$0xff]
    %v2529 = vld [vmem:[#allocation4 + $0x5c0] sm:$0xff]
    %v2530 = vld [vmem:[#allocation4 + $0x5c8] sm:$0xff]
    %v2531 = vld [vmem:[#allocation4 + $0x5d0] sm:$0xff]
    %v2532 = vld [vmem:[#allocation4 + $0x5d8] sm:$0xff]
    %v2533 = vld [vmem:[#allocation4 + $0x5e0] sm:$0xff]
    %v2534 = vld [vmem:[#allocation4 + $0x5e8] sm:$0xff]
    %v2535 = vld [vmem:[#allocation4 + $0x5f0] sm:$0xff]
    %v2536 = vld [vmem:[#allocation4 + $0x5f8] sm:$0xff]
    %v2537 = vld [vmem:[%s4] sm:$0x3]
    %v2539 = vlaneseq
    %v2540 = vshrl.u32 %v2539, 7
    %v2541 = vsub.s32 0, %v2540
    %v2542 = vrot.slane %v2537, %v2541
    %v2543 = vlaneseq
    %v2544 = vshrl.u32 %v2543, 7
    %v2545 = vsub.s32 1, %v2544
    %v2546 = vrot.slane %v2537, %v2545
    %v2741 = vunpack.c.l.b16 %v2345
    %v2742 = vunpack.c.h.b16 %v2345
    %v2743 = vunpack.c.l.b16 %v2346
    %v2744 = vunpack.c.h.b16 %v2346
    %v2745 = vunpack.c.l.b16 %v2347
    %v2746 = vunpack.c.h.b16 %v2347
    %v2747 = vunpack.c.l.b16 %v2348
    %v2748 = vunpack.c.h.b16 %v2348
    %v2749 = vunpack.c.l.b16 %v2349
    %v2750 = vunpack.c.h.b16 %v2349
    %v2751 = vunpack.c.l.b16 %v2350
    %v2752 = vunpack.c.h.b16 %v2350
    %v2753 = vunpack.c.l.b16 %v2351
    %v2754 = vunpack.c.h.b16 %v2351
    %v2755 = vunpack.c.l.b16 %v2352
    %v2756 = vunpack.c.h.b16 %v2352
    %v2757 = vunpack.c.l.b16 %v2353
    %v2758 = vunpack.c.h.b16 %v2353
    %v2759 = vunpack.c.l.b16 %v2354
    %v2760 = vunpack.c.h.b16 %v2354
    %v2761 = vunpack.c.l.b16 %v2355
    %v2762 = vunpack.c.h.b16 %v2355
    %v2763 = vunpack.c.l.b16 %v2356
    %v2764 = vunpack.c.h.b16 %v2356
    %v2765 = vunpack.c.l.b16 %v2357
    %v2766 = vunpack.c.h.b16 %v2357
    %v2767 = vunpack.c.l.b16 %v2358
    %v2768 = vunpack.c.h.b16 %v2358
    %v2769 = vunpack.c.l.b16 %v2359
    %v2770 = vunpack.c.h.b16 %v2359
    %v2771 = vunpack.c.l.b16 %v2360
    %v2772 = vunpack.c.h.b16 %v2360
    %v2773 = vunpack.c.l.b16 %v2361
    %v2774 = vunpack.c.h.b16 %v2361
    %v2775 = vunpack.c.l.b16 %v2362
    %v2776 = vunpack.c.h.b16 %v2362
    %v2777 = vunpack.c.l.b16 %v2363
    %v2778 = vunpack.c.h.b16 %v2363
    %v2779 = vunpack.c.l.b16 %v2364
    %v2780 = vunpack.c.h.b16 %v2364
    %v2781 = vunpack.c.l.b16 %v2365
    %v2782 = vunpack.c.h.b16 %v2365
    %v2783 = vunpack.c.l.b16 %v2366
    %v2784 = vunpack.c.h.b16 %v2366
    %v2785 = vunpack.c.l.b16 %v2367
    %v2786 = vunpack.c.h.b16 %v2367
    %v2787 = vunpack.c.l.b16 %v2368
    %v2788 = vunpack.c.h.b16 %v2368
    %v2789 = vunpack.c.l.b16 %v2369
    %v2790 = vunpack.c.h.b16 %v2369
    %v2791 = vunpack.c.l.b16 %v2370
    %v2792 = vunpack.c.h.b16 %v2370
    %v2793 = vunpack.c.l.b16 %v2371
    %v2794 = vunpack.c.h.b16 %v2371
    %v2795 = vunpack.c.l.b16 %v2372
    %v2796 = vunpack.c.h.b16 %v2372
    %v2797 = vunpack.c.l.b16 %v2373
    %v2798 = vunpack.c.h.b16 %v2373
    %v2799 = vunpack.c.l.b16 %v2374
    %v2800 = vunpack.c.h.b16 %v2374
    %v2801 = vunpack.c.l.b16 %v2375
    %v2802 = vunpack.c.h.b16 %v2375
    %v2803 = vunpack.c.l.b16 %v2376
    %v2804 = vunpack.c.h.b16 %v2376
    %v2805 = vunpack.c.l.b16 %v2377
    %v2806 = vunpack.c.h.b16 %v2377
    %v2807 = vunpack.c.l.b16 %v2378
    %v2808 = vunpack.c.h.b16 %v2378
    %v2809 = vunpack.c.l.b16 %v2379
    %v2810 = vunpack.c.h.b16 %v2379
    %v2811 = vunpack.c.l.b16 %v2380
    %v2812 = vunpack.c.h.b16 %v2380
    %v2813 = vunpack.c.l.b16 %v2381
    %v2814 = vunpack.c.h.b16 %v2381
    %v2815 = vunpack.c.l.b16 %v2382
    %v2816 = vunpack.c.h.b16 %v2382
    %v2817 = vunpack.c.l.b16 %v2383
    %v2818 = vunpack.c.h.b16 %v2383
    %v2819 = vunpack.c.l.b16 %v2384
    %v2820 = vunpack.c.h.b16 %v2384
    %v2821 = vunpack.c.l.b16 %v2385
    %v2822 = vunpack.c.h.b16 %v2385
    %v2823 = vunpack.c.l.b16 %v2386
    %v2824 = vunpack.c.h.b16 %v2386
    %v2825 = vunpack.c.l.b16 %v2387
    %v2826 = vunpack.c.h.b16 %v2387
    %v2827 = vunpack.c.l.b16 %v2388
    %v2828 = vunpack.c.h.b16 %v2388
    %v2829 = vunpack.c.l.b16 %v2389
    %v2830 = vunpack.c.h.b16 %v2389
    %v2831 = vunpack.c.l.b16 %v2390
    %v2832 = vunpack.c.h.b16 %v2390
    %v2833 = vunpack.c.l.b16 %v2391
    %v2834 = vunpack.c.h.b16 %v2391
    %v2835 = vunpack.c.l.b16 %v2392
    %v2836 = vunpack.c.h.b16 %v2392
    %v2837 = vunpack.c.l.b16 %v2393
    %v2838 = vunpack.c.h.b16 %v2393
    %v2839 = vunpack.c.l.b16 %v2394
    %v2840 = vunpack.c.h.b16 %v2394
    %v2841 = vunpack.c.l.b16 %v2395
    %v2842 = vunpack.c.h.b16 %v2395
    %v2843 = vunpack.c.l.b16 %v2396
    %v2844 = vunpack.c.h.b16 %v2396
    %v2845 = vunpack.c.l.b16 %v2397
    %v2846 = vunpack.c.h.b16 %v2397
    %v2847 = vunpack.c.l.b16 %v2398
    %v2848 = vunpack.c.h.b16 %v2398
    %v2849 = vunpack.c.l.b16 %v2399
    %v2850 = vunpack.c.h.b16 %v2399
    %v2851 = vunpack.c.l.b16 %v2400
    %v2852 = vunpack.c.h.b16 %v2400
    %v2853 = vunpack.c.l.b16 %v2401
    %v2854 = vunpack.c.h.b16 %v2401
    %v2855 = vunpack.c.l.b16 %v2402
    %v2856 = vunpack.c.h.b16 %v2402
    %v2857 = vunpack.c.l.b16 %v2403
    %v2858 = vunpack.c.h.b16 %v2403
    %v2859 = vunpack.c.l.b16 %v2404
    %v2860 = vunpack.c.h.b16 %v2404
    %v2861 = vunpack.c.l.b16 %v2405
    %v2862 = vunpack.c.h.b16 %v2405
    %v2863 = vunpack.c.l.b16 %v2406
    %v2864 = vunpack.c.h.b16 %v2406
    %v2865 = vunpack.c.l.b16 %v2407
    %v2866 = vunpack.c.h.b16 %v2407
    %v2867 = vunpack.c.l.b16 %v2408
    %v2868 = vunpack.c.h.b16 %v2408
    %v2869 = vunpack.c.l.b16 %v2409
    %v2870 = vunpack.c.h.b16 %v2409
    %v2871 = vunpack.c.l.b16 %v2410
    %v2872 = vunpack.c.h.b16 %v2410
    %v2873 = vunpack.c.l.b16 %v2411
    %v2874 = vunpack.c.h.b16 %v2411
    %v2875 = vunpack.c.l.b16 %v2412
    %v2876 = vunpack.c.h.b16 %v2412
    %v2877 = vunpack.c.l.b16 %v2413
    %v2878 = vunpack.c.h.b16 %v2413
    %v2879 = vunpack.c.l.b16 %v2414
    %v2880 = vunpack.c.h.b16 %v2414
    %v2881 = vunpack.c.l.b16 %v2415
    %v2882 = vunpack.c.h.b16 %v2415
    %v2883 = vunpack.c.l.b16 %v2416
    %v2884 = vunpack.c.h.b16 %v2416
    %v2885 = vunpack.c.l.b16 %v2417
    %v2886 = vunpack.c.h.b16 %v2417
    %v2887 = vunpack.c.l.b16 %v2418
    %v2888 = vunpack.c.h.b16 %v2418
    %v2889 = vunpack.c.l.b16 %v2419
    %v2890 = vunpack.c.h.b16 %v2419
    %v2891 = vunpack.c.l.b16 %v2420
    %v2892 = vunpack.c.h.b16 %v2420
    %v2893 = vunpack.c.l.b16 %v2421
    %v2894 = vunpack.c.h.b16 %v2421
    %v2895 = vunpack.c.l.b16 %v2422
    %v2896 = vunpack.c.h.b16 %v2422
    %v2897 = vunpack.c.l.b16 %v2423
    %v2898 = vunpack.c.h.b16 %v2423
    %v2899 = vunpack.c.l.b16 %v2424
    %v2900 = vunpack.c.h.b16 %v2424
    %v2901 = vunpack.c.l.b16 %v2425
    %v2902 = vunpack.c.h.b16 %v2425
    %v2903 = vunpack.c.l.b16 %v2426
    %v2904 = vunpack.c.h.b16 %v2426
    %v2905 = vunpack.c.l.b16 %v2427
    %v2906 = vunpack.c.h.b16 %v2427
    %v2907 = vunpack.c.l.b16 %v2428
    %v2908 = vunpack.c.h.b16 %v2428
    %v2909 = vunpack.c.l.b16 %v2429
    %v2910 = vunpack.c.h.b16 %v2429
    %v2911 = vunpack.c.l.b16 %v2430
    %v2912 = vunpack.c.h.b16 %v2430
    %v2913 = vunpack.c.l.b16 %v2431
    %v2914 = vunpack.c.h.b16 %v2431
    %v2915 = vunpack.c.l.b16 %v2432
    %v2916 = vunpack.c.h.b16 %v2432
    %v2917 = vunpack.c.l.b16 %v2433
    %v2918 = vunpack.c.h.b16 %v2433
    %v2919 = vunpack.c.l.b16 %v2434
    %v2920 = vunpack.c.h.b16 %v2434
    %v2921 = vunpack.c.l.b16 %v2435
    %v2922 = vunpack.c.h.b16 %v2435
    %v2923 = vunpack.c.l.b16 %v2436
    %v2924 = vunpack.c.h.b16 %v2436
    %v2925 = vunpack.c.l.b16 %v2437
    %v2926 = vunpack.c.h.b16 %v2437
    %v2927 = vunpack.c.l.b16 %v2438
    %v2928 = vunpack.c.h.b16 %v2438
    %v2929 = vunpack.c.l.b16 %v2439
    %v2930 = vunpack.c.h.b16 %v2439
    %v2931 = vunpack.c.l.b16 %v2440
    %v2932 = vunpack.c.h.b16 %v2440
    %v2933 = vunpack.c.l.b16 %v2441
    %v2934 = vunpack.c.h.b16 %v2441
    %v2935 = vunpack.c.l.b16 %v2442
    %v2936 = vunpack.c.h.b16 %v2442
    %v2937 = vunpack.c.l.b16 %v2443
    %v2938 = vunpack.c.h.b16 %v2443
    %v2939 = vunpack.c.l.b16 %v2444
    %v2940 = vunpack.c.h.b16 %v2444
    %v2941 = vunpack.c.l.b16 %v2445
    %v2942 = vunpack.c.h.b16 %v2445
    %v2943 = vunpack.c.l.b16 %v2446
    %v2944 = vunpack.c.h.b16 %v2446
    %v2945 = vunpack.c.l.b16 %v2447
    %v2946 = vunpack.c.h.b16 %v2447
    %v2947 = vunpack.c.l.b16 %v2448
    %v2948 = vunpack.c.h.b16 %v2448
    %v2949 = vunpack.c.l.b16 %v2449
    %v2950 = vunpack.c.h.b16 %v2449
    %v2951 = vunpack.c.l.b16 %v2450
    %v2952 = vunpack.c.h.b16 %v2450
    %v2953 = vunpack.c.l.b16 %v2451
    %v2954 = vunpack.c.h.b16 %v2451
    %v2955 = vunpack.c.l.b16 %v2452
    %v2956 = vunpack.c.h.b16 %v2452
    %v2957 = vunpack.c.l.b16 %v2453
    %v2958 = vunpack.c.h.b16 %v2453
    %v2959 = vunpack.c.l.b16 %v2454
    %v2960 = vunpack.c.h.b16 %v2454
    %v2961 = vunpack.c.l.b16 %v2455
    %v2962 = vunpack.c.h.b16 %v2455
    %v2963 = vunpack.c.l.b16 %v2456
    %v2964 = vunpack.c.h.b16 %v2456
    %v2965 = vunpack.c.l.b16 %v2457
    %v2966 = vunpack.c.h.b16 %v2457
    %v2967 = vunpack.c.l.b16 %v2458
    %v2968 = vunpack.c.h.b16 %v2458
    %v2969 = vunpack.c.l.b16 %v2459
    %v2970 = vunpack.c.h.b16 %v2459
    %v2971 = vunpack.c.l.b16 %v2460
    %v2972 = vunpack.c.h.b16 %v2460
    %v2973 = vunpack.c.l.b16 %v2461
    %v2974 = vunpack.c.h.b16 %v2461
    %v2975 = vunpack.c.l.b16 %v2462
    %v2976 = vunpack.c.h.b16 %v2462
    %v2977 = vunpack.c.l.b16 %v2463
    %v2978 = vunpack.c.h.b16 %v2463
    %v2979 = vunpack.c.l.b16 %v2464
    %v2980 = vunpack.c.h.b16 %v2464
    %v2981 = vunpack.c.l.b16 %v2465
    %v2982 = vunpack.c.h.b16 %v2465
    %v2983 = vunpack.c.l.b16 %v2466
    %v2984 = vunpack.c.h.b16 %v2466
    %v2985 = vunpack.c.l.b16 %v2467
    %v2986 = vunpack.c.h.b16 %v2467
    %v2987 = vunpack.c.l.b16 %v2468
    %v2988 = vunpack.c.h.b16 %v2468
    %v2989 = vunpack.c.l.b16 %v2469
    %v2990 = vunpack.c.h.b16 %v2469
    %v2991 = vunpack.c.l.b16 %v2470
    %v2992 = vunpack.c.h.b16 %v2470
    %v2993 = vunpack.c.l.b16 %v2471
    %v2994 = vunpack.c.h.b16 %v2471
    %v2995 = vunpack.c.l.b16 %v2472
    %v2996 = vunpack.c.h.b16 %v2472
    %v2997 = vunpack.c.l.b16 %v2473
    %v2998 = vunpack.c.h.b16 %v2473
    %v2999 = vunpack.c.l.b16 %v2474
    %v3000 = vunpack.c.h.b16 %v2474
    %v3001 = vunpack.c.l.b16 %v2475
    %v3002 = vunpack.c.h.b16 %v2475
    %v3003 = vunpack.c.l.b16 %v2476
    %v3004 = vunpack.c.h.b16 %v2476
    %v3005 = vunpack.c.l.b16 %v2477
    %v3006 = vunpack.c.h.b16 %v2477
    %v3007 = vunpack.c.l.b16 %v2478
    %v3008 = vunpack.c.h.b16 %v2478
    %v3009 = vunpack.c.l.b16 %v2479
    %v3010 = vunpack.c.h.b16 %v2479
    %v3011 = vunpack.c.l.b16 %v2480
    %v3012 = vunpack.c.h.b16 %v2480
    %v3013 = vunpack.c.l.b16 %v2481
    %v3014 = vunpack.c.h.b16 %v2481
    %v3015 = vunpack.c.l.b16 %v2482
    %v3016 = vunpack.c.h.b16 %v2482
    %v3017 = vunpack.c.l.b16 %v2483
    %v3018 = vunpack.c.h.b16 %v2483
    %v3019 = vunpack.c.l.b16 %v2484
    %v3020 = vunpack.c.h.b16 %v2484
    %v3021 = vunpack.c.l.b16 %v2485
    %v3022 = vunpack.c.h.b16 %v2485
    %v3023 = vunpack.c.l.b16 %v2486
    %v3024 = vunpack.c.h.b16 %v2486
    %v3025 = vunpack.c.l.b16 %v2487
    %v3026 = vunpack.c.h.b16 %v2487
    %v3027 = vunpack.c.l.b16 %v2488
    %v3028 = vunpack.c.h.b16 %v2488
    %v3029 = vunpack.c.l.b16 %v2489
    %v3030 = vunpack.c.h.b16 %v2489
    %v3031 = vunpack.c.l.b16 %v2490
    %v3032 = vunpack.c.h.b16 %v2490
    %v3033 = vunpack.c.l.b16 %v2491
    %v3034 = vunpack.c.h.b16 %v2491
    %v3035 = vunpack.c.l.b16 %v2492
    %v3036 = vunpack.c.h.b16 %v2492
    %v3037 = vunpack.c.l.b16 %v2493
    %v3038 = vunpack.c.h.b16 %v2493
    %v3039 = vunpack.c.l.b16 %v2494
    %v3040 = vunpack.c.h.b16 %v2494
    %v3041 = vunpack.c.l.b16 %v2495
    %v3042 = vunpack.c.h.b16 %v2495
    %v3043 = vunpack.c.l.b16 %v2496
    %v3044 = vunpack.c.h.b16 %v2496
    %v3045 = vunpack.c.l.b16 %v2497
    %v3046 = vunpack.c.h.b16 %v2497
    %v3047 = vunpack.c.l.b16 %v2498
    %v3048 = vunpack.c.h.b16 %v2498
    %v3049 = vunpack.c.l.b16 %v2499
    %v3050 = vunpack.c.h.b16 %v2499
    %v3051 = vunpack.c.l.b16 %v2500
    %v3052 = vunpack.c.h.b16 %v2500
    %v3053 = vunpack.c.l.b16 %v2501
    %v3054 = vunpack.c.h.b16 %v2501
    %v3055 = vunpack.c.l.b16 %v2502
    %v3056 = vunpack.c.h.b16 %v2502
    %v3057 = vunpack.c.l.b16 %v2503
    %v3058 = vunpack.c.h.b16 %v2503
    %v3059 = vunpack.c.l.b16 %v2504
    %v3060 = vunpack.c.h.b16 %v2504
    %v3061 = vunpack.c.l.b16 %v2505
    %v3062 = vunpack.c.h.b16 %v2505
    %v3063 = vunpack.c.l.b16 %v2506
    %v3064 = vunpack.c.h.b16 %v2506
    %v3065 = vunpack.c.l.b16 %v2507
    %v3066 = vunpack.c.h.b16 %v2507
    %v3067 = vunpack.c.l.b16 %v2508
    %v3068 = vunpack.c.h.b16 %v2508
    %v3069 = vunpack.c.l.b16 %v2509
    %v3070 = vunpack.c.h.b16 %v2509
    %v3071 = vunpack.c.l.b16 %v2510
    %v3072 = vunpack.c.h.b16 %v2510
    %v3073 = vunpack.c.l.b16 %v2511
    %v3074 = vunpack.c.h.b16 %v2511
    %v3075 = vunpack.c.l.b16 %v2512
    %v3076 = vunpack.c.h.b16 %v2512
    %v3077 = vunpack.c.l.b16 %v2513
    %v3078 = vunpack.c.h.b16 %v2513
    %v3079 = vunpack.c.l.b16 %v2514
    %v3080 = vunpack.c.h.b16 %v2514
    %v3081 = vunpack.c.l.b16 %v2515
    %v3082 = vunpack.c.h.b16 %v2515
    %v3083 = vunpack.c.l.b16 %v2516
    %v3084 = vunpack.c.h.b16 %v2516
    %v3085 = vunpack.c.l.b16 %v2517
    %v3086 = vunpack.c.h.b16 %v2517
    %v3087 = vunpack.c.l.b16 %v2518
    %v3088 = vunpack.c.h.b16 %v2518
    %v3089 = vunpack.c.l.b16 %v2519
    %v3090 = vunpack.c.h.b16 %v2519
    %v3091 = vunpack.c.l.b16 %v2520
    %v3092 = vunpack.c.h.b16 %v2520
    %v3093 = vunpack.c.l.b16 %v2521
    %v3094 = vunpack.c.h.b16 %v2521
    %v3095 = vunpack.c.l.b16 %v2522
    %v3096 = vunpack.c.h.b16 %v2522
    %v3097 = vunpack.c.l.b16 %v2523
    %v3098 = vunpack.c.h.b16 %v2523
    %v3099 = vunpack.c.l.b16 %v2524
    %v3100 = vunpack.c.h.b16 %v2524
    %v3101 = vunpack.c.l.b16 %v2525
    %v3102 = vunpack.c.h.b16 %v2525
    %v3103 = vunpack.c.l.b16 %v2526
    %v3104 = vunpack.c.h.b16 %v2526
    %v3105 = vunpack.c.l.b16 %v2527
    %v3106 = vunpack.c.h.b16 %v2527
    %v3107 = vunpack.c.l.b16 %v2528
    %v3108 = vunpack.c.h.b16 %v2528
    %v3109 = vunpack.c.l.b16 %v2529
    %v3110 = vunpack.c.h.b16 %v2529
    %v3111 = vunpack.c.l.b16 %v2530
    %v3112 = vunpack.c.h.b16 %v2530
    %v3113 = vunpack.c.l.b16 %v2531
    %v3114 = vunpack.c.h.b16 %v2531
    %v3115 = vunpack.c.l.b16 %v2532
    %v3116 = vunpack.c.h.b16 %v2532
    %v3117 = vunpack.c.l.b16 %v2533
    %v3118 = vunpack.c.h.b16 %v2533
    %v3119 = vunpack.c.l.b16 %v2534
    %v3120 = vunpack.c.h.b16 %v2534
    %v3121 = vunpack.c.l.b16 %v2535
    %v3122 = vunpack.c.h.b16 %v2535
    %v3123 = vunpack.c.l.b16 %v2536
    %v3124 = vunpack.c.h.b16 %v2536
    %v3125 = vpack.c.b16 %v2743, %v2741
    %v3126 = vpack.c.b16 %v2744, %v2742
    %v3127 = vpack.c.b16 %v2747, %v2745
    %v3128 = vpack.c.b16 %v2748, %v2746
    %v3129 = vpack.c.b16 %v2751, %v2749
    %v3130 = vpack.c.b16 %v2752, %v2750
    %v3131 = vpack.c.b16 %v2755, %v2753
    %v3132 = vpack.c.b16 %v2756, %v2754
    %v3133 = vpack.c.b16 %v2759, %v2757
    %v3134 = vpack.c.b16 %v2760, %v2758
    %v3135 = vpack.c.b16 %v2763, %v2761
    %v3136 = vpack.c.b16 %v2764, %v2762
    %v3137 = vpack.c.b16 %v2767, %v2765
    %v3138 = vpack.c.b16 %v2768, %v2766
    %v3139 = vpack.c.b16 %v2771, %v2769
    %v3140 = vpack.c.b16 %v2772, %v2770
    %v3141 = vpack.c.b16 %v2775, %v2773
    %v3142 = vpack.c.b16 %v2776, %v2774
    %v3143 = vpack.c.b16 %v2779, %v2777
    %v3144 = vpack.c.b16 %v2780, %v2778
    %v3145 = vpack.c.b16 %v2783, %v2781
    %v3146 = vpack.c.b16 %v2784, %v2782
    %v3147 = vpack.c.b16 %v2787, %v2785
    %v3148 = vpack.c.b16 %v2788, %v2786
    %v3149 = vpack.c.b16 %v2791, %v2789
    %v3150 = vpack.c.b16 %v2792, %v2790
    %v3151 = vpack.c.b16 %v2795, %v2793
    %v3152 = vpack.c.b16 %v2796, %v2794
    %v3153 = vpack.c.b16 %v2799, %v2797
    %v3154 = vpack.c.b16 %v2800, %v2798
    %v3155 = vpack.c.b16 %v2803, %v2801
    %v3156 = vpack.c.b16 %v2804, %v2802
    %v3157 = vpack.c.b16 %v2807, %v2805
    %v3158 = vpack.c.b16 %v2808, %v2806
    %v3159 = vpack.c.b16 %v2811, %v2809
    %v3160 = vpack.c.b16 %v2812, %v2810
    %v3161 = vpack.c.b16 %v2815, %v2813
    %v3162 = vpack.c.b16 %v2816, %v2814
    %v3163 = vpack.c.b16 %v2819, %v2817
    %v3164 = vpack.c.b16 %v2820, %v2818
    %v3165 = vpack.c.b16 %v2823, %v2821
    %v3166 = vpack.c.b16 %v2824, %v2822
    %v3167 = vpack.c.b16 %v2827, %v2825
    %v3168 = vpack.c.b16 %v2828, %v2826
    %v3169 = vpack.c.b16 %v2831, %v2829
    %v3170 = vpack.c.b16 %v2832, %v2830
    %v3171 = vpack.c.b16 %v2835, %v2833
    %v3172 = vpack.c.b16 %v2836, %v2834
    %v3173 = vpack.c.b16 %v2839, %v2837
    %v3174 = vpack.c.b16 %v2840, %v2838
    %v3175 = vpack.c.b16 %v2843, %v2841
    %v3176 = vpack.c.b16 %v2844, %v2842
    %v3177 = vpack.c.b16 %v2847, %v2845
    %v3178 = vpack.c.b16 %v2848, %v2846
    %v3179 = vpack.c.b16 %v2851, %v2849
    %v3180 = vpack.c.b16 %v2852, %v2850
    %v3181 = vpack.c.b16 %v2855, %v2853
    %v3182 = vpack.c.b16 %v2856, %v2854
    %v3183 = vpack.c.b16 %v2859, %v2857
    %v3184 = vpack.c.b16 %v2860, %v2858
    %v3185 = vpack.c.b16 %v2863, %v2861
    %v3186 = vpack.c.b16 %v2864, %v2862
    %v3187 = vpack.c.b16 %v2867, %v2865
    %v3188 = vpack.c.b16 %v2868, %v2866
    %v3189 = vpack.c.b16 %v2871, %v2869
    %v3190 = vpack.c.b16 %v2872, %v2870
    %v3191 = vpack.c.b16 %v2875, %v2873
    %v3192 = vpack.c.b16 %v2876, %v2874
    %v3193 = vpack.c.b16 %v2879, %v2877
    %v3194 = vpack.c.b16 %v2880, %v2878
    %v3195 = vpack.c.b16 %v2883, %v2881
    %v3196 = vpack.c.b16 %v2884, %v2882
    %v3197 = vpack.c.b16 %v2887, %v2885
    %v3198 = vpack.c.b16 %v2888, %v2886
    %v3199 = vpack.c.b16 %v2891, %v2889
    %v3200 = vpack.c.b16 %v2892, %v2890
    %v3201 = vpack.c.b16 %v2895, %v2893
    %v3202 = vpack.c.b16 %v2896, %v2894
    %v3203 = vpack.c.b16 %v2899, %v2897
    %v3204 = vpack.c.b16 %v2900, %v2898
    %v3205 = vpack.c.b16 %v2903, %v2901
    %v3206 = vpack.c.b16 %v2904, %v2902
    %v3207 = vpack.c.b16 %v2907, %v2905
    %v3208 = vpack.c.b16 %v2908, %v2906
    %v3209 = vpack.c.b16 %v2911, %v2909
    %v3210 = vpack.c.b16 %v2912, %v2910
    %v3211 = vpack.c.b16 %v2915, %v2913
    %v3212 = vpack.c.b16 %v2916, %v2914
    %v3213 = vpack.c.b16 %v2919, %v2917
    %v3214 = vpack.c.b16 %v2920, %v2918
    %v3215 = vpack.c.b16 %v2923, %v2921
    %v3216 = vpack.c.b16 %v2924, %v2922
    %v3217 = vpack.c.b16 %v2927, %v2925
    %v3218 = vpack.c.b16 %v2928, %v2926
    %v3219 = vpack.c.b16 %v2931, %v2929
    %v3220 = vpack.c.b16 %v2932, %v2930
    %v3221 = vpack.c.b16 %v2935, %v2933
    %v3222 = vpack.c.b16 %v2936, %v2934
    %v3223 = vpack.c.b16 %v2939, %v2937
    %v3224 = vpack.c.b16 %v2940, %v2938
    %v3225 = vpack.c.b16 %v2943, %v2941
    %v3226 = vpack.c.b16 %v2944, %v2942
    %v3227 = vpack.c.b16 %v2947, %v2945
    %v3228 = vpack.c.b16 %v2948, %v2946
    %v3229 = vpack.c.b16 %v2951, %v2949
    %v3230 = vpack.c.b16 %v2952, %v2950
    %v3231 = vpack.c.b16 %v2955, %v2953
    %v3232 = vpack.c.b16 %v2956, %v2954
    %v3233 = vpack.c.b16 %v2959, %v2957
    %v3234 = vpack.c.b16 %v2960, %v2958
    %v3235 = vpack.c.b16 %v2963, %v2961
    %v3236 = vpack.c.b16 %v2964, %v2962
    %v3237 = vpack.c.b16 %v2967, %v2965
    %v3238 = vpack.c.b16 %v2968, %v2966
    %v3239 = vpack.c.b16 %v2971, %v2969
    %v3240 = vpack.c.b16 %v2972, %v2970
    %v3241 = vpack.c.b16 %v2975, %v2973
    %v3242 = vpack.c.b16 %v2976, %v2974
    %v3243 = vpack.c.b16 %v2979, %v2977
    %v3244 = vpack.c.b16 %v2980, %v2978
    %v3245 = vpack.c.b16 %v2983, %v2981
    %v3246 = vpack.c.b16 %v2984, %v2982
    %v3247 = vpack.c.b16 %v2987, %v2985
    %v3248 = vpack.c.b16 %v2988, %v2986
    %v3249 = vpack.c.b16 %v2991, %v2989
    %v3250 = vpack.c.b16 %v2992, %v2990
    %v3251 = vpack.c.b16 %v2995, %v2993
    %v3252 = vpack.c.b16 %v2996, %v2994
    %v3253 = vpack.c.b16 %v2999, %v2997
    %v3254 = vpack.c.b16 %v3000, %v2998
    %v3255 = vpack.c.b16 %v3003, %v3001
    %v3256 = vpack.c.b16 %v3004, %v3002
    %v3257 = vpack.c.b16 %v3007, %v3005
    %v3258 = vpack.c.b16 %v3008, %v3006
    %v3259 = vpack.c.b16 %v3011, %v3009
    %v3260 = vpack.c.b16 %v3012, %v3010
    %v3261 = vpack.c.b16 %v3015, %v3013
    %v3262 = vpack.c.b16 %v3016, %v3014
    %v3263 = vpack.c.b16 %v3019, %v3017
    %v3264 = vpack.c.b16 %v3020, %v3018
    %v3265 = vpack.c.b16 %v3023, %v3021
    %v3266 = vpack.c.b16 %v3024, %v3022
    %v3267 = vpack.c.b16 %v3027, %v3025
    %v3268 = vpack.c.b16 %v3028, %v3026
    %v3269 = vpack.c.b16 %v3031, %v3029
    %v3270 = vpack.c.b16 %v3032, %v3030
    %v3271 = vpack.c.b16 %v3035, %v3033
    %v3272 = vpack.c.b16 %v3036, %v3034
    %v3273 = vpack.c.b16 %v3039, %v3037
    %v3274 = vpack.c.b16 %v3040, %v3038
    %v3275 = vpack.c.b16 %v3043, %v3041
    %v3276 = vpack.c.b16 %v3044, %v3042
    %v3277 = vpack.c.b16 %v3047, %v3045
    %v3278 = vpack.c.b16 %v3048, %v3046
    %v3279 = vpack.c.b16 %v3051, %v3049
    %v3280 = vpack.c.b16 %v3052, %v3050
    %v3281 = vpack.c.b16 %v3055, %v3053
    %v3282 = vpack.c.b16 %v3056, %v3054
    %v3283 = vpack.c.b16 %v3059, %v3057
    %v3284 = vpack.c.b16 %v3060, %v3058
    %v3285 = vpack.c.b16 %v3063, %v3061
    %v3286 = vpack.c.b16 %v3064, %v3062
    %v3287 = vpack.c.b16 %v3067, %v3065
    %v3288 = vpack.c.b16 %v3068, %v3066
    %v3289 = vpack.c.b16 %v3071, %v3069
    %v3290 = vpack.c.b16 %v3072, %v3070
    %v3291 = vpack.c.b16 %v3075, %v3073
    %v3292 = vpack.c.b16 %v3076, %v3074
    %v3293 = vpack.c.b16 %v3079, %v3077
    %v3294 = vpack.c.b16 %v3080, %v3078
    %v3295 = vpack.c.b16 %v3083, %v3081
    %v3296 = vpack.c.b16 %v3084, %v3082
    %v3297 = vpack.c.b16 %v3087, %v3085
    %v3298 = vpack.c.b16 %v3088, %v3086
    %v3299 = vpack.c.b16 %v3091, %v3089
    %v3300 = vpack.c.b16 %v3092, %v3090
    %v3301 = vpack.c.b16 %v3095, %v3093
    %v3302 = vpack.c.b16 %v3096, %v3094
    %v3303 = vpack.c.b16 %v3099, %v3097
    %v3304 = vpack.c.b16 %v3100, %v3098
    %v3305 = vpack.c.b16 %v3103, %v3101
    %v3306 = vpack.c.b16 %v3104, %v3102
    %v3307 = vpack.c.b16 %v3107, %v3105
    %v3308 = vpack.c.b16 %v3108, %v3106
    %v3309 = vpack.c.b16 %v3111, %v3109
    %v3310 = vpack.c.b16 %v3112, %v3110
    %v3311 = vpack.c.b16 %v3115, %v3113
    %v3312 = vpack.c.b16 %v3116, %v3114
    %v3313 = vpack.c.b16 %v3119, %v3117
    %v3314 = vpack.c.b16 %v3120, %v3118
    %v3315 = vpack.c.b16 %v3123, %v3121
    %v3316 = vpack.c.b16 %v3124, %v3122
    %3509 = vmatprep.subr.bf16.mxu0 %v3126
    %3510 = vmatpush1.bf16.msra.mxu0 %v3125
    %3511 = vmatprep.subr.bf16.mxu0 %v3128
    %3512 = vmatpush1.bf16.msra.mxu0 %v3127
    %3513 = vmatprep.subr.bf16.mxu0 %v3130
    %3514 = vmatpush1.bf16.msra.mxu0 %v3129
    %3515 = vmatprep.subr.bf16.mxu0 %v3132
    %3516 = vmatpush1.bf16.msra.mxu0 %v3131
    %3517 = vmatprep.subr.bf16.mxu0 %v3134
    %3518 = vmatpush1.bf16.msra.mxu0 %v3133
    %3519 = vmatprep.subr.bf16.mxu0 %v3136
    %3520 = vmatpush1.bf16.msra.mxu0 %v3135
    %3521 = vmatprep.subr.bf16.mxu0 %v3138
    %3522 = vmatpush1.bf16.msra.mxu0 %v3137
    %3523 = vmatprep.subr.bf16.mxu0 %v3140
    %3524 = vmatpush1.bf16.msra.mxu0 %v3139
    %3525 = vmatprep.subr.bf16.mxu0 %v3142
    %3526 = vmatpush1.bf16.msra.mxu0 %v3141
    %3527 = vmatprep.subr.bf16.mxu0 %v3144
    %3528 = vmatpush1.bf16.msra.mxu0 %v3143
    %3529 = vmatprep.subr.bf16.mxu0 %v3146
    %3530 = vmatpush1.bf16.msra.mxu0 %v3145
    %3531 = vmatprep.subr.bf16.mxu0 %v3148
    %3532 = vmatpush1.bf16.msra.mxu0 %v3147
    %3533 = vmatprep.subr.bf16.mxu0 %v3150
    %3534 = vmatpush1.bf16.msra.mxu0 %v3149
    %3535 = vmatprep.subr.bf16.mxu0 %v3152
    %3536 = vmatpush1.bf16.msra.mxu0 %v3151
    %3537 = vmatprep.subr.bf16.mxu0 %v3154
    %3538 = vmatpush1.bf16.msra.mxu0 %v3153
    %3539 = vmatprep.subr.bf16.mxu0 %v3156
    %3540 = vmatpush1.bf16.msra.mxu0 %v3155
    %3541 = vmatprep.mubr.bf16.mxu0 %v2250
    %3542 = vmatmul.mubr.bf16.gmra.mrb[0].mxu0 %v2249
    %v3543 = vpop.f32.mrb[0].mxu0
    %v3544 = vadd.f32 %v2542, %v3543
    %v3545 = vpop.f32.mrb[0].mxu0
    %v3546 = vadd.f32 %v2546, %v3545
    %v3547 = vpop.f32.mrb[0].mxu0
    %v3548 = vadd.f32 %v2542, %v3547
    %v3549 = vpop.f32.mrb[0].mxu0
    %v3550 = vadd.f32 %v2546, %v3549
    %3551 = vmatprep.mubr.bf16.mxu0 %v2262
    %3552 = vmatmul.mubr.bf16.gmra.mrb[0].mxu0 %v2261
    %v3553 = vpop.f32.mrb[0].mxu0
    %v3554 = vadd.f32 %v2542, %v3553
    %v3555 = vpop.f32.mrb[0].mxu0
    %v3556 = vadd.f32 %v2546, %v3555
    %v3557 = vpop.f32.mrb[0].mxu0
    %v3558 = vadd.f32 %v2542, %v3557
    %v3559 = vpop.f32.mrb[0].mxu0
    %v3560 = vadd.f32 %v2546, %v3559
    %3561 = vmatprep.mubr.bf16.mxu0 %v2274
    %3562 = vmatmul.mubr.bf16.gmra.mrb[0].mxu0 %v2273
    %v3563 = vpop.f32.mrb[0].mxu0
    %v3564 = vadd.f32 %v2542, %v3563
    %v3565 = vpop.f32.mrb[0].mxu0
    %v3566 = vadd.f32 %v2546, %v3565
    %v3567 = vpop.f32.mrb[0].mxu0
    %v3568 = vadd.f32 %v2542, %v3567
    %v3569 = vpop.f32.mrb[0].mxu0
    %v3570 = vadd.f32 %v2546, %v3569
    %3571 = vmatprep.mubr.bf16.mxu0 %v2286
    %3572 = vmatmul.mubr.bf16.gmra.mrb[0].mxu0 %v2285
    %v3573 = vpop.f32.mrb[0].mxu0
    %v3574 = vadd.f32 %v2542, %v3573
    %v3575 = vpop.f32.mrb[0].mxu0
    %v3576 = vadd.f32 %v2546, %v3575
    %v3577 = vpop.f32.mrb[0].mxu0
    %v3578 = vadd.f32 %v2542, %v3577
    %v3579 = vpop.f32.mrb[0].mxu0
    %v3580 = vadd.f32 %v2546, %v3579
    %3581 = vmatprep.mubr.bf16.mxu0 %v2298
    %3582 = vmatmul.mubr.bf16.gmra.mrb[0].mxu0 %v2297
    %v3583 = vpop.f32.mrb[0].mxu0
    %v3584 = vadd.f32 %v2542, %v3583
    %v3585 = vpop.f32.mrb[0].mxu0
    %v3586 = vadd.f32 %v2546, %v3585
    %v3587 = vpop.f32.mrb[0].mxu0
    %v3588 = vadd.f32 %v2542, %v3587
    %v3589 = vpop.f32.mrb[0].mxu0
    %v3590 = vadd.f32 %v2546, %v3589
    %3591 = vmatprep.mubr.bf16.mxu0 %v2310
    %3592 = vmatmul.mubr.bf16.gmra.mrb[0].mxu0 %v2309
    %v3593 = vpop.f32.mrb[0].mxu0
    %v3594 = vadd.f32 %v2542, %v3593
    %v3595 = vpop.f32.mrb[0].mxu0
    %v3596 = vadd.f32 %v2546, %v3595
    %v3597 = vpop.f32.mrb[0].mxu0
    %v3598 = vadd.f32 %v2542, %v3597
    %v3599 = vpop.f32.mrb[0].mxu0
    %v3600 = vadd.f32 %v2546, %v3599
    %3601 = vmatprep.mubr.bf16.mxu0 %v2322
    %3602 = vmatmul.mubr.bf16.gmra.mrb[0].mxu0 %v2321
    %v3603 = vpop.f32.mrb[0].mxu0
    %v3604 = vadd.f32 %v2542, %v3603
    %v3605 = vpop.f32.mrb[0].mxu0
    %v3606 = vadd.f32 %v2546, %v3605
    %v3607 = vpop.f32.mrb[0].mxu0
    %v3608 = vadd.f32 %v2542, %v3607
    %v3609 = vpop.f32.mrb[0].mxu0
    %v3610 = vadd.f32 %v2546, %v3609
    %3611 = vmatprep.mubr.bf16.mxu0 %v2334
    %3612 = vmatmul.mubr.bf16.gmra.mrb[0].mxu0 %v2333
    %v3613 = vpop.f32.mrb[0].mxu0
    %v3614 = vadd.f32 %v2542, %v3613
    %v3615 = vpop.f32.mrb[0].mxu0
    %v3616 = vadd.f32 %v2546, %v3615
    %v3617 = vpop.f32.mrb[0].mxu0
    %v3618 = vadd.f32 %v2542, %v3617
    %v3619 = vpop.f32.mrb[0].mxu0
    %v3620 = vadd.f32 %v2546, %v3619
    %3621 = vdwg.mxu0
    %3622 = vmatprep.subr.bf16.mxu0 %v3158
    %3623 = vmatpush1.bf16.msra.mxu0 %v3157
    %3624 = vmatprep.subr.bf16.mxu0 %v3160
    %3625 = vmatpush1.bf16.msra.mxu0 %v3159
    %3626 = vmatprep.subr.bf16.mxu0 %v3162
    %3627 = vmatpush1.bf16.msra.mxu0 %v3161
    %3628 = vmatprep.subr.bf16.mxu0 %v3164
    %3629 = vmatpush1.bf16.msra.mxu0 %v3163
    %3630 = vmatprep.subr.bf16.mxu0 %v3166
    %3631 = vmatpush1.bf16.msra.mxu0 %v3165
    %3632 = vmatprep.subr.bf16.mxu0 %v3168
    %3633 = vmatpush1.bf16.msra.mxu0 %v3167
    %3634 = vmatprep.subr.bf16.mxu0 %v3170
    %3635 = vmatpush1.bf16.msra.mxu0 %v3169
    %3636 = vmatprep.subr.bf16.mxu0 %v3172
    %3637 = vmatpush1.bf16.msra.mxu0 %v3171
    %3638 = vmatprep.subr.bf16.mxu0 %v3174
    %3639 = vmatpush1.bf16.msra.mxu0 %v3173
    %3640 = vmatprep.subr.bf16.mxu0 %v3176
    %3641 = vmatpush1.bf16.msra.mxu0 %v3175
    %3642 = vmatprep.subr.bf16.mxu0 %v3178
    %3643 = vmatpush1.bf16.msra.mxu0 %v3177
    %3644 = vmatprep.subr.bf16.mxu0 %v3180
    %3645 = vmatpush1.bf16.msra.mxu0 %v3179
    %3646 = vmatprep.subr.bf16.mxu0 %v3182
    %3647 = vmatpush1.bf16.msra.mxu0 %v3181
    %3648 = vmatprep.subr.bf16.mxu0 %v3184
    %3649 = vmatpush1.bf16.msra.mxu0 %v3183
    %3650 = vmatprep.subr.bf16.mxu0 %v3186
    %3651 = vmatpush1.bf16.msra.mxu0 %v3185
    %3652 = vmatprep.subr.bf16.mxu0 %v3188
    %3653 = vmatpush1.bf16.msra.mxu0 %v3187
    %3654 = vmatprep.mubr.bf16.mxu0 %v2252
    %3655 = vmatmul.mubr.bf16.gmra.mrb[0].mxu0 %v2251
    %v3656 = vpop.f32.mrb[0].mxu0
    %v3657 = vadd.f32 %v3544, %v3656
    %v3658 = vpop.f32.mrb[0].mxu0
    %v3659 = vadd.f32 %v3546, %v3658
    %v3660 = vpop.f32.mrb[0].mxu0
    %v3661 = vadd.f32 %v3548, %v3660
    %v3662 = vpop.f32.mrb[0].mxu0
    %v3663 = vadd.f32 %v3550, %v3662
    %3664 = vmatprep.mubr.bf16.mxu0 %v2264
    %3665 = vmatmul.mubr.bf16.gmra.mrb[0].mxu0 %v2263
    %v3666 = vpop.f32.mrb[0].mxu0
    %v3667 = vadd.f32 %v3554, %v3666
    %v3668 = vpop.f32.mrb[0].mxu0
    %v3669 = vadd.f32 %v3556, %v3668
    %v3670 = vpop.f32.mrb[0].mxu0
    %v3671 = vadd.f32 %v3558, %v3670
    %v3672 = vpop.f32.mrb[0].mxu0
    %v3673 = vadd.f32 %v3560, %v3672
    %3674 = vmatprep.mubr.bf16.mxu0 %v2276
    %3675 = vmatmul.mubr.bf16.gmra.mrb[0].mxu0 %v2275
    %v3676 = vpop.f32.mrb[0].mxu0
    %v3677 = vadd.f32 %v3564, %v3676
    %v3678 = vpop.f32.mrb[0].mxu0
    %v3679 = vadd.f32 %v3566, %v3678
    %v3680 = vpop.f32.mrb[0].mxu0
    %v3681 = vadd.f32 %v3568, %v3680
    %v3682 = vpop.f32.mrb[0].mxu0
    %v3683 = vadd.f32 %v3570, %v3682
    %3684 = vmatprep.mubr.bf16.mxu0 %v2288
    %3685 = vmatmul.mubr.bf16.gmra.mrb[0].mxu0 %v2287
    %v3686 = vpop.f32.mrb[0].mxu0
    %v3687 = vadd.f32 %v3574, %v3686
    %v3688 = vpop.f32.mrb[0].mxu0
    %v3689 = vadd.f32 %v3576, %v3688
    %v3690 = vpop.f32.mrb[0].mxu0
    %v3691 = vadd.f32 %v3578, %v3690
    %v3692 = vpop.f32.mrb[0].mxu0
    %v3693 = vadd.f32 %v3580, %v3692
    %3694 = vmatprep.mubr.bf16.mxu0 %v2300
    %3695 = vmatmul.mubr.bf16.gmra.mrb[0].mxu0 %v2299
    %v3696 = vpop.f32.mrb[0].mxu0
    %v3697 = vadd.f32 %v3584, %v3696
    %v3698 = vpop.f32.mrb[0].mxu0
    %v3699 = vadd.f32 %v3586, %v3698
    %v3700 = vpop.f32.mrb[0].mxu0
    %v3701 = vadd.f32 %v3588, %v3700
    %v3702 = vpop.f32.mrb[0].mxu0
    %v3703 = vadd.f32 %v3590, %v3702
    %3704 = vmatprep.mubr.bf16.mxu0 %v2312
    %3705 = vmatmul.mubr.bf16.gmra.mrb[0].mxu0 %v2311
    %v3706 = vpop.f32.mrb[0].mxu0
    %v3707 = vadd.f32 %v3594, %v3706
    %v3708 = vpop.f32.mrb[0].mxu0
    %v3709 = vadd.f32 %v3596, %v3708
    %v3710 = vpop.f32.mrb[0].mxu0
    %v3711 = vadd.f32 %v3598, %v3710
    %v3712 = vpop.f32.mrb[0].mxu0
    %v3713 = vadd.f32 %v3600, %v3712
    %3714 = vmatprep.mubr.bf16.mxu0 %v2324
    %3715 = vmatmul.mubr.bf16.gmra.mrb[0].mxu0 %v2323
    %v3716 = vpop.f32.mrb[0].mxu0
    %v3717 = vadd.f32 %v3604, %v3716
    %v3718 = vpop.f32.mrb[0].mxu0
    %v3719 = vadd.f32 %v3606, %v3718
    %v3720 = vpop.f32.mrb[0].mxu0
    %v3721 = vadd.f32 %v3608, %v3720
    %v3722 = vpop.f32.mrb[0].mxu0
    %v3723 = vadd.f32 %v3610, %v3722
    %3724 = vmatprep.mubr.bf16.mxu0 %v2336
    %3725 = vmatmul.mubr.bf16.gmra.mrb[0].mxu0 %v2335
    %v3726 = vpop.f32.mrb[0].mxu0
    %v3727 = vadd.f32 %v3614, %v3726
    %v3728 = vpop.f32.mrb[0].mxu0
    %v3729 = vadd.f32 %v3616, %v3728
    %v3730 = vpop.f32.mrb[0].mxu0
    %v3731 = vadd.f32 %v3618, %v3730
    %v3732 = vpop.f32.mrb[0].mxu0
    %v3733 = vadd.f32 %v3620, %v3732
    %3734 = vdwg.mxu0
    %3735 = vmatprep.subr.bf16.mxu0 %v3190
    %3736 = vmatpush1.bf16.msra.mxu0 %v3189
    %3737 = vmatprep.subr.bf16.mxu0 %v3192
    %3738 = vmatpush1.bf16.msra.mxu0 %v3191
    %3739 = vmatprep.subr.bf16.mxu0 %v3194
    %3740 = vmatpush1.bf16.msra.mxu0 %v3193
    %3741 = vmatprep.subr.bf16.mxu0 %v3196
    %3742 = vmatpush1.bf16.msra.mxu0 %v3195
    %3743 = vmatprep.subr.bf16.mxu0 %v3198
    %3744 = vmatpush1.bf16.msra.mxu0 %v3197
    %3745 = vmatprep.subr.bf16.mxu0 %v3200
    %3746 = vmatpush1.bf16.msra.mxu0 %v3199
    %3747 = vmatprep.subr.bf16.mxu0 %v3202
    %3748 = vmatpush1.bf16.msra.mxu0 %v3201
    %3749 = vmatprep.subr.bf16.mxu0 %v3204
    %3750 = vmatpush1.bf16.msra.mxu0 %v3203
    %3751 = vmatprep.subr.bf16.mxu0 %v3206
    %3752 = vmatpush1.bf16.msra.mxu0 %v3205
    %3753 = vmatprep.subr.bf16.mxu0 %v3208
    %3754 = vmatpush1.bf16.msra.mxu0 %v3207
    %3755 = vmatprep.subr.bf16.mxu0 %v3210
    %3756 = vmatpush1.bf16.msra.mxu0 %v3209
    %3757 = vmatprep.subr.bf16.mxu0 %v3212
    %3758 = vmatpush1.bf16.msra.mxu0 %v3211
    %3759 = vmatprep.subr.bf16.mxu0 %v3214
    %3760 = vmatpush1.bf16.msra.mxu0 %v3213
    %3761 = vmatprep.subr.bf16.mxu0 %v3216
    %3762 = vmatpush1.bf16.msra.mxu0 %v3215
    %3763 = vmatprep.subr.bf16.mxu0 %v3218
    %3764 = vmatpush1.bf16.msra.mxu0 %v3217
    %3765 = vmatprep.subr.bf16.mxu0 %v3220
    %3766 = vmatpush1.bf16.msra.mxu0 %v3219
    %3767 = vmatprep.mubr.bf16.mxu0 %v2254
    %3768 = vmatmul.mubr.bf16.gmra.mrb[0].mxu0 %v2253
    %v3769 = vpop.f32.mrb[0].mxu0
    %v3770 = vadd.f32 %v3657, %v3769
    %v3771 = vpop.f32.mrb[0].mxu0
    %v3772 = vadd.f32 %v3659, %v3771
    %v3773 = vpop.f32.mrb[0].mxu0
    %v3774 = vadd.f32 %v3661, %v3773
    %v3775 = vpop.f32.mrb[0].mxu0
    %v3776 = vadd.f32 %v3663, %v3775
    %3777 = vmatprep.mubr.bf16.mxu0 %v2266
    %3778 = vmatmul.mubr.bf16.gmra.mrb[0].mxu0 %v2265
    %v3779 = vpop.f32.mrb[0].mxu0
    %v3780 = vadd.f32 %v3667, %v3779
    %v3781 = vpop.f32.mrb[0].mxu0
    %v3782 = vadd.f32 %v3669, %v3781
    %v3783 = vpop.f32.mrb[0].mxu0
    %v3784 = vadd.f32 %v3671, %v3783
    %v3785 = vpop.f32.mrb[0].mxu0
    %v3786 = vadd.f32 %v3673, %v3785
    %3787 = vmatprep.mubr.bf16.mxu0 %v2278
    %3788 = vmatmul.mubr.bf16.gmra.mrb[0].mxu0 %v2277
    %v3789 = vpop.f32.mrb[0].mxu0
    %v3790 = vadd.f32 %v3677, %v3789
    %v3791 = vpop.f32.mrb[0].mxu0
    %v3792 = vadd.f32 %v3679, %v3791
    %v3793 = vpop.f32.mrb[0].mxu0
    %v3794 = vadd.f32 %v3681, %v3793
    %v3795 = vpop.f32.mrb[0].mxu0
    %v3796 = vadd.f32 %v3683, %v3795
    %3797 = vmatprep.mubr.bf16.mxu0 %v2290
    %3798 = vmatmul.mubr.bf16.gmra.mrb[0].mxu0 %v2289
    %v3799 = vpop.f32.mrb[0].mxu0
    %v3800 = vadd.f32 %v3687, %v3799
    %v3801 = vpop.f32.mrb[0].mxu0
    %v3802 = vadd.f32 %v3689, %v3801
    %v3803 = vpop.f32.mrb[0].mxu0
    %v3804 = vadd.f32 %v3691, %v3803
    %v3805 = vpop.f32.mrb[0].mxu0
    %v3806 = vadd.f32 %v3693, %v3805
    %3807 = vmatprep.mubr.bf16.mxu0 %v2302
    %3808 = vmatmul.mubr.bf16.gmra.mrb[0].mxu0 %v2301
    %v3809 = vpop.f32.mrb[0].mxu0
    %v3810 = vadd.f32 %v3697, %v3809
    %v3811 = vpop.f32.mrb[0].mxu0
    %v3812 = vadd.f32 %v3699, %v3811
    %v3813 = vpop.f32.mrb[0].mxu0
    %v3814 = vadd.f32 %v3701, %v3813
    %v3815 = vpop.f32.mrb[0].mxu0
    %v3816 = vadd.f32 %v3703, %v3815
    %3817 = vmatprep.mubr.bf16.mxu0 %v2314
    %3818 = vmatmul.mubr.bf16.gmra.mrb[0].mxu0 %v2313
    %v3819 = vpop.f32.mrb[0].mxu0
    %v3820 = vadd.f32 %v3707, %v3819
    %v3821 = vpop.f32.mrb[0].mxu0
    %v3822 = vadd.f32 %v3709, %v3821
    %v3823 = vpop.f32.mrb[0].mxu0
    %v3824 = vadd.f32 %v3711, %v3823
    %v3825 = vpop.f32.mrb[0].mxu0
    %v3826 = vadd.f32 %v3713, %v3825
    %3827 = vmatprep.mubr.bf16.mxu0 %v2326
    %3828 = vmatmul.mubr.bf16.gmra.mrb[0].mxu0 %v2325
    %v3829 = vpop.f32.mrb[0].mxu0
    %v3830 = vadd.f32 %v3717, %v3829
    %v3831 = vpop.f32.mrb[0].mxu0
    %v3832 = vadd.f32 %v3719, %v3831
    %v3833 = vpop.f32.mrb[0].mxu0
    %v3834 = vadd.f32 %v3721, %v3833
    %v3835 = vpop.f32.mrb[0].mxu0
    %v3836 = vadd.f32 %v3723, %v3835
    %3837 = vmatprep.mubr.bf16.mxu0 %v2338
    %3838 = vmatmul.mubr.bf16.gmra.mrb[0].mxu0 %v2337
    %v3839 = vpop.f32.mrb[0].mxu0
    %v3840 = vadd.f32 %v3727, %v3839
    %v3841 = vpop.f32.mrb[0].mxu0
    %v3842 = vadd.f32 %v3729, %v3841
    %v3843 = vpop.f32.mrb[0].mxu0
    %v3844 = vadd.f32 %v3731, %v3843
    %v3845 = vpop.f32.mrb[0].mxu0
    %v3846 = vadd.f32 %v3733, %v3845
    %3847 = vdwg.mxu0
    %3848 = vmatprep.subr.bf16.mxu0 %v3222
    %3849 = vmatpush1.bf16.msra.mxu0 %v3221
    %3850 = vmatprep.subr.bf16.mxu0 %v3224
    %3851 = vmatpush1.bf16.msra.mxu0 %v3223
    %3852 = vmatprep.subr.bf16.mxu0 %v3226
    %3853 = vmatpush1.bf16.msra.mxu0 %v3225
    %3854 = vmatprep.subr.bf16.mxu0 %v3228
    %3855 = vmatpush1.bf16.msra.mxu0 %v3227
    %3856 = vmatprep.subr.bf16.mxu0 %v3230
    %3857 = vmatpush1.bf16.msra.mxu0 %v3229
    %3858 = vmatprep.subr.bf16.mxu0 %v3232
    %3859 = vmatpush1.bf16.msra.mxu0 %v3231
    %3860 = vmatprep.subr.bf16.mxu0 %v3234
    %3861 = vmatpush1.bf16.msra.mxu0 %v3233
    %3862 = vmatprep.subr.bf16.mxu0 %v3236
    %3863 = vmatpush1.bf16.msra.mxu0 %v3235
    %3864 = vmatprep.subr.bf16.mxu0 %v3238
    %3865 = vmatpush1.bf16.msra.mxu0 %v3237
    %3866 = vmatprep.subr.bf16.mxu0 %v3240
    %3867 = vmatpush1.bf16.msra.mxu0 %v3239
    %3868 = vmatprep.subr.bf16.mxu0 %v3242
    %3869 = vmatpush1.bf16.msra.mxu0 %v3241
    %3870 = vmatprep.subr.bf16.mxu0 %v3244
    %3871 = vmatpush1.bf16.msra.mxu0 %v3243
    %3872 = vmatprep.subr.bf16.mxu0 %v3246
    %3873 = vmatpush1.bf16.msra.mxu0 %v3245
    %3874 = vmatprep.subr.bf16.mxu0 %v3248
    %3875 = vmatpush1.bf16.msra.mxu0 %v3247
    %3876 = vmatprep.subr.bf16.mxu0 %v3250
    %3877 = vmatpush1.bf16.msra.mxu0 %v3249
    %3878 = vmatprep.subr.bf16.mxu0 %v3252
    %3879 = vmatpush1.bf16.msra.mxu0 %v3251
    %3880 = vmatprep.mubr.bf16.mxu0 %v2256
    %3881 = vmatmul.mubr.bf16.gmra.mrb[0].mxu0 %v2255
    %v3882 = vpop.f32.mrb[0].mxu0
    %v3883 = vadd.f32 %v3770, %v3882
    %v3884 = vpop.f32.mrb[0].mxu0
    %v3885 = vadd.f32 %v3772, %v3884
    %v3886 = vpop.f32.mrb[0].mxu0
    %v3887 = vadd.f32 %v3774, %v3886
    %v3888 = vpop.f32.mrb[0].mxu0
    %v3889 = vadd.f32 %v3776, %v3888
    %3890 = vmatprep.mubr.bf16.mxu0 %v2268
    %3891 = vmatmul.mubr.bf16.gmra.mrb[0].mxu0 %v2267
    %v3892 = vpop.f32.mrb[0].mxu0
    %v3893 = vadd.f32 %v3780, %v3892
    %v3894 = vpop.f32.mrb[0].mxu0
    %v3895 = vadd.f32 %v3782, %v3894
    %v3896 = vpop.f32.mrb[0].mxu0
    %v3897 = vadd.f32 %v3784, %v3896
    %v3898 = vpop.f32.mrb[0].mxu0
    %v3899 = vadd.f32 %v3786, %v3898
    %3900 = vmatprep.mubr.bf16.mxu0 %v2280
    %3901 = vmatmul.mubr.bf16.gmra.mrb[0].mxu0 %v2279
    %v3902 = vpop.f32.mrb[0].mxu0
    %v3903 = vadd.f32 %v3790, %v3902
    %v3904 = vpop.f32.mrb[0].mxu0
    %v3905 = vadd.f32 %v3792, %v3904
    %v3906 = vpop.f32.mrb[0].mxu0
    %v3907 = vadd.f32 %v3794, %v3906
    %v3908 = vpop.f32.mrb[0].mxu0
    %v3909 = vadd.f32 %v3796, %v3908
    %3910 = vmatprep.mubr.bf16.mxu0 %v2292
    %3911 = vmatmul.mubr.bf16.gmra.mrb[0].mxu0 %v2291
    %v3912 = vpop.f32.mrb[0].mxu0
    %v3913 = vadd.f32 %v3800, %v3912
    %v3914 = vpop.f32.mrb[0].mxu0
    %v3915 = vadd.f32 %v3802, %v3914
    %v3916 = vpop.f32.mrb[0].mxu0
    %v3917 = vadd.f32 %v3804, %v3916
    %v3918 = vpop.f32.mrb[0].mxu0
    %v3919 = vadd.f32 %v3806, %v3918
    %3920 = vmatprep.mubr.bf16.mxu0 %v2304
    %3921 = vmatmul.mubr.bf16.gmra.mrb[0].mxu0 %v2303
    %v3922 = vpop.f32.mrb[0].mxu0
    %v3923 = vadd.f32 %v3810, %v3922
    %v3924 = vpop.f32.mrb[0].mxu0
    %v3925 = vadd.f32 %v3812, %v3924
    %v3926 = vpop.f32.mrb[0].mxu0
    %v3927 = vadd.f32 %v3814, %v3926
    %v3928 = vpop.f32.mrb[0].mxu0
    %v3929 = vadd.f32 %v3816, %v3928
    %3930 = vmatprep.mubr.bf16.mxu0 %v2316
    %3931 = vmatmul.mubr.bf16.gmra.mrb[0].mxu0 %v2315
    %v3932 = vpop.f32.mrb[0].mxu0
    %v3933 = vadd.f32 %v3820, %v3932
    %v3934 = vpop.f32.mrb[0].mxu0
    %v3935 = vadd.f32 %v3822, %v3934
    %v3936 = vpop.f32.mrb[0].mxu0
    %v3937 = vadd.f32 %v3824, %v3936
    %v3938 = vpop.f32.mrb[0].mxu0
    %v3939 = vadd.f32 %v3826, %v3938
    %3940 = vmatprep.mubr.bf16.mxu0 %v2328
    %3941 = vmatmul.mubr.bf16.gmra.mrb[0].mxu0 %v2327
    %v3942 = vpop.f32.mrb[0].mxu0
    %v3943 = vadd.f32 %v3830, %v3942
    %v3944 = vpop.f32.mrb[0].mxu0
    %v3945 = vadd.f32 %v3832, %v3944
    %v3946 = vpop.f32.mrb[0].mxu0
    %v3947 = vadd.f32 %v3834, %v3946
    %v3948 = vpop.f32.mrb[0].mxu0
    %v3949 = vadd.f32 %v3836, %v3948
    %3950 = vmatprep.mubr.bf16.mxu0 %v2340
    %3951 = vmatmul.mubr.bf16.gmra.mrb[0].mxu0 %v2339
    %v3952 = vpop.f32.mrb[0].mxu0
    %v3953 = vadd.f32 %v3840, %v3952
    %v3954 = vpop.f32.mrb[0].mxu0
    %v3955 = vadd.f32 %v3842, %v3954
    %v3956 = vpop.f32.mrb[0].mxu0
    %v3957 = vadd.f32 %v3844, %v3956
    %v3958 = vpop.f32.mrb[0].mxu0
    %v3959 = vadd.f32 %v3846, %v3958
    %3960 = vdwg.mxu0
    %3961 = vmatprep.subr.bf16.mxu0 %v3254
    %3962 = vmatpush1.bf16.msra.mxu0 %v3253
    %3963 = vmatprep.subr.bf16.mxu0 %v3256
    %3964 = vmatpush1.bf16.msra.mxu0 %v3255
    %3965 = vmatprep.subr.bf16.mxu0 %v3258
    %3966 = vmatpush1.bf16.msra.mxu0 %v3257
    %3967 = vmatprep.subr.bf16.mxu0 %v3260
    %3968 = vmatpush1.bf16.msra.mxu0 %v3259
    %3969 = vmatprep.subr.bf16.mxu0 %v3262
    %3970 = vmatpush1.bf16.msra.mxu0 %v3261
    %3971 = vmatprep.subr.bf16.mxu0 %v3264
    %3972 = vmatpush1.bf16.msra.mxu0 %v3263
    %3973 = vmatprep.subr.bf16.mxu0 %v3266
    %3974 = vmatpush1.bf16.msra.mxu0 %v3265
    %3975 = vmatprep.subr.bf16.mxu0 %v3268
    %3976 = vmatpush1.bf16.msra.mxu0 %v3267
    %3977 = vmatprep.subr.bf16.mxu0 %v3270
    %3978 = vmatpush1.bf16.msra.mxu0 %v3269
    %3979 = vmatprep.subr.bf16.mxu0 %v3272
    %3980 = vmatpush1.bf16.msra.mxu0 %v3271
    %3981 = vmatprep.subr.bf16.mxu0 %v3274
    %3982 = vmatpush1.bf16.msra.mxu0 %v3273
    %3983 = vmatprep.subr.bf16.mxu0 %v3276
    %3984 = vmatpush1.bf16.msra.mxu0 %v3275
    %3985 = vmatprep.subr.bf16.mxu0 %v3278
    %3986 = vmatpush1.bf16.msra.mxu0 %v3277
    %3987 = vmatprep.subr.bf16.mxu0 %v3280
    %3988 = vmatpush1.bf16.msra.mxu0 %v3279
    %3989 = vmatprep.subr.bf16.mxu0 %v3282
    %3990 = vmatpush1.bf16.msra.mxu0 %v3281
    %3991 = vmatprep.subr.bf16.mxu0 %v3284
    %3992 = vmatpush1.bf16.msra.mxu0 %v3283
    %3993 = vmatprep.mubr.bf16.mxu0 %v2258
    %3994 = vmatmul.mubr.bf16.gmra.mrb[0].mxu0 %v2257
    %v3995 = vpop.f32.mrb[0].mxu0
    %v3996 = vadd.f32 %v3883, %v3995
    %v3997 = vpop.f32.mrb[0].mxu0
    %v3998 = vadd.f32 %v3885, %v3997
    %v3999 = vpop.f32.mrb[0].mxu0
    %v4000 = vadd.f32 %v3887, %v3999
    %v4001 = vpop.f32.mrb[0].mxu0
    %v4002 = vadd.f32 %v3889, %v4001
    %4003 = vmatprep.mubr.bf16.mxu0 %v2270
    %4004 = vmatmul.mubr.bf16.gmra.mrb[0].mxu0 %v2269
    %v4005 = vpop.f32.mrb[0].mxu0
    %v4006 = vadd.f32 %v3893, %v4005
    %v4007 = vpop.f32.mrb[0].mxu0
    %v4008 = vadd.f32 %v3895, %v4007
    %v4009 = vpop.f32.mrb[0].mxu0
    %v4010 = vadd.f32 %v3897, %v4009
    %v4011 = vpop.f32.mrb[0].mxu0
    %v4012 = vadd.f32 %v3899, %v4011
    %4013 = vmatprep.mubr.bf16.mxu0 %v2282
    %4014 = vmatmul.mubr.bf16.gmra.mrb[0].mxu0 %v2281
    %v4015 = vpop.f32.mrb[0].mxu0
    %v4016 = vadd.f32 %v3903, %v4015
    %v4017 = vpop.f32.mrb[0].mxu0
    %v4018 = vadd.f32 %v3905, %v4017
    %v4019 = vpop.f32.mrb[0].mxu0
    %v4020 = vadd.f32 %v3907, %v4019
    %v4021 = vpop.f32.mrb[0].mxu0
    %v4022 = vadd.f32 %v3909, %v4021
    %4023 = vmatprep.mubr.bf16.mxu0 %v2294
    %4024 = vmatmul.mubr.bf16.gmra.mrb[0].mxu0 %v2293
    %v4025 = vpop.f32.mrb[0].mxu0
    %v4026 = vadd.f32 %v3913, %v4025
    %v4027 = vpop.f32.mrb[0].mxu0
    %v4028 = vadd.f32 %v3915, %v4027
    %v4029 = vpop.f32.mrb[0].mxu0
    %v4030 = vadd.f32 %v3917, %v4029
    %v4031 = vpop.f32.mrb[0].mxu0
    %v4032 = vadd.f32 %v3919, %v4031
    %4033 = vmatprep.mubr.bf16.mxu0 %v2306
    %4034 = vmatmul.mubr.bf16.gmra.mrb[0].mxu0 %v2305
    %v4035 = vpop.f32.mrb[0].mxu0
    %v4036 = vadd.f32 %v3923, %v4035
    %v4037 = vpop.f32.mrb[0].mxu0
    %v4038 = vadd.f32 %v3925, %v4037
    %v4039 = vpop.f32.mrb[0].mxu0
    %v4040 = vadd.f32 %v3927, %v4039
    %v4041 = vpop.f32.mrb[0].mxu0
    %v4042 = vadd.f32 %v3929, %v4041
    %4043 = vmatprep.mubr.bf16.mxu0 %v2318
    %4044 = vmatmul.mubr.bf16.gmra.mrb[0].mxu0 %v2317
    %v4045 = vpop.f32.mrb[0].mxu0
    %v4046 = vadd.f32 %v3933, %v4045
    %v4047 = vpop.f32.mrb[0].mxu0
    %v4048 = vadd.f32 %v3935, %v4047
    %v4049 = vpop.f32.mrb[0].mxu0
    %v4050 = vadd.f32 %v3937, %v4049
    %v4051 = vpop.f32.mrb[0].mxu0
    %v4052 = vadd.f32 %v3939, %v4051
    %4053 = vmatprep.mubr.bf16.mxu0 %v2330
    %4054 = vmatmul.mubr.bf16.gmra.mrb[0].mxu0 %v2329
    %v4055 = vpop.f32.mrb[0].mxu0
    %v4056 = vadd.f32 %v3943, %v4055
    %v4057 = vpop.f32.mrb[0].mxu0
    %v4058 = vadd.f32 %v3945, %v4057
    %v4059 = vpop.f32.mrb[0].mxu0
    %v4060 = vadd.f32 %v3947, %v4059
    %v4061 = vpop.f32.mrb[0].mxu0
    %v4062 = vadd.f32 %v3949, %v4061
    %4063 = vmatprep.mubr.bf16.mxu0 %v2342
    %4064 = vmatmul.mubr.bf16.gmra.mrb[0].mxu0 %v2341
    %v4065 = vpop.f32.mrb[0].mxu0
    %v4066 = vadd.f32 %v3953, %v4065
    %v4067 = vpop.f32.mrb[0].mxu0
    %v4068 = vadd.f32 %v3955, %v4067
    %v4069 = vpop.f32.mrb[0].mxu0
    %v4070 = vadd.f32 %v3957, %v4069
    %v4071 = vpop.f32.mrb[0].mxu0
    %v4072 = vadd.f32 %v3959, %v4071
    %4073 = vdwg.mxu0
    %4074 = vmatprep.subr.bf16.mxu0 %v3286
    %4075 = vmatpush1.bf16.msra.mxu0 %v3285
    %4076 = vmatprep.subr.bf16.mxu0 %v3288
    %4077 = vmatpush1.bf16.msra.mxu0 %v3287
    %4078 = vmatprep.subr.bf16.mxu0 %v3290
    %4079 = vmatpush1.bf16.msra.mxu0 %v3289
    %4080 = vmatprep.subr.bf16.mxu0 %v3292
    %4081 = vmatpush1.bf16.msra.mxu0 %v3291
    %4082 = vmatprep.subr.bf16.mxu0 %v3294
    %4083 = vmatpush1.bf16.msra.mxu0 %v3293
    %4084 = vmatprep.subr.bf16.mxu0 %v3296
    %4085 = vmatpush1.bf16.msra.mxu0 %v3295
    %4086 = vmatprep.subr.bf16.mxu0 %v3298
    %4087 = vmatpush1.bf16.msra.mxu0 %v3297
    %4088 = vmatprep.subr.bf16.mxu0 %v3300
    %4089 = vmatpush1.bf16.msra.mxu0 %v3299
    %4090 = vmatprep.subr.bf16.mxu0 %v3302
    %4091 = vmatpush1.bf16.msra.mxu0 %v3301
    %4092 = vmatprep.subr.bf16.mxu0 %v3304
    %4093 = vmatpush1.bf16.msra.mxu0 %v3303
    %4094 = vmatprep.subr.bf16.mxu0 %v3306
    %4095 = vmatpush1.bf16.msra.mxu0 %v3305
    %4096 = vmatprep.subr.bf16.mxu0 %v3308
    %4097 = vmatpush1.bf16.msra.mxu0 %v3307
    %4098 = vmatprep.subr.bf16.mxu0 %v3310
    %4099 = vmatpush1.bf16.msra.mxu0 %v3309
    %4100 = vmatprep.subr.bf16.mxu0 %v3312
    %4101 = vmatpush1.bf16.msra.mxu0 %v3311
    %4102 = vmatprep.subr.bf16.mxu0 %v3314
    %4103 = vmatpush1.bf16.msra.mxu0 %v3313
    %4104 = vmatprep.subr.bf16.mxu0 %v3316
    %4105 = vmatpush1.bf16.msra.mxu0 %v3315
    %4106 = vmatprep.mubr.bf16.mxu0 %v2260
    %4107 = vmatmul.mubr.bf16.gmra.mrb[0].mxu0 %v2259
    %v4108 = vpop.f32.mrb[0].mxu0
    %v4109 = vadd.f32 %v3996, %v4108
    %v4110 = vpop.f32.mrb[0].mxu0
    %v4111 = vadd.f32 %v3998, %v4110
    %v4112 = vpop.f32.mrb[0].mxu0
    %v4113 = vadd.f32 %v4000, %v4112
    %v4114 = vpop.f32.mrb[0].mxu0
    %v4115 = vadd.f32 %v4002, %v4114
    %4116 = vmatprep.mubr.bf16.mxu0 %v2272
    %4117 = vmatmul.mubr.bf16.gmra.mrb[0].mxu0 %v2271
    %v4118 = vpop.f32.mrb[0].mxu0
    %v4119 = vadd.f32 %v4006, %v4118
    %v4120 = vpop.f32.mrb[0].mxu0
    %v4121 = vadd.f32 %v4008, %v4120
    %v4122 = vpop.f32.mrb[0].mxu0
    %v4123 = vadd.f32 %v4010, %v4122
    %v4124 = vpop.f32.mrb[0].mxu0
    %v4125 = vadd.f32 %v4012, %v4124
    %4126 = vmatprep.mubr.bf16.mxu0 %v2284
    %4127 = vmatmul.mubr.bf16.gmra.mrb[0].mxu0 %v2283
    %v4128 = vpop.f32.mrb[0].mxu0
    %v4129 = vadd.f32 %v4016, %v4128
    %v4130 = vpop.f32.mrb[0].mxu0
    %v4131 = vadd.f32 %v4018, %v4130
    %v4132 = vpop.f32.mrb[0].mxu0
    %v4133 = vadd.f32 %v4020, %v4132
    %v4134 = vpop.f32.mrb[0].mxu0
    %v4135 = vadd.f32 %v4022, %v4134
    %4136 = vmatprep.mubr.bf16.mxu0 %v2296
    %4137 = vmatmul.mubr.bf16.gmra.mrb[0].mxu0 %v2295
    %v4138 = vpop.f32.mrb[0].mxu0
    %v4139 = vadd.f32 %v4026, %v4138
    %v4140 = vpop.f32.mrb[0].mxu0
    %v4141 = vadd.f32 %v4028, %v4140
    %v4142 = vpop.f32.mrb[0].mxu0
    %v4143 = vadd.f32 %v4030, %v4142
    %v4144 = vpop.f32.mrb[0].mxu0
    %v4145 = vadd.f32 %v4032, %v4144
    %4146 = vmatprep.mubr.bf16.mxu0 %v2308
    %4147 = vmatmul.mubr.bf16.gmra.mrb[0].mxu0 %v2307
    %v4148 = vpop.f32.mrb[0].mxu0
    %v4149 = vadd.f32 %v4036, %v4148
    %v4150 = vpop.f32.mrb[0].mxu0
    %v4151 = vadd.f32 %v4038, %v4150
    %v4152 = vpop.f32.mrb[0].mxu0
    %v4153 = vadd.f32 %v4040, %v4152
    %v4154 = vpop.f32.mrb[0].mxu0
    %v4155 = vadd.f32 %v4042, %v4154
    %4156 = vmatprep.mubr.bf16.mxu0 %v2320
    %4157 = vmatmul.mubr.bf16.gmra.mrb[0].mxu0 %v2319
    %v4158 = vpop.f32.mrb[0].mxu0
    %v4159 = vadd.f32 %v4046, %v4158
    %v4160 = vpop.f32.mrb[0].mxu0
    %v4161 = vadd.f32 %v4048, %v4160
    %v4162 = vpop.f32.mrb[0].mxu0
    %v4163 = vadd.f32 %v4050, %v4162
    %v4164 = vpop.f32.mrb[0].mxu0
    %v4165 = vadd.f32 %v4052, %v4164
    %4166 = vmatprep.mubr.bf16.mxu0 %v2332
    %4167 = vmatmul.mubr.bf16.gmra.mrb[0].mxu0 %v2331
    %v4168 = vpop.f32.mrb[0].mxu0
    %v4169 = vadd.f32 %v4056, %v4168
    %v4170 = vpop.f32.mrb[0].mxu0
    %v4171 = vadd.f32 %v4058, %v4170
    %v4172 = vpop.f32.mrb[0].mxu0
    %v4173 = vadd.f32 %v4060, %v4172
    %v4174 = vpop.f32.mrb[0].mxu0
    %v4175 = vadd.f32 %v4062, %v4174
    %4176 = vmatprep.mubr.bf16.mxu0 %v2344
    %4177 = vmatmul.mubr.bf16.gmra.mrb[0].mxu0 %v2343
    %v4178 = vpop.f32.mrb[0].mxu0
    %v4179 = vadd.f32 %v4066, %v4178
    %v4180 = vpop.f32.mrb[0].mxu0
    %v4181 = vadd.f32 %v4068, %v4180
    %v4182 = vpop.f32.mrb[0].mxu0
    %v4183 = vadd.f32 %v4070, %v4182
    %v4184 = vpop.f32.mrb[0].mxu0
    %v4185 = vadd.f32 %v4072, %v4184
    %4186 = vdwg.mxu0
    %v4187 = vmax.f32 %v4109, 0.0
    %v4188 = vmax.f32 %v4111, 0.0
    %v4189 = vmax.f32 %v4113, 0.0
    %v4190 = vmax.f32 %v4115, 0.0
    %v4191 = vmax.f32 %v4119, 0.0
    %v4192 = vmax.f32 %v4121, 0.0
    %v4193 = vmax.f32 %v4123, 0.0
    %v4194 = vmax.f32 %v4125, 0.0
    %v4195 = vmax.f32 %v4129, 0.0
    %v4196 = vmax.f32 %v4131, 0.0
    %v4197 = vmax.f32 %v4133, 0.0
    %v4198 = vmax.f32 %v4135, 0.0
    %v4199 = vmax.f32 %v4139, 0.0
    %v4200 = vmax.f32 %v4141, 0.0
    %v4201 = vmax.f32 %v4143, 0.0
    %v4202 = vmax.f32 %v4145, 0.0
    %v4203 = vmax.f32 %v4149, 0.0
    %v4204 = vmax.f32 %v4151, 0.0
    %v4205 = vmax.f32 %v4153, 0.0
    %v4206 = vmax.f32 %v4155, 0.0
    %v4207 = vmax.f32 %v4159, 0.0
    %v4208 = vmax.f32 %v4161, 0.0
    %v4209 = vmax.f32 %v4163, 0.0
    %v4210 = vmax.f32 %v4165, 0.0
    %v4211 = vmax.f32 %v4169, 0.0
    %v4212 = vmax.f32 %v4171, 0.0
    %v4213 = vmax.f32 %v4173, 0.0
    %v4214 = vmax.f32 %v4175, 0.0
    %v4215 = vmax.f32 %v4179, 0.0
    %v4216 = vmax.f32 %v4181, 0.0
    %v4217 = vmax.f32 %v4183, 0.0
    %v4218 = vmax.f32 %v4185, 0.0
    %v4219 = vpack.c.bf16 %v4189, %v4187
    %v4220 = vpack.c.bf16 %v4190, %v4188
    %v4221 = vpack.c.bf16 %v4193, %v4191
    %v4222 = vpack.c.bf16 %v4194, %v4192
    %v4223 = vpack.c.bf16 %v4197, %v4195
    %v4224 = vpack.c.bf16 %v4198, %v4196
    %v4225 = vpack.c.bf16 %v4201, %v4199
    %v4226 = vpack.c.bf16 %v4202, %v4200
    %v4227 = vpack.c.bf16 %v4205, %v4203
    %v4228 = vpack.c.bf16 %v4206, %v4204
    %v4229 = vpack.c.bf16 %v4209, %v4207
    %v4230 = vpack.c.bf16 %v4210, %v4208
    %v4231 = vpack.c.bf16 %v4213, %v4211
    %v4232 = vpack.c.bf16 %v4214, %v4212
    %v4233 = vpack.c.bf16 %v4217, %v4215
    %v4234 = vpack.c.bf16 %v4218, %v4216
    %v4235 = vld [vmem:[%s5] sm:$0xf]
    %v4236 = vld [vmem:[%s5 + $0x4] sm:$0xf]
    %v4237 = vld [vmem:[%s5 + $0x8] sm:$0xf]
    %v4238 = vld [vmem:[%s5 + $0xc] sm:$0xf]
    %v4239 = vld [vmem:[%s5 + $0x10] sm:$0xf]
    %v4240 = vld [vmem:[%s5 + $0x14] sm:$0xf]
    %v4241 = vld [vmem:[%s5 + $0x18] sm:$0xf]
    %v4242 = vld [vmem:[%s5 + $0x1c] sm:$0xf]
    %v4243 = vld [vmem:[%s5 + $0x20] sm:$0xf]
    %v4244 = vld [vmem:[%s5 + $0x24] sm:$0xf]
    %v4245 = vld [vmem:[%s5 + $0x28] sm:$0xf]
    %v4246 = vld [vmem:[%s5 + $0x2c] sm:$0xf]
    %v4247 = vld [vmem:[%s5 + $0x30] sm:$0xf]
    %v4248 = vld [vmem:[%s5 + $0x34] sm:$0xf]
    %v4249 = vld [vmem:[%s5 + $0x38] sm:$0xf]
    %v4250 = vld [vmem:[%s5 + $0x3c] sm:$0xf]
    %v4251 = vld [vmem:[%s5 + $0x40] sm:$0xf]
    %v4252 = vld [vmem:[%s5 + $0x44] sm:$0xf]
    %v4253 = vld [vmem:[%s5 + $0x48] sm:$0xf]
    %v4254 = vld [vmem:[%s5 + $0x4c] sm:$0xf]
    %v4255 = vld [vmem:[%s5 + $0x50] sm:$0xf]
    %v4256 = vld [vmem:[%s5 + $0x54] sm:$0xf]
    %v4257 = vld [vmem:[%s5 + $0x58] sm:$0xf]
    %v4258 = vld [vmem:[%s5 + $0x5c] sm:$0xf]
    %v4259 = vld [vmem:[%s5 + $0x60] sm:$0xf]
    %v4260 = vld [vmem:[%s5 + $0x64] sm:$0xf]
    %v4261 = vld [vmem:[%s5 + $0x68] sm:$0xf]
    %v4262 = vld [vmem:[%s5 + $0x6c] sm:$0xf]
    %v4263 = vld [vmem:[%s5 + $0x70] sm:$0xf]
    %v4264 = vld [vmem:[%s5 + $0x74] sm:$0xf]
    %v4265 = vld [vmem:[%s5 + $0x78] sm:$0xf]
    %v4266 = vld [vmem:[%s5 + $0x7c] sm:$0xf]
    %v4267 = vld [vmem:[%s6] sm:$0x1]
    %v4269 = vlaneseq
    %v4270 = vshrl.u32 %v4269, 7
    %v4271 = vsub.s32 0, %v4270
    %v4272 = vrot.slane %v4267, %v4271
    %v4306 = vunpack.c.l.b16 %v4235
    %v4307 = vunpack.c.l.b16 %v4236
    %v4308 = vunpack.c.l.b16 %v4237
    %v4309 = vunpack.c.l.b16 %v4238
    %v4310 = vunpack.c.l.b16 %v4239
    %v4311 = vunpack.c.l.b16 %v4240
    %v4312 = vunpack.c.l.b16 %v4241
    %v4313 = vunpack.c.l.b16 %v4242
    %v4314 = vunpack.c.l.b16 %v4243
    %v4315 = vunpack.c.l.b16 %v4244
    %v4316 = vunpack.c.l.b16 %v4245
    %v4317 = vunpack.c.l.b16 %v4246
    %v4318 = vunpack.c.l.b16 %v4247
    %v4319 = vunpack.c.l.b16 %v4248
    %v4320 = vunpack.c.l.b16 %v4249
    %v4321 = vunpack.c.l.b16 %v4250
    %v4322 = vunpack.c.l.b16 %v4251
    %v4323 = vunpack.c.l.b16 %v4252
    %v4324 = vunpack.c.l.b16 %v4253
    %v4325 = vunpack.c.l.b16 %v4254
    %v4326 = vunpack.c.l.b16 %v4255
    %v4327 = vunpack.c.l.b16 %v4256
    %v4328 = vunpack.c.l.b16 %v4257
    %v4329 = vunpack.c.l.b16 %v4258
    %v4330 = vunpack.c.l.b16 %v4259
    %v4331 = vunpack.c.l.b16 %v4260
    %v4332 = vunpack.c.l.b16 %v4261
    %v4333 = vunpack.c.l.b16 %v4262
    %v4334 = vunpack.c.l.b16 %v4263
    %v4335 = vunpack.c.l.b16 %v4264
    %v4336 = vunpack.c.l.b16 %v4265
    %v4337 = vunpack.c.l.b16 %v4266
    %v4338 = vpack.c.b16 %v4307, %v4306
    %v4339 = vpack.c.b16 %v4309, %v4308
    %v4340 = vpack.c.b16 %v4311, %v4310
    %v4341 = vpack.c.b16 %v4313, %v4312
    %v4342 = vpack.c.b16 %v4315, %v4314
    %v4343 = vpack.c.b16 %v4317, %v4316
    %v4344 = vpack.c.b16 %v4319, %v4318
    %v4345 = vpack.c.b16 %v4321, %v4320
    %v4346 = vpack.c.b16 %v4323, %v4322
    %v4347 = vpack.c.b16 %v4325, %v4324
    %v4348 = vpack.c.b16 %v4327, %v4326
    %v4349 = vpack.c.b16 %v4329, %v4328
    %v4350 = vpack.c.b16 %v4331, %v4330
    %v4351 = vpack.c.b16 %v4333, %v4332
    %v4352 = vpack.c.b16 %v4335, %v4334
    %v4353 = vpack.c.b16 %v4337, %v4336
    %4370 = vmatprep.subr.bf16.mxu0 0
    %4371 = vmatpush1.bf16.msra.mxu0 %v4338
    %4372 = vmatprep.subr.bf16.mxu0 0
    %4373 = vmatpush1.bf16.msra.mxu0 %v4339
    %4374 = vmatprep.subr.bf16.mxu0 0
    %4375 = vmatpush1.bf16.msra.mxu0 %v4340
    %4376 = vmatprep.subr.bf16.mxu0 0
    %4377 = vmatpush1.bf16.msra.mxu0 %v4341
    %4378 = vmatprep.subr.bf16.mxu0 0
    %4379 = vmatpush1.bf16.msra.mxu0 %v4342
    %4380 = vmatprep.subr.bf16.mxu0 0
    %4381 = vmatpush1.bf16.msra.mxu0 %v4343
    %4382 = vmatprep.subr.bf16.mxu0 0
    %4383 = vmatpush1.bf16.msra.mxu0 %v4344
    %4384 = vmatprep.subr.bf16.mxu0 0
    %4385 = vmatpush1.bf16.msra.mxu0 %v4345
    %4386 = vmatprep.subr.bf16.mxu0 0
    %4387 = vmatpush1.bf16.msra.mxu0 %v4346
    %4388 = vmatprep.subr.bf16.mxu0 0
    %4389 = vmatpush1.bf16.msra.mxu0 %v4347
    %4390 = vmatprep.subr.bf16.mxu0 0
    %4391 = vmatpush1.bf16.msra.mxu0 %v4348
    %4392 = vmatprep.subr.bf16.mxu0 0
    %4393 = vmatpush1.bf16.msra.mxu0 %v4349
    %4394 = vmatprep.subr.bf16.mxu0 0
    %4395 = vmatpush1.bf16.msra.mxu0 %v4350
    %4396 = vmatprep.subr.bf16.mxu0 0
    %4397 = vmatpush1.bf16.msra.mxu0 %v4351
    %4398 = vmatprep.subr.bf16.mxu0 0
    %4399 = vmatpush1.bf16.msra.mxu0 %v4352
    %4400 = vmatprep.subr.bf16.mxu0 0
    %4401 = vmatpush1.bf16.msra.mxu0 %v4353
    %4402 = vmatprep.mubr.bf16.mxu0 %v4220
    %4403 = vmatmul.mubr.bf16.gmra.mrb[0].mxu0 %v4219
    %v4404 = vpop.f32.mrb[0].mxu0
    %v4405 = vadd.f32 %v4272, %v4404
    %v4406 = vpop.f32.mrb[0].mxu0
    %v4407 = vpop.f32.mrb[0].mxu0
    %v4408 = vadd.f32 %v4272, %v4407
    %v4409 = vpop.f32.mrb[0].mxu0
    %4410 = vmatprep.mubr.bf16.mxu0 %v4222
    %4411 = vmatmul.mubr.bf16.gmra.mrb[0].mxu0 %v4221
    %v4412 = vpop.f32.mrb[0].mxu0
    %v4413 = vadd.f32 %v4272, %v4412
    %v4414 = vpop.f32.mrb[0].mxu0
    %v4415 = vpop.f32.mrb[0].mxu0
    %v4416 = vadd.f32 %v4272, %v4415
    %v4417 = vpop.f32.mrb[0].mxu0
    %4418 = vmatprep.mubr.bf16.mxu0 %v4224
    %4419 = vmatmul.mubr.bf16.gmra.mrb[0].mxu0 %v4223
    %v4420 = vpop.f32.mrb[0].mxu0
    %v4421 = vadd.f32 %v4272, %v4420
    %v4422 = vpop.f32.mrb[0].mxu0
    %v4423 = vpop.f32.mrb[0].mxu0
    %v4424 = vadd.f32 %v4272, %v4423
    %v4425 = vpop.f32.mrb[0].mxu0
    %4426 = vmatprep.mubr.bf16.mxu0 %v4226
    %4427 = vmatmul.mubr.bf16.gmra.mrb[0].mxu0 %v4225
    %v4428 = vpop.f32.mrb[0].mxu0
    %v4429 = vadd.f32 %v4272, %v4428
    %v4430 = vpop.f32.mrb[0].mxu0
    %v4431 = vpop.f32.mrb[0].mxu0
    %v4432 = vadd.f32 %v4272, %v4431
    %v4433 = vpop.f32.mrb[0].mxu0
    %4434 = vmatprep.mubr.bf16.mxu0 %v4228
    %4435 = vmatmul.mubr.bf16.gmra.mrb[0].mxu0 %v4227
    %v4436 = vpop.f32.mrb[0].mxu0
    %v4437 = vadd.f32 %v4272, %v4436
    %v4438 = vpop.f32.mrb[0].mxu0
    %v4439 = vpop.f32.mrb[0].mxu0
    %v4440 = vadd.f32 %v4272, %v4439
    %v4441 = vpop.f32.mrb[0].mxu0
    %4442 = vmatprep.mubr.bf16.mxu0 %v4230
    %4443 = vmatmul.mubr.bf16.gmra.mrb[0].mxu0 %v4229
    %v4444 = vpop.f32.mrb[0].mxu0
    %v4445 = vadd.f32 %v4272, %v4444
    %v4446 = vpop.f32.mrb[0].mxu0
    %v4447 = vpop.f32.mrb[0].mxu0
    %v4448 = vadd.f32 %v4272, %v4447
    %v4449 = vpop.f32.mrb[0].mxu0
    %4450 = vmatprep.mubr.bf16.mxu0 %v4232
    %4451 = vmatmul.mubr.bf16.gmra.mrb[0].mxu0 %v4231
    %v4452 = vpop.f32.mrb[0].mxu0
    %v4453 = vadd.f32 %v4272, %v4452
    %v4454 = vpop.f32.mrb[0].mxu0
    %v4455 = vpop.f32.mrb[0].mxu0
    %v4456 = vadd.f32 %v4272, %v4455
    %v4457 = vpop.f32.mrb[0].mxu0
    %4458 = vmatprep.mubr.bf16.mxu0 %v4234
    %4459 = vmatmul.mubr.bf16.gmra.mrb[0].mxu0 %v4233
    %v4460 = vpop.f32.mrb[0].mxu0
    %v4461 = vadd.f32 %v4272, %v4460
    %v4462 = vpop.f32.mrb[0].mxu0
    %v4463 = vpop.f32.mrb[0].mxu0
    %v4464 = vadd.f32 %v4272, %v4463
    %v4465 = vpop.f32.mrb[0].mxu0
    %4466 = vdwg.mxu0
    %v4467 = vmax.f32 %v4405, 0.0
    %v4468 = vmax.f32 %v4408, 0.0
    %v4469 = vmax.f32 %v4413, 0.0
    %v4470 = vmax.f32 %v4416, 0.0
    %v4471 = vmax.f32 %v4421, 0.0
    %v4472 = vmax.f32 %v4424, 0.0
    %v4473 = vmax.f32 %v4429, 0.0
    %v4474 = vmax.f32 %v4432, 0.0
    %v4475 = vmax.f32 %v4437, 0.0
    %v4476 = vmax.f32 %v4440, 0.0
    %v4477 = vmax.f32 %v4445, 0.0
    %v4478 = vmax.f32 %v4448, 0.0
    %v4479 = vmax.f32 %v4453, 0.0
    %v4480 = vmax.f32 %v4456, 0.0
    %v4481 = vmax.f32 %v4461, 0.0
    %v4482 = vmax.f32 %v4464, 0.0
    %v4483 = vpack.c.bf16 %v4468, %v4467
    %v4484 = vpack.c.bf16 %v4470, %v4469
    %v4485 = vpack.c.bf16 %v4472, %v4471
    %v4486 = vpack.c.bf16 %v4474, %v4473
    %v4487 = vpack.c.bf16 %v4476, %v4475
    %v4488 = vpack.c.bf16 %v4478, %v4477
    %v4489 = vpack.c.bf16 %v4480, %v4479
    %v4490 = vpack.c.bf16 %v4482, %v4481
    %v4491 = vld [vmem:[%s7] sm:$0xf]
    %v4492 = vld [vmem:[%s7 + $0x4] sm:$0xf]
    %v4493 = vld [vmem:[%s7 + $0x8] sm:$0xf]
    %v4494 = vld [vmem:[%s7 + $0xc] sm:$0xf]
    %v4495 = vld [vmem:[%s7 + $0x10] sm:$0xf]
    %v4496 = vld [vmem:[%s7 + $0x14] sm:$0xf]
    %v4497 = vld [vmem:[%s7 + $0x18] sm:$0xf]
    %v4498 = vld [vmem:[%s7 + $0x1c] sm:$0xf]
    %v4499 = vld [vmem:[%s7 + $0x20] sm:$0xf]
    %v4500 = vld [vmem:[%s7 + $0x24] sm:$0xf]
    %v4501 = vld [vmem:[%s7 + $0x28] sm:$0xf]
    %v4502 = vld [vmem:[%s7 + $0x2c] sm:$0xf]
    %v4503 = vld [vmem:[%s7 + $0x30] sm:$0xf]
    %v4504 = vld [vmem:[%s7 + $0x34] sm:$0xf]
    %v4505 = vld [vmem:[%s7 + $0x38] sm:$0xf]
    %v4506 = vld [vmem:[%s7 + $0x3c] sm:$0xf]
    %v4507 = vld [vmem:[%s8] sm:$0x1]
    %v4509 = vlaneseq
    %v4510 = vshrl.u32 %v4509, 7
    %v4511 = vsub.s32 0, %v4510
    %v4512 = vrot.slane %v4507, %v4511
    %v4530 = vunpack.c.l.b16 %v4491
    %v4531 = vunpack.c.l.b16 %v4492
    %v4532 = vunpack.c.l.b16 %v4493
    %v4533 = vunpack.c.l.b16 %v4494
    %v4534 = vunpack.c.l.b16 %v4495
    %v4535 = vunpack.c.l.b16 %v4496
    %v4536 = vunpack.c.l.b16 %v4497
    %v4537 = vunpack.c.l.b16 %v4498
    %v4538 = vunpack.c.l.b16 %v4499
    %v4539 = vunpack.c.l.b16 %v4500
    %v4540 = vunpack.c.l.b16 %v4501
    %v4541 = vunpack.c.l.b16 %v4502
    %v4542 = vunpack.c.l.b16 %v4503
    %v4543 = vunpack.c.l.b16 %v4504
    %v4544 = vunpack.c.l.b16 %v4505
    %v4545 = vunpack.c.l.b16 %v4506
    %v4546 = vpack.c.b16 %v4531, %v4530
    %v4547 = vpack.c.b16 %v4533, %v4532
    %v4548 = vpack.c.b16 %v4535, %v4534
    %v4549 = vpack.c.b16 %v4537, %v4536
    %v4550 = vpack.c.b16 %v4539, %v4538
    %v4551 = vpack.c.b16 %v4541, %v4540
    %v4552 = vpack.c.b16 %v4543, %v4542
    %v4553 = vpack.c.b16 %v4545, %v4544
    %4562 = vmatprep.subr.bf16.mxu0 0
    %4563 = vmatpush1.bf16.msra.mxu0 %v4546
    %4564 = vmatprep.subr.bf16.mxu0 0
    %4565 = vmatpush1.bf16.msra.mxu0 %v4547
    %4566 = vmatprep.subr.bf16.mxu0 0
    %4567 = vmatpush1.bf16.msra.mxu0 %v4548
    %4568 = vmatprep.subr.bf16.mxu0 0
    %4569 = vmatpush1.bf16.msra.mxu0 %v4549
    %4570 = vmatprep.subr.bf16.mxu0 0
    %4571 = vmatpush1.bf16.msra.mxu0 %v4550
    %4572 = vmatprep.subr.bf16.mxu0 0
    %4573 = vmatpush1.bf16.msra.mxu0 %v4551
    %4574 = vmatprep.subr.bf16.mxu0 0
    %4575 = vmatpush1.bf16.msra.mxu0 %v4552
    %4576 = vmatprep.subr.bf16.mxu0 0
    %4577 = vmatpush1.bf16.msra.mxu0 %v4553
    %4578 = vmatprep.subr.bf16.mxu0 0
    %4579 = vmatpush1.bf16.msra.mxu0 0
    %4580 = vmatprep.subr.bf16.mxu0 0
    %4581 = vmatpush1.bf16.msra.mxu0 0
    %4582 = vmatprep.subr.bf16.mxu0 0
    %4583 = vmatpush1.bf16.msra.mxu0 0
    %4584 = vmatprep.subr.bf16.mxu0 0
    %4585 = vmatpush1.bf16.msra.mxu0 0
    %4586 = vmatprep.subr.bf16.mxu0 0
    %4587 = vmatpush1.bf16.msra.mxu0 0
    %4588 = vmatprep.subr.bf16.mxu0 0
    %4589 = vmatpush1.bf16.msra.mxu0 0
    %4590 = vmatprep.subr.bf16.mxu0 0
    %4591 = vmatpush1.bf16.msra.mxu0 0
    %4592 = vmatprep.subr.bf16.mxu0 0
    %4593 = vmatpush1.bf16.msra.mxu0 0
    %4594 = vmatprep.mubr.bf16.mxu0 0
    %4595 = vmatmul.mubr.bf16.gmra.mrb[0].mxu0 %v4483
    %v4596 = vpop.f32.mrb[0].mxu0
    %v4597 = vadd.f32 %v4512, %v4596
    %v4598 = vpop.f32.mrb[0].mxu0
    %v4599 = vpop.f32.mrb[0].mxu0
    %v4600 = vadd.f32 %v4512, %v4599
    %v4601 = vpop.f32.mrb[0].mxu0
    %4602 = vmatprep.mubr.bf16.mxu0 0
    %4603 = vmatmul.mubr.bf16.gmra.mrb[0].mxu0 %v4484
    %v4604 = vpop.f32.mrb[0].mxu0
    %v4605 = vadd.f32 %v4512, %v4604
    %v4606 = vpop.f32.mrb[0].mxu0
    %v4607 = vpop.f32.mrb[0].mxu0
    %v4608 = vadd.f32 %v4512, %v4607
    %v4609 = vpop.f32.mrb[0].mxu0
    %4610 = vmatprep.mubr.bf16.mxu0 0
    %4611 = vmatmul.mubr.bf16.gmra.mrb[0].mxu0 %v4485
    %v4612 = vpop.f32.mrb[0].mxu0
    %v4613 = vadd.f32 %v4512, %v4612
    %v4614 = vpop.f32.mrb[0].mxu0
    %v4615 = vpop.f32.mrb[0].mxu0
    %v4616 = vadd.f32 %v4512, %v4615
    %v4617 = vpop.f32.mrb[0].mxu0
    %4618 = vmatprep.mubr.bf16.mxu0 0
    %4619 = vmatmul.mubr.bf16.gmra.mrb[0].mxu0 %v4486
    %v4620 = vpop.f32.mrb[0].mxu0
    %v4621 = vadd.f32 %v4512, %v4620
    %v4622 = vpop.f32.mrb[0].mxu0
    %v4623 = vpop.f32.mrb[0].mxu0
    %v4624 = vadd.f32 %v4512, %v4623
    %v4625 = vpop.f32.mrb[0].mxu0
    %4626 = vmatprep.mubr.bf16.mxu0 0
    %4627 = vmatmul.mubr.bf16.gmra.mrb[0].mxu0 %v4487
    %v4628 = vpop.f32.mrb[0].mxu0
    %v4629 = vadd.f32 %v4512, %v4628
    %v4630 = vpop.f32.mrb[0].mxu0
    %v4631 = vpop.f32.mrb[0].mxu0
    %v4632 = vadd.f32 %v4512, %v4631
    %v4633 = vpop.f32.mrb[0].mxu0
    %4634 = vmatprep.mubr.bf16.mxu0 0
    %4635 = vmatmul.mubr.bf16.gmra.mrb[0].mxu0 %v4488
    %v4636 = vpop.f32.mrb[0].mxu0
    %v4637 = vadd.f32 %v4512, %v4636
    %v4638 = vpop.f32.mrb[0].mxu0
    %v4639 = vpop.f32.mrb[0].mxu0
    %v4640 = vadd.f32 %v4512, %v4639
    %v4641 = vpop.f32.mrb[0].mxu0
    %4642 = vmatprep.mubr.bf16.mxu0 0
    %4643 = vmatmul.mubr.bf16.gmra.mrb[0].mxu0 %v4489
    %v4644 = vpop.f32.mrb[0].mxu0
    %v4645 = vadd.f32 %v4512, %v4644
    %v4646 = vpop.f32.mrb[0].mxu0
    %v4647 = vpop.f32.mrb[0].mxu0
    %v4648 = vadd.f32 %v4512, %v4647
    %v4649 = vpop.f32.mrb[0].mxu0
    %4650 = vmatprep.mubr.bf16.mxu0 0
    %4651 = vmatmul.mubr.bf16.gmra.mrb[0].mxu0 %v4490
    %v4652 = vpop.f32.mrb[0].mxu0
    %v4653 = vadd.f32 %v4512, %v4652
    %v4654 = vpop.f32.mrb[0].mxu0
    %v4655 = vpop.f32.mrb[0].mxu0
    %v4656 = vadd.f32 %v4512, %v4655
    %v4657 = vpop.f32.mrb[0].mxu0
    %4658 = vdwg.mxu0
    %v4659 = vmax.f32 %v4597, 0.0
    %v4660 = vmax.f32 %v4600, 0.0
    %v4661 = vmax.f32 %v4605, 0.0
    %v4662 = vmax.f32 %v4608, 0.0
    %v4663 = vmax.f32 %v4613, 0.0
    %v4664 = vmax.f32 %v4616, 0.0
    %v4665 = vmax.f32 %v4621, 0.0
    %v4666 = vmax.f32 %v4624, 0.0
    %v4667 = vmax.f32 %v4629, 0.0
    %v4668 = vmax.f32 %v4632, 0.0
    %v4669 = vmax.f32 %v4637, 0.0
    %v4670 = vmax.f32 %v4640, 0.0
    %v4671 = vmax.f32 %v4645, 0.0
    %v4672 = vmax.f32 %v4648, 0.0
    %v4673 = vmax.f32 %v4653, 0.0
    %v4674 = vmax.f32 %v4656, 0.0
    %v4675 = vpack.c.bf16 %v4660, %v4659
    %v4676 = vpack.c.bf16 %v4662, %v4661
    %v4677 = vpack.c.bf16 %v4664, %v4663
    %v4678 = vpack.c.bf16 %v4666, %v4665
    %v4679 = vpack.c.bf16 %v4668, %v4667
    %v4680 = vpack.c.bf16 %v4670, %v4669
    %v4681 = vpack.c.bf16 %v4672, %v4671
    %v4682 = vpack.c.bf16 %v4674, %v4673
    %v4683 = vld [vmem:[%s9] sm:$0xf]
    %v4684 = vld [vmem:[%s9 + $0x4] sm:$0xf]
    %v4685 = vld [vmem:[%s9 + $0x8] sm:$0xf]
    %v4686 = vld [vmem:[%s9 + $0xc] sm:$0xf]
    %v4687 = vld [vmem:[%s9 + $0x10] sm:$0xf]
    %v4688 = vld [vmem:[%s9 + $0x14] sm:$0xf]
    %v4689 = vld [vmem:[%s9 + $0x18] sm:$0xf]
    %v4690 = vld [vmem:[%s9 + $0x1c] sm:$0xf]
    %v4691 = vld [vmem:[%s9 + $0x20] sm:$0xf]
    %v4692 = vld [vmem:[%s9 + $0x24] sm:$0xf]
    %v4693 = vld [vmem:[%s9 + $0x28] sm:$0xf]
    %v4694 = vld [vmem:[%s9 + $0x2c] sm:$0xf]
    %v4695 = vld [vmem:[%s9 + $0x30] sm:$0xf]
    %v4696 = vld [vmem:[%s9 + $0x34] sm:$0xf]
    %v4697 = vld [vmem:[%s9 + $0x38] sm:$0xf]
    %v4698 = vld [vmem:[%s9 + $0x3c] sm:$0xf]
    %v4699 = vld [vmem:[%s10] sm:$0x1]
    %v4701 = vlaneseq
    %v4702 = vshrl.u32 %v4701, 7
    %v4703 = vsub.s32 0, %v4702
    %v4704 = vrot.slane %v4699, %v4703
    %v4722 = vunpack.c.l.b16 %v4683
    %v4723 = vunpack.c.l.b16 %v4684
    %v4724 = vunpack.c.l.b16 %v4685
    %v4725 = vunpack.c.l.b16 %v4686
    %v4726 = vunpack.c.l.b16 %v4687
    %v4727 = vunpack.c.l.b16 %v4688
    %v4728 = vunpack.c.l.b16 %v4689
    %v4729 = vunpack.c.l.b16 %v4690
    %v4730 = vunpack.c.l.b16 %v4691
    %v4731 = vunpack.c.l.b16 %v4692
    %v4732 = vunpack.c.l.b16 %v4693
    %v4733 = vunpack.c.l.b16 %v4694
    %v4734 = vunpack.c.l.b16 %v4695
    %v4735 = vunpack.c.l.b16 %v4696
    %v4736 = vunpack.c.l.b16 %v4697
    %v4737 = vunpack.c.l.b16 %v4698
    %v4738 = vpack.c.b16 %v4723, %v4722
    %v4739 = vpack.c.b16 %v4725, %v4724
    %v4740 = vpack.c.b16 %v4727, %v4726
    %v4741 = vpack.c.b16 %v4729, %v4728
    %v4742 = vpack.c.b16 %v4731, %v4730
    %v4743 = vpack.c.b16 %v4733, %v4732
    %v4744 = vpack.c.b16 %v4735, %v4734
    %v4745 = vpack.c.b16 %v4737, %v4736
    %4754 = vmatprep.subr.bf16.mxu0 0
    %4755 = vmatpush1.bf16.msra.mxu0 %v4738
    %4756 = vmatprep.subr.bf16.mxu0 0
    %4757 = vmatpush1.bf16.msra.mxu0 %v4739
    %4758 = vmatprep.subr.bf16.mxu0 0
    %4759 = vmatpush1.bf16.msra.mxu0 %v4740
    %4760 = vmatprep.subr.bf16.mxu0 0
    %4761 = vmatpush1.bf16.msra.mxu0 %v4741
    %4762 = vmatprep.subr.bf16.mxu0 0
    %4763 = vmatpush1.bf16.msra.mxu0 %v4742
    %4764 = vmatprep.subr.bf16.mxu0 0
    %4765 = vmatpush1.bf16.msra.mxu0 %v4743
    %4766 = vmatprep.subr.bf16.mxu0 0
    %4767 = vmatpush1.bf16.msra.mxu0 %v4744
    %4768 = vmatprep.subr.bf16.mxu0 0
    %4769 = vmatpush1.bf16.msra.mxu0 %v4745
    %4770 = vmatprep.subr.bf16.mxu0 0
    %4771 = vmatpush1.bf16.msra.mxu0 0
    %4772 = vmatprep.subr.bf16.mxu0 0
    %4773 = vmatpush1.bf16.msra.mxu0 0
    %4774 = vmatprep.subr.bf16.mxu0 0
    %4775 = vmatpush1.bf16.msra.mxu0 0
    %4776 = vmatprep.subr.bf16.mxu0 0
    %4777 = vmatpush1.bf16.msra.mxu0 0
    %4778 = vmatprep.subr.bf16.mxu0 0
    %4779 = vmatpush1.bf16.msra.mxu0 0
    %4780 = vmatprep.subr.bf16.mxu0 0
    %4781 = vmatpush1.bf16.msra.mxu0 0
    %4782 = vmatprep.subr.bf16.mxu0 0
    %4783 = vmatpush1.bf16.msra.mxu0 0
    %4784 = vmatprep.subr.bf16.mxu0 0
    %4785 = vmatpush1.bf16.msra.mxu0 0
    %4786 = vmatprep.mubr.bf16.mxu0 0
    %4787 = vmatmul.mubr.bf16.gmra.mrb[0].mxu0 %v4675
    %v4788 = vpop.f32.mrb[0].mxu0
    %v4789 = vadd.f32 %v4704, %v4788
    %v4790 = vpop.f32.mrb[0].mxu0
    %v4791 = vpop.f32.mrb[0].mxu0
    %v4792 = vadd.f32 %v4704, %v4791
    %v4793 = vpop.f32.mrb[0].mxu0
    %4794 = vmatprep.mubr.bf16.mxu0 0
    %4795 = vmatmul.mubr.bf16.gmra.mrb[0].mxu0 %v4676
    %v4796 = vpop.f32.mrb[0].mxu0
    %v4797 = vadd.f32 %v4704, %v4796
    %v4798 = vpop.f32.mrb[0].mxu0
    %v4799 = vpop.f32.mrb[0].mxu0
    %v4800 = vadd.f32 %v4704, %v4799
    %v4801 = vpop.f32.mrb[0].mxu0
    %4802 = vmatprep.mubr.bf16.mxu0 0
    %4803 = vmatmul.mubr.bf16.gmra.mrb[0].mxu0 %v4677
    %v4804 = vpop.f32.mrb[0].mxu0
    %v4805 = vadd.f32 %v4704, %v4804
    %v4806 = vpop.f32.mrb[0].mxu0
    %v4807 = vpop.f32.mrb[0].mxu0
    %v4808 = vadd.f32 %v4704, %v4807
    %v4809 = vpop.f32.mrb[0].mxu0
    %4810 = vmatprep.mubr.bf16.mxu0 0
    %4811 = vmatmul.mubr.bf16.gmra.mrb[0].mxu0 %v4678
    %v4812 = vpop.f32.mrb[0].mxu0
    %v4813 = vadd.f32 %v4704, %v4812
    %v4814 = vpop.f32.mrb[0].mxu0
    %v4815 = vpop.f32.mrb[0].mxu0
    %v4816 = vadd.f32 %v4704, %v4815
    %v4817 = vpop.f32.mrb[0].mxu0
    %4818 = vmatprep.mubr.bf16.mxu0 0
    %4819 = vmatmul.mubr.bf16.gmra.mrb[0].mxu0 %v4679
    %v4820 = vpop.f32.mrb[0].mxu0
    %v4821 = vadd.f32 %v4704, %v4820
    %v4822 = vpop.f32.mrb[0].mxu0
    %v4823 = vpop.f32.mrb[0].mxu0
    %v4824 = vadd.f32 %v4704, %v4823
    %v4825 = vpop.f32.mrb[0].mxu0
    %4826 = vmatprep.mubr.bf16.mxu0 0
    %4827 = vmatmul.mubr.bf16.gmra.mrb[0].mxu0 %v4680
    %v4828 = vpop.f32.mrb[0].mxu0
    %v4829 = vadd.f32 %v4704, %v4828
    %v4830 = vpop.f32.mrb[0].mxu0
    %v4831 = vpop.f32.mrb[0].mxu0
    %v4832 = vadd.f32 %v4704, %v4831
    %v4833 = vpop.f32.mrb[0].mxu0
    %4834 = vmatprep.mubr.bf16.mxu0 0
    %4835 = vmatmul.mubr.bf16.gmra.mrb[0].mxu0 %v4681
    %v4836 = vpop.f32.mrb[0].mxu0
    %v4837 = vadd.f32 %v4704, %v4836
    %v4838 = vpop.f32.mrb[0].mxu0
    %v4839 = vpop.f32.mrb[0].mxu0
    %v4840 = vadd.f32 %v4704, %v4839
    %v4841 = vpop.f32.mrb[0].mxu0
    %4842 = vmatprep.mubr.bf16.mxu0 0
    %4843 = vmatmul.mubr.bf16.gmra.mrb[0].mxu0 %v4682
    %v4844 = vpop.f32.mrb[0].mxu0
    %v4845 = vadd.f32 %v4704, %v4844
    %v4846 = vpop.f32.mrb[0].mxu0
    %v4847 = vpop.f32.mrb[0].mxu0
    %v4848 = vadd.f32 %v4704, %v4847
    %v4849 = vpop.f32.mrb[0].mxu0
    %4850 = vdwg.mxu0
    %4851 = vst [vmem:[%s11] sm:$0xff] %v4789
    %4852 = vst [vmem:[%s11 + $0x8] sm:$0xff] %v4792
    %4853 = vst [vmem:[%s11 + $0x10] sm:$0xff] %v4797
    %4854 = vst [vmem:[%s11 + $0x18] sm:$0xff] %v4800
    %4855 = vst [vmem:[%s11 + $0x20] sm:$0xff] %v4805
    %4856 = vst [vmem:[%s11 + $0x28] sm:$0xff] %v4808
    %4857 = vst [vmem:[%s11 + $0x30] sm:$0xff] %v4813
    %4858 = vst [vmem:[%s11 + $0x38] sm:$0xff] %v4816
    %4859 = vst [vmem:[%s11 + $0x40] sm:$0xff] %v4821
    %4860 = vst [vmem:[%s11 + $0x48] sm:$0xff] %v4824
    %4861 = vst [vmem:[%s11 + $0x50] sm:$0xff] %v4829
    %4862 = vst [vmem:[%s11 + $0x58] sm:$0xff] %v4832
    %4863 = vst [vmem:[%s11 + $0x60] sm:$0xff] %v4837
    %4864 = vst [vmem:[%s11 + $0x68] sm:$0xff] %v4840
    %4865 = vst [vmem:[%s11 + $0x70] sm:$0xff] %v4845
    %4866 = vst [vmem:[%s11 + $0x78] sm:$0xff] %v4848
    // Predicated region
    $region54: #{_run.1} parent=1 // pred_check
      _
    $region55: #{_run.1} parent=1 // pred_check_branch
      %4868 = sbr.rel (0) target = $region57
    $region56: #{_run.1} parent=1 // pred_region
      _
    $region57: #{_run.1} parent=1 // pred_fallthru
      _
    // Predicated region
    $region58: #{_run.1} parent=1 // pred_check
      _
    $region59: #{_run.1} parent=1 // pred_check_branch
      %4870 = sbr.rel (0) target = $region61
    $region60: #{_run.1} parent=1 // pred_region
      _
    $region61: #{_run.1} parent=1 // pred_fallthru
      _
    %4871 = vsyncpa [#allocation3], 1
    %4872 = vsyncpa [#allocation5], 1

</llo_original>
